<compile_context>
chip_gen: v7x
topology: tpu7x:2x2x1
jax: 0.10.0
libtpu: 0.0.40
codegen_flags: <defaults>
</compile_context>

<pallas_src>
import functools

import jax
import jax.numpy as jnp
from jax.experimental import pallas as pl
from jax.experimental.pallas import tpu as pltpu


# ----------------------------------------------------------------------------
# Pallas kernels
# ----------------------------------------------------------------------------
def _mm_bias_act_kernel(x_ref, w_ref, b_ref, a_ref, o_ref, *, use_prelu, out_scale):
    """One M-tile of: out = PReLU?(x @ w + b) * out_scale (bf16 MXU, f32 acc)."""
    acc = jnp.dot(x_ref[...], w_ref[...], preferred_element_type=jnp.float32)
    acc = acc + b_ref[...]
    if use_prelu:
        acc = jnp.where(acc >= 0.0, acc, a_ref[...] * acc)   # per-column slope
    if out_scale != 1.0:
        acc = acc * out_scale
    o_ref[...] = acc.astype(o_ref.dtype)


def matmul_bias(x, w, b, alpha, *, use_prelu=True, out_scale=1.0, tm=512):
    """Pallas matmul with bias + optional per-column PReLU, tiled over rows."""
    M, K = x.shape
    Kw, N = w.shape
    assert K == Kw
    tm = max(16, (min(tm, M) // 16) * 16)       # sublane-friendly M tile
    n_m = -(-M // tm)
    Mp = n_m * tm
    if Mp != M:                                 # pad ragged M instead of tm = M
        x = jnp.pad(x, ((0, Mp - M), (0, 0)))
    alpha_row = (jnp.broadcast_to(jnp.asarray(alpha, jnp.float32).reshape(-1), (N,))
                 .reshape(1, N))
    kernel = functools.partial(_mm_bias_act_kernel,
                               use_prelu=use_prelu, out_scale=out_scale)
    out = pl.pallas_call(
        kernel,
        out_shape=jax.ShapeDtypeStruct((Mp, N), jnp.float32),
        grid=(n_m,),
        in_specs=[
            pl.BlockSpec((tm, K), lambda i: (i, 0)),
            pl.BlockSpec((K, N), lambda i: (0, 0)),
            pl.BlockSpec((1, N), lambda i: (0, 0)),
            pl.BlockSpec((1, N), lambda i: (0, 0)),
        ],
        out_specs=pl.BlockSpec((tm, N), lambda i: (i, 0)),
        compiler_params=pltpu.CompilerParams(
            dimension_semantics=("parallel",),
            vmem_limit_bytes=64 * 1024 * 1024),
    )(x.astype(jnp.bfloat16), w.astype(jnp.bfloat16),
      b.reshape(1, N).astype(jnp.float32), alpha_row)
    return out[:M] if Mp != M else out


def _cross_scale_attn_kernel(xu_ref, wnt_ref, raw_ref, o_ref):
    """Per (batch, query-tile) attention core.

    xu  : (1, tq, K1) bf16  3x3 query patches of conv_match_1(input)
    wnt : (1, K1, L)  bf16  L2-normalised (and softmax_scale-scaled) ref patches
    raw : (1, L,  K2) bf16  raw 6x6 patches of conv_assembly(input)
    out : (1, tq, K2) f32   softmax-attention-weighted raw patches
    """
    s = jnp.dot(xu_ref[0], wnt_ref[0], preferred_element_type=jnp.float32)
    s = s - jnp.max(s, axis=-1, keepdims=True)
    e = jnp.exp(s)
    a = e * pl.reciprocal(jnp.sum(e, axis=-1, keepdims=True), approx=True)
    o_ref[0] = jnp.dot(a.astype(jnp.bfloat16), raw_ref[0],
                       preferred_element_type=jnp.float32).astype(o_ref.dtype)


def cross_scale_attention_core(xu, wn_t, raw, *, q_tile=256):
    """HW-tiled attention: resident (K1,L)/(L,K2) blocks, streamed xu/out tiles."""
    B, HW, K1 = xu.shape
    _, _, L = wn_t.shape
    _, _, K2 = raw.shape
    tq = max(16, (min(q_tile, HW) // 16) * 16)
    n_q = -(-HW // tq)
    HWp = n_q * tq
    if HWp != HW:
        xu = jnp.pad(xu, ((0, 0), (0, HWp - HW), (0, 0)))
    out = pl.pallas_call(
        _cross_scale_attn_kernel,
        out_shape=jax.ShapeDtypeStruct((B, HWp, K2), jnp.float32),
        grid=(B, n_q),
        in_specs=[
            pl.BlockSpec((1, tq, K1), lambda b, q: (b, q, 0)),
            pl.BlockSpec((1, K1, L), lambda b, q: (b, 0, 0)),   # resident per batch
            pl.BlockSpec((1, L, K2), lambda b, q: (b, 0, 0)),   # resident per batch
        ],
        out_specs=pl.BlockSpec((1, tq, K2), lambda b, q: (b, q, 0)),
        compiler_params=pltpu.CompilerParams(
            dimension_semantics=("parallel", "parallel"),
            vmem_limit_bytes=64 * 1024 * 1024),
    )(xu.astype(jnp.bfloat16), wn_t.astype(jnp.bfloat16), raw.astype(jnp.bfloat16))
    return out[:, :HW] if HWp != HW else out


# ----------------------------------------------------------------------------
# Plain-JAX glue (padding / unfold / fold / downsample) — pure data movement
# ----------------------------------------------------------------------------
def _same_pad_amounts(h, w, kh, kw, sh, sw):
    out_h = -(-h // sh)
    out_w = -(-w // sw)
    pad_h = max(0, (out_h - 1) * sh + kh - h)
    pad_w = max(0, (out_w - 1) * sw + kw - w)
    top, left = pad_h // 2, pad_w // 2
    return top, pad_h - top, left, pad_w - left


def unfold_nchw(x, k, stride, pads):
    """torch.nn.Unfold equivalent: (B,C,H,W) -> (B, C*k*k, L), (c,dy,dx) order."""
    top, bottom, left, right = pads
    xp = jnp.pad(x, ((0, 0), (0, 0), (top, bottom), (left, right)))
    B, C, Hp, Wp = xp.shape
    oh = (Hp - k) // stride + 1
    ow = (Wp - k) // stride + 1
    cols = []
    for dy in range(k):
        for dx in range(k):
            cols.append(xp[:, :, dy:dy + stride * oh:stride,
                           dx:dx + stride * ow:stride])
    patches = jnp.stack(cols, axis=2)             # (B, C, k*k, oh, ow)
    return patches.reshape(B, C * k * k, oh * ow)


def downsample_x2(x):
    """F.interpolate(scale_factor=0.5, bilinear, align_corners=False) for even
    H, W is exactly 2x2 average pooling."""
    B, C, H, W = x.shape
    return x.reshape(B, C, H // 2, 2, W // 2, 2).mean(axis=(3, 5))


def fold_overlap_add_x2(P, B, Hp, Wp, C, kernel):
    """conv_transpose2d overlap-add for stride=2, padding=2, kernel=6 patches.

    P: (B, Hp*Wp, C*kernel*kernel) weighted patches -> NHWC (B, 2Hp, 2Wp, C).
    Restructured as 9 contiguous adds on a 2x2 phase-decomposed grid buffer
    instead of 36 strided full-buffer scatter-adds.
    """
    kb = kernel // 2                                       # 3 blocks of 2x2 phases
    P6 = P.reshape(B, Hp, Wp, C, kb, 2, kb, 2)             # (.., by, py, bx, px)
    buf = jnp.zeros((B, Hp + 2, Wp + 2, C, 2, 2), jnp.float32)
    for by in range(kb):
        for bx in range(kb):
            buf = buf.at[:, by:by + Hp, bx:bx + Wp].add(
                P6[:, :, :, :, by, :, bx, :])
    grid = buf[:, 1:1 + Hp, 1:1 + Wp]                      # (B, Hp, Wp, C, 2, 2)
    return grid.transpose(0, 1, 4, 2, 5, 3).reshape(B, 2 * Hp, 2 * Wp, C)


# ----------------------------------------------------------------------------
# Forward pass
# ----------------------------------------------------------------------------
def cross_scale_attention_forward(x, params, *, ksize=3, scale=2, stride=1,
                                  softmax_scale=10.0, eps=1e-4,
                                  q_tile=256, mm_tile=512):
    # TODO(synk): only scale == 2, stride == 1, average=True (the module
    # defaults / self.down path) are implemented.
    assert scale == 2 and stride == 1
    s = scale
    B, C, H, W = x.shape
    cr = params["match1_w"].shape[0]

    # reflect-pad so H, W are divisible by s
    mod_h = (s - H % s) % s
    mod_w = (s - W % s) % s
    if mod_h or mod_w:
        x = jnp.pad(x, ((0, 0), (0, 0), (0, mod_h), (0, mod_w)), mode="reflect")
    Hp, Wp = H + mod_h, W + mod_w
    Hr, Wr = Hp // s, Wp // s                     # ref resolution, L = Hr*Wr

    # --- fused conv_match_1 + conv_assembly (1x1 conv + PReLU), one matmul ---
    xf = x.transpose(0, 2, 3, 1).reshape(B * Hp * Wp, C)
    w_cat = jnp.concatenate([params["match1_w"][:, :, 0, 0],
                             params["assembly_w"][:, :, 0, 0]], axis=0).T
    b_cat = jnp.concatenate([params["match1_b"], params["assembly_b"]])
    a_cat = jnp.concatenate([params["match1_a"] * jnp.ones((cr,), jnp.float32),
                             params["assembly_a"] * jnp.ones((C,), jnp.float32)])
    y_cat = matmul_bias(xf, w_cat, b_cat, a_cat, use_prelu=True, tm=mm_tile)
    match_input = y_cat[:, :cr].reshape(B, Hp, Wp, cr).transpose(0, 3, 1, 2)
    embed_w = y_cat[:, cr:].reshape(B, Hp, Wp, C).transpose(0, 3, 1, 2)

    # --- conv_match_2 on the bilinear 2x-downsampled input -------------------
    xd = downsample_x2(x).transpose(0, 2, 3, 1).reshape(B * Hr * Wr, C)
    ref = matmul_bias(xd, params["match2_w"][:, :, 0, 0].T, params["match2_b"],
                      params["match2_a"] * jnp.ones((cr,), jnp.float32),
                      use_prelu=True, tm=mm_tile)
    ref = ref.reshape(B, Hr, Wr, cr).transpose(0, 3, 1, 2)

    # --- patch extraction (torch.nn.Unfold equivalents) ----------------------
    kernel = s * ksize                            # 6x6 raw patches
    raw_w = unfold_nchw(
        embed_w, kernel, s * stride,
        _same_pad_amounts(Hp, Wp, kernel, kernel, s * stride, s * stride)
    ).transpose(0, 2, 1)                          # (B, L, C*36)
    w_p = unfold_nchw(
        ref, ksize, stride,
        _same_pad_amounts(Hr, Wr, ksize, ksize, stride, stride)
    ).transpose(0, 2, 1)                          # (B, L, cr*9)
    xu = unfold_nchw(
        match_input, ksize, 1,
        _same_pad_amounts(Hp, Wp, ksize, ksize, 1, 1)
    ).transpose(0, 2, 1)                          # (B, Hp*Wp, cr*9)

    # L2-normalise once per batch (escape_NaN clamp on the norm), fold the
    # softmax_scale into the tiny reference patches, pre-transpose to (K1, L).
    norm = jnp.sqrt(jnp.sum(w_p * w_p, axis=2, keepdims=True))
    wn_t = jnp.swapaxes((w_p / jnp.maximum(norm, eps)) * softmax_scale, 1, 2)

    # --- Pallas hot path: scores + softmax + weighted raw patches ------------
    P = cross_scale_attention_core(xu, wn_t, raw_w, q_tile=q_tile)

    # --- conv_transpose2d(yi, raw_wi, stride=2, padding=2) overlap-add -------
    y_up = fold_overlap_add_x2(P, B, Hp, Wp, C, kernel)   # NHWC (B, 2Hp, 2Wp, C)

    # --- self.down: Conv2d(C, C, 3, stride=2, padding=1), then /6.0 ----------
    # TODO(synk): down conv left to lax.conv_general_dilated (per perf review,
    # avoids the 9x im2col HBM blow-up); a halo'd Pallas conv could also fuse
    # the bias + /6 epilogue.
    w_hwio = jnp.transpose(params["down_w"], (2, 3, 1, 0))  # (3,3,Cin,Cout)
    y = jax.lax.conv_general_dilated(
        y_up, w_hwio, window_strides=(2, 2), padding=((1, 1), (1, 1)),
        dimension_numbers=("NHWC", "HWIO", "NHWC"))
    y = (y + params["down_b"]) * (1.0 / 6.0)
    y = y.transpose(0, 3, 1, 2)
    return y[:, :, :H, :W]


# ----------------------------------------------------------------------------
# Deterministic parameter init (shapes from CrossScaleAttention.__init__)
# ----------------------------------------------------------------------------
def init_params(key, channel, reduction=2):
    cr = channel // reduction
    ks = jax.random.split(key, 8)

    def w_init(k, shape, scl=0.1):
        return scl * jax.random.normal(k, shape, jnp.float32)

    a = jnp.asarray(0.25, jnp.float32)            # nn.PReLU() default slope
    return {
        "match1_w": w_init(ks[0], (cr, channel, 1, 1)),
        "match1_b": w_init(ks[1], (cr,), 0.05),
        "match1_a": a,
        "match2_w": w_init(ks[2], (cr, channel, 1, 1)),
        "match2_b": w_init(ks[3], (cr,), 0.05),
        "match2_a": a,
        "assembly_w": w_init(ks[4], (channel, channel, 1, 1)),
        "assembly_b": w_init(ks[5], (channel,), 0.05),
        "assembly_a": a,
        "down_w": w_init(ks[6], (channel, channel, 3, 3)),
        "down_b": w_init(ks[7], (channel,), 0.05),
    }


if __name__ == "__main__":
    key = jax.random.PRNGKey(0)
    k_in, k_par = jax.random.split(key)

    B, C, H, W = 2, 8, 16, 16
    x = jax.random.normal(k_in, (B, C, H, W), jnp.float32)
    params = init_params(k_par, channel=C, reduction=2)

    fwd = jax.jit(functools.partial(cross_scale_attention_forward,
                                    ksize=3, scale=2, stride=1,
                                    softmax_scale=10.0, eps=1e-4,
                                    q_tile=256, mm_tile=512))
    out = jax.block_until_ready(fwd(x, params))

    assert out.shape == (B, C, H, W), out.shape
    assert bool(jnp.all(jnp.isfinite(out)))
    print("KERNEL_OK")
</pallas_src>

<mosaic_0001>
module attributes {stable_mosaic.version = 11 : i64} {
  func.func @_mm_bias_act_kernel(%arg0: i32, %arg1: memref<512x8xbf16, #tpu.memory_space<vmem>>, %arg2: memref<8x12xbf16, #tpu.memory_space<vmem>>, %arg3: memref<1x12xf32, #tpu.memory_space<vmem>>, %arg4: memref<1x12xf32, #tpu.memory_space<vmem>>, %arg5: memref<512x12xf32, #tpu.memory_space<vmem>>) attributes {dimension_semantics = [#tpu.dimension_semantics<parallel>], iteration_bounds = array<i64: 1>, scalar_prefetch = 0 : i64, scratch_operands = 0 : i64, tpu.core_type = #tpu.core_type<tc>, window_params = [{transform_indices = @transform_0, window_bounds = array<i64: 512, 8>}, {pipeline_mode = #tpu.pipeline_mode<synchronous>, transform_indices = @transform_1, window_bounds = array<i64: 8, 12>}, {pipeline_mode = #tpu.pipeline_mode<synchronous>, transform_indices = @transform_2, window_bounds = array<i64: 1, 12>}, {pipeline_mode = #tpu.pipeline_mode<synchronous>, transform_indices = @transform_3, window_bounds = array<i64: 1, 12>}, {transform_indices = @transform_4, window_bounds = array<i64: 512, 12>}]} {
    %c0 = arith.constant 0 : index
    %c0_0 = arith.constant 0 : index
    %0 = vector.load %arg1[%c0, %c0_0] : memref<512x8xbf16, #tpu.memory_space<vmem>>, vector<512x8xbf16>
    %c0_1 = arith.constant 0 : index
    %c0_2 = arith.constant 0 : index
    %1 = vector.load %arg2[%c0_1, %c0_2] : memref<8x12xbf16, #tpu.memory_space<vmem>>, vector<8x12xbf16>
    %cst = arith.constant dense<0.000000e+00> : vector<512x12xf32>
    %2 = tpu.matmul %0, %1, %cst {dimension_numbers = #tpu.dot_dimension_numbers<[1], [0], [0], [1], [0, 0, 1, 1], [], []>} : vector<512x8xbf16>, vector<8x12xbf16>, vector<512x12xf32> -> vector<512x12xf32>
    %c0_3 = arith.constant 0 : index
    %c0_4 = arith.constant 0 : index
    %3 = vector.load %arg3[%c0_3, %c0_4] : memref<1x12xf32, #tpu.memory_space<vmem>>, vector<1x12xf32>
    %4 = vector.broadcast %3 : vector<1x12xf32> to vector<512x12xf32>
    %5 = arith.addf %2, %4 : vector<512x12xf32>
    %cst_5 = arith.constant 0.000000e+00 : f32
    %6 = vector.broadcast %cst_5 : f32 to vector<512x12xf32>
    %7 = arith.cmpf oge, %5, %6 : vector<512x12xf32>
    %c0_6 = arith.constant 0 : index
    %c0_7 = arith.constant 0 : index
    %8 = vector.load %arg4[%c0_6, %c0_7] : memref<1x12xf32, #tpu.memory_space<vmem>>, vector<1x12xf32>
    %9 = vector.broadcast %8 : vector<1x12xf32> to vector<512x12xf32>
    %10 = arith.mulf %9, %5 : vector<512x12xf32>
    %11 = arith.select %7, %5, %10 : vector<512x12xi1>, vector<512x12xf32>
    %c0_8 = arith.constant 0 : index
    %c0_9 = arith.constant 0 : index
    %12 = vector.load %arg5[%c0_8, %c0_9] : memref<512x12xf32, #tpu.memory_space<vmem>>, vector<512x12xf32>
    tpu.vector_store %arg5[%c0_8, %c0_9], %11 {strides = array<i32>} : memref<512x12xf32, #tpu.memory_space<vmem>>, vector<512x12xf32>,
    return
  }
  func.func @transform_0(%arg0: i32) -> (i32, i32) {
    %c0_i32 = arith.constant 0 : i32
    %c0_i32_0 = arith.constant 0 : i32
    return %arg0, %c0_i32 : i32, i32
  }
  func.func @transform_1(%arg0: i32) -> (i32, i32) {
    %c0_i32 = arith.constant 0 : i32
    %c0_i32_0 = arith.constant 0 : i32
    %c0_i32_1 = arith.constant 0 : i32
    return %c0_i32, %c0_i32_0 : i32, i32
  }
  func.func @transform_2(%arg0: i32) -> (i32, i32) {
    %c0_i32 = arith.constant 0 : i32
    %c0_i32_0 = arith.constant 0 : i32
    %c0_i32_1 = arith.constant 0 : i32
    return %c0_i32, %c0_i32_0 : i32, i32
  }
  func.func @transform_3(%arg0: i32) -> (i32, i32) {
    %c0_i32 = arith.constant 0 : i32
    %c0_i32_0 = arith.constant 0 : i32
    %c0_i32_1 = arith.constant 0 : i32
    return %c0_i32, %c0_i32_0 : i32, i32
  }
  func.func @transform_4(%arg0: i32) -> (i32, i32) {
    %c0_i32 = arith.constant 0 : i32
    %c0_i32_0 = arith.constant 0 : i32
    return %arg0, %c0_i32 : i32, i32
  }
}

module attributes {stable_mosaic.version = 11 : i64} {
  func.func @_mm_bias_act_kernel(%arg0: i32, %arg1: memref<128x8xbf16, #tpu.memory_space<vmem>>, %arg2: memref<8x4xbf16, #tpu.memory_space<vmem>>, %arg3: memref<1x4xf32, #tpu.memory_space<vmem>>, %arg4: memref<1x4xf32, #tpu.memory_space<vmem>>, %arg5: memref<128x4xf32, #tpu.memory_space<vmem>>) attributes {dimension_semantics = [#tpu.dimension_semantics<parallel>], iteration_bounds = array<i64: 1>, scalar_prefetch = 0 : i64, scratch_operands = 0 : i64, tpu.core_type = #tpu.core_type<tc>, window_params = [{transform_indices = @transform_0, window_bounds = array<i64: 128, 8>}, {pipeline_mode = #tpu.pipeline_mode<synchronous>, transform_indices = @transform_1, window_bounds = array<i64: 8, 4>}, {pipeline_mode = #tpu.pipeline_mode<synchronous>, transform_indices = @transform_2, window_bounds = array<i64: 1, 4>}, {pipeline_mode = #tpu.pipeline_mode<synchronous>, transform_indices = @transform_3, window_bounds = array<i64: 1, 4>}, {transform_indices = @transform_4, window_bounds = array<i64: 128, 4>}]} {
    %c0 = arith.constant 0 : index
    %c0_0 = arith.constant 0 : index
    %0 = vector.load %arg1[%c0, %c0_0] : memref<128x8xbf16, #tpu.memory_space<vmem>>, vector<128x8xbf16>
    %c0_1 = arith.constant 0 : index
    %c0_2 = arith.constant 0 : index
    %1 = vector.load %arg2[%c0_1, %c0_2] : memref<8x4xbf16, #tpu.memory_space<vmem>>, vector<8x4xbf16>
    %cst = arith.constant dense<0.000000e+00> : vector<128x4xf32>
    %2 = tpu.matmul %0, %1, %cst {dimension_numbers = #tpu.dot_dimension_numbers<[1], [0], [0], [1], [0, 0, 1, 1], [], []>} : vector<128x8xbf16>, vector<8x4xbf16>, vector<128x4xf32> -> vector<128x4xf32>
    %c0_3 = arith.constant 0 : index
    %c0_4 = arith.constant 0 : index
    %3 = vector.load %arg3[%c0_3, %c0_4] : memref<1x4xf32, #tpu.memory_space<vmem>>, vector<1x4xf32>
    %4 = vector.broadcast %3 : vector<1x4xf32> to vector<128x4xf32>
    %5 = arith.addf %2, %4 : vector<128x4xf32>
    %cst_5 = arith.constant 0.000000e+00 : f32
    %6 = vector.broadcast %cst_5 : f32 to vector<128x4xf32>
    %7 = arith.cmpf oge, %5, %6 : vector<128x4xf32>
    %c0_6 = arith.constant 0 : index
    %c0_7 = arith.constant 0 : index
    %8 = vector.load %arg4[%c0_6, %c0_7] : memref<1x4xf32, #tpu.memory_space<vmem>>, vector<1x4xf32>
    %9 = vector.broadcast %8 : vector<1x4xf32> to vector<128x4xf32>
    %10 = arith.mulf %9, %5 : vector<128x4xf32>
    %11 = arith.select %7, %5, %10 : vector<128x4xi1>, vector<128x4xf32>
    %c0_8 = arith.constant 0 : index
    %c0_9 = arith.constant 0 : index
    %12 = vector.load %arg5[%c0_8, %c0_9] : memref<128x4xf32, #tpu.memory_space<vmem>>, vector<128x4xf32>
    tpu.vector_store %arg5[%c0_8, %c0_9], %11 {strides = array<i32>} : memref<128x4xf32, #tpu.memory_space<vmem>>, vector<128x4xf32>,
    return
  }
  func.func @transform_0(%arg0: i32) -> (i32, i32) {
    %c0_i32 = arith.constant 0 : i32
    %c0_i32_0 = arith.constant 0 : i32
    return %arg0, %c0_i32 : i32, i32
  }
  func.func @transform_1(%arg0: i32) -> (i32, i32) {
    %c0_i32 = arith.constant 0 : i32
    %c0_i32_0 = arith.constant 0 : i32
    %c0_i32_1 = arith.constant 0 : i32
    return %c0_i32, %c0_i32_0 : i32, i32
  }
  func.func @transform_2(%arg0: i32) -> (i32, i32) {
    %c0_i32 = arith.constant 0 : i32
    %c0_i32_0 = arith.constant 0 : i32
    %c0_i32_1 = arith.constant 0 : i32
    return %c0_i32, %c0_i32_0 : i32, i32
  }
  func.func @transform_3(%arg0: i32) -> (i32, i32) {
    %c0_i32 = arith.constant 0 : i32
    %c0_i32_0 = arith.constant 0 : i32
    %c0_i32_1 = arith.constant 0 : i32
    return %c0_i32, %c0_i32_0 : i32, i32
  }
  func.func @transform_4(%arg0: i32) -> (i32, i32) {
    %c0_i32 = arith.constant 0 : i32
    %c0_i32_0 = arith.constant 0 : i32
    return %arg0, %c0_i32 : i32, i32
  }
}

module attributes {stable_mosaic.version = 11 : i64} {
  func.func @_cross_scale_attn_kernel(%arg0: i32, %arg1: i32, %arg2: memref<1x256x36xbf16, #tpu.memory_space<vmem>>, %arg3: memref<1x36x64xbf16, #tpu.memory_space<vmem>>, %arg4: memref<1x64x288xbf16, #tpu.memory_space<vmem>>, %arg5: memref<1x256x288xf32, #tpu.memory_space<vmem>>) attributes {dimension_semantics = [#tpu.dimension_semantics<parallel>, #tpu.dimension_semantics<parallel>], iteration_bounds = array<i64: 2, 1>, scalar_prefetch = 0 : i64, scratch_operands = 0 : i64, tpu.core_type = #tpu.core_type<tc>, window_params = [{transform_indices = @transform_0, window_bounds = array<i64: 1, 256, 36>}, {transform_indices = @transform_1, window_bounds = array<i64: 1, 36, 64>}, {transform_indices = @transform_2, window_bounds = array<i64: 1, 64, 288>}, {transform_indices = @transform_3, window_bounds = array<i64: 1, 256, 288>}]} {
    %c0 = arith.constant 0 : index
    %c0_0 = arith.constant 0 : index
    %c0_1 = arith.constant 0 : index
    %0 = vector.load %arg2[%c0, %c0_0, %c0_1] : memref<1x256x36xbf16, #tpu.memory_space<vmem>>, vector<1x256x36xbf16>
    %1 = vector.shape_cast %0 : vector<1x256x36xbf16> to vector<256x36xbf16>
    %c0_2 = arith.constant 0 : index
    %c0_3 = arith.constant 0 : index
    %c0_4 = arith.constant 0 : index
    %2 = vector.load %arg3[%c0_2, %c0_3, %c0_4] : memref<1x36x64xbf16, #tpu.memory_space<vmem>>, vector<1x36x64xbf16>
    %3 = vector.shape_cast %2 : vector<1x36x64xbf16> to vector<36x64xbf16>
    %cst = arith.constant dense<0.000000e+00> : vector<256x64xf32>
    %4 = tpu.matmul %1, %3, %cst {dimension_numbers = #tpu.dot_dimension_numbers<[1], [0], [0], [1], [0, 0, 1, 1], [], []>} : vector<256x36xbf16>, vector<36x64xbf16>, vector<256x64xf32> -> vector<256x64xf32>
    %cst_5 = arith.constant dense<0xFF800000> : vector<256xf32>
    %5 = vector.multi_reduction <maximumf>, %4, %cst_5 [1] : vector<256x64xf32> to vector<256xf32>
    %6 = vector.shape_cast %5 : vector<256xf32> to vector<256x1xf32>
    %7 = vector.broadcast %6 : vector<256x1xf32> to vector<256x64xf32>
    %8 = arith.subf %4, %7 : vector<256x64xf32>
    %9 = math.exp %8 : vector<256x64xf32>
    %cst_6 = arith.constant dense<0.000000e+00> : vector<256xf32>
    %10 = vector.multi_reduction <add>, %9, %cst_6 [1] : vector<256x64xf32> to vector<256xf32>
    %11 = vector.shape_cast %10 : vector<256xf32> to vector<256x1xf32>
    %12 = tpu.reciprocal %11 {approx = true} : vector<256x1xf32> -> vector<256x1xf32>
    %13 = vector.broadcast %12 : vector<256x1xf32> to vector<256x64xf32>
    %14 = arith.mulf %9, %13 : vector<256x64xf32>
    %15 = arith.truncf %14 : vector<256x64xf32> to vector<256x64xbf16>
    %c0_7 = arith.constant 0 : index
    %c0_8 = arith.constant 0 : index
    %c0_9 = arith.constant 0 : index
    %16 = vector.load %arg4[%c0_7, %c0_8, %c0_9] : memref<1x64x288xbf16, #tpu.memory_space<vmem>>, vector<1x64x288xbf16>
    %17 = vector.shape_cast %16 : vector<1x64x288xbf16> to vector<64x288xbf16>
    %cst_10 = arith.constant dense<0.000000e+00> : vector<256x288xf32>
    %18 = tpu.matmul %15, %17, %cst_10 {dimension_numbers = #tpu.dot_dimension_numbers<[1], [0], [0], [1], [0, 0, 1, 1], [], []>} : vector<256x64xbf16>, vector<64x288xbf16>, vector<256x288xf32> -> vector<256x288xf32>
    %c0_11 = arith.constant 0 : index
    %c0_12 = arith.constant 0 : index
    %c0_13 = arith.constant 0 : index
    %19 = vector.load %arg5[%c0_11, %c0_12, %c0_13] : memref<1x256x288xf32, #tpu.memory_space<vmem>>, vector<1x256x288xf32>
    %20 = vector.shape_cast %19 : vector<1x256x288xf32> to vector<256x288xf32>
    %21 = vector.shape_cast %18 : vector<256x288xf32> to vector<1x256x288xf32>
    tpu.vector_store %arg5[%c0_11, %c0_12, %c0_13], %21 {strides = array<i32>} : memref<1x256x288xf32, #tpu.memory_space<vmem>>, vector<1x256x288xf32>,
    return
  }
  func.func @transform_0(%arg0: i32, %arg1: i32) -> (i32, i32, i32) {
    %c0_i32 = arith.constant 0 : i32
    %c0_i32_0 = arith.constant 0 : i32
    return %arg0, %arg1, %c0_i32 : i32, i32, i32
  }
  func.func @transform_1(%arg0: i32, %arg1: i32) -> (i32, i32, i32) {
    %c0_i32 = arith.constant 0 : i32
    %c0_i32_0 = arith.constant 0 : i32
    %c0_i32_1 = arith.constant 0 : i32
    return %arg0, %c0_i32, %c0_i32_0 : i32, i32, i32
  }
  func.func @transform_2(%arg0: i32, %arg1: i32) -> (i32, i32, i32) {
    %c0_i32 = arith.constant 0 : i32
    %c0_i32_0 = arith.constant 0 : i32
    %c0_i32_1 = arith.constant 0 : i32
    return %arg0, %c0_i32, %c0_i32_0 : i32, i32, i32
  }
  func.func @transform_3(%arg0: i32, %arg1: i32) -> (i32, i32, i32) {
    %c0_i32 = arith.constant 0 : i32
    %c0_i32_0 = arith.constant 0 : i32
    return %arg0, %arg1, %c0_i32 : i32, i32, i32
  }
}

</mosaic_0001>

<llo_original>
// kernel: mul.10
$region0: #{mul.10}
  #allocation0 [shape = 's32[1]{0}', space=sflag, size = 0x4, scoped, tag = 'scoped memory for mul.10']
  %s0 = inlined_call_operand.<no memory space> [shape: f32[], index: 0, kind: input, shape index: {}]
  %s1 = inlined_call_operand.vmem [shape: f32[4], index: 1, kind: output, shape index: {}]
  %v2 = vstv %s0
  %3 = vst [vmem:[%s1] sm:$0x1] %v2

// kernel: cross_scale_attention_forward.3
$region0: #{cross_scale_attention_forward.3}
  #allocation0 [shape = 'u32[]', space=smem, size = 0x4, offset = 0x4, fixed_abs, tag = 'smem constant byte address 0x4 - core index']
  #allocation1 [shape = 'u32[144,128]{1,0:T(1,128)}', space=vmem, size = 0x12000, scoped, tag = 'internal scratch']
  %s0 = inlined_call_operand.hbm [shape: bf16[512,8], index: 0, kind: input, shape index: {}]
  %s1 = inlined_call_operand.hbm [shape: bf16[8,12], index: 1, kind: input, shape index: {}]
  %s2 = inlined_call_operand.hbm [shape: f32[1,12], index: 2, kind: input, shape index: {}]
  %s3 = inlined_call_operand.hbm [shape: f32[1,12], index: 3, kind: input, shape index: {}]
  %s4 = inlined_call_operand.hbm [shape: f32[512,12], index: 4, kind: output, shape index: {}]
  %s5 = sld [smem:[#allocation0]]
  $region42: #{cross_scale_attention_forward.3} parent=0
    _
  %s7 = ssub.s32 1, %s5
  %s8 = scalar_select 0, %s7, %s5
  $region1: #{cross_scale_attention_forward.3} parent=0
    #allocation2 [shape = 'u8[131072]{0}', space=vmem, size = 0x20000, scoped, tag = 'input window, operand 0, single buffered']
    #allocation3 [shape = 's32[1]{0}', space=sflag, size = 0x4, scoped, tag = 'scoped memory for cross_scale_attention_forward.3']
    #allocation4 [shape = 's32[1]{0}', space=sflag, size = 0x4, scoped, tag = 'scoped memory for cross_scale_attention_forward.3']
    #allocation5 [shape = 'u8[2048]{0}', space=vmem, size = 0x800, scoped, tag = 'input window, operand 1, single buffered']
    #allocation6 [shape = 's32[1]{0}', space=sflag, size = 0x4, scoped, tag = 'scoped memory for cross_scale_attention_forward.3']
    #allocation7 [shape = 'u8[512]{0}', space=vmem, size = 0x400, scoped, tag = 'input window, operand 2, single buffered']
    #allocation8 [shape = 'u8[512]{0}', space=vmem, size = 0x400, scoped, tag = 'input window, operand 3, single buffered']
    #allocation9 [shape = 's32[1]{0}', space=sflag, size = 0x4, scoped, tag = 'scoped memory for cross_scale_attention_forward.3']
    #allocation10 [shape = 'u8[262144]{0}', space=vmem, size = 0x40000, scoped, tag = 'output window, operand 0, single buffered']
    %9 = vsyncpa [#allocation3], 0
    %10 = vsyncpa [#allocation6], 0
    %11 = vsyncpa [#allocation9], 0
    %12 = vsyncpa [#allocation4], 0
    // Predicated region
    $region2: #{cross_scale_attention_forward.3} parent=1 // pred_check
      _
    $region3: #{cross_scale_attention_forward.3} parent=1 // pred_check_branch
      %14 = sbr.rel (0) target = $region5
    $region4: #{cross_scale_attention_forward.3} parent=1 // pred_region
      %s16 = ssub.s32 4096, 4096
      %17 = vsyncadd [#allocation3], %s16
      %s18 = sshll.u32 [#allocation2], 4
      %s19 = int_to_ptr.vmem [resolvable:$true] %s18
      %24 = dma.hbm_to_vmem [thread:$0]  %s0, 4096, %s19, [#allocation3], 64, 64, 4
    $region5: #{cross_scale_attention_forward.3} parent=1 // pred_fallthru
      _
    // Predicated region
    $region6: #{cross_scale_attention_forward.3} parent=1 // pred_check
      _
    $region7: #{cross_scale_attention_forward.3} parent=1 // pred_check_branch
      %26 = sbr.rel (0) target = $region9
    $region8: #{cross_scale_attention_forward.3} parent=1 // pred_region
      %s28 = ssub.s32 64, 64
      %29 = vsyncadd [#allocation6], %s28
      %s31 = sshll.u32 [#allocation5], 4
      %s32 = int_to_ptr.vmem [resolvable:$true] %s31
      %34 = dma.hbm_to_vmem [thread:$0]  %s1, 64, %s32, [#allocation6]
    $region9: #{cross_scale_attention_forward.3} parent=1 // pred_fallthru
      _
    // Predicated region
    $region10: #{cross_scale_attention_forward.3} parent=1 // pred_check
      _
    $region11: #{cross_scale_attention_forward.3} parent=1 // pred_check_branch
      %36 = sbr.rel (0) target = $region13
    $region12: #{cross_scale_attention_forward.3} parent=1 // pred_region
      %s38 = ssub.s32 16, 16
      %39 = vsyncadd [#allocation6], %s38
      %s41 = sshll.u32 [#allocation7], 4
      %s42 = int_to_ptr.vmem [resolvable:$true] %s41
      %44 = dma.hbm_to_vmem [thread:$0]  %s2, 16, %s42, [#allocation6]
    $region13: #{cross_scale_attention_forward.3} parent=1 // pred_fallthru
      _
    // Predicated region
    $region14: #{cross_scale_attention_forward.3} parent=1 // pred_check
      _
    $region15: #{cross_scale_attention_forward.3} parent=1 // pred_check_branch
      %46 = sbr.rel (0) target = $region17
    $region16: #{cross_scale_attention_forward.3} parent=1 // pred_region
      %s48 = ssub.s32 16, 16
      %49 = vsyncadd [#allocation9], %s48
      %s51 = sshll.u32 [#allocation8], 4
      %s52 = int_to_ptr.vmem [resolvable:$true] %s51
      %54 = dma.hbm_to_vmem [thread:$0]  %s3, 16, %s52, [#allocation9]
    $region17: #{cross_scale_attention_forward.3} parent=1 // pred_fallthru
      _
    // Predicated region
    $region18: #{cross_scale_attention_forward.3} parent=1 // pred_check
      _
    $region19: #{cross_scale_attention_forward.3} parent=1 // pred_check_branch
      %56 = sbr.rel (0) target = $region21
    $region20: #{cross_scale_attention_forward.3} parent=1 // pred_region
      %57 = dma.done [#allocation3], 4096
    $region21: #{cross_scale_attention_forward.3} parent=1 // pred_fallthru
      _
    // Predicated region
    $region22: #{cross_scale_attention_forward.3} parent=1 // pred_check
      _
    $region23: #{cross_scale_attention_forward.3} parent=1 // pred_check_branch
      %59 = sbr.rel (0) target = $region25
    $region24: #{cross_scale_attention_forward.3} parent=1 // pred_region
      %60 = dma.done [#allocation6], 64
    $region25: #{cross_scale_attention_forward.3} parent=1 // pred_fallthru
      _
    // Predicated region
    $region26: #{cross_scale_attention_forward.3} parent=1 // pred_check
      _
    $region27: #{cross_scale_attention_forward.3} parent=1 // pred_check_branch
      %62 = sbr.rel (0) target = $region29
    $region28: #{cross_scale_attention_forward.3} parent=1 // pred_region
      %63 = dma.done [#allocation6], 16
    $region29: #{cross_scale_attention_forward.3} parent=1 // pred_fallthru
      _
    // Predicated region
    $region30: #{cross_scale_attention_forward.3} parent=1 // pred_check
      _
    $region31: #{cross_scale_attention_forward.3} parent=1 // pred_check_branch
      %65 = sbr.rel (0) target = $region33
    $region32: #{cross_scale_attention_forward.3} parent=1 // pred_region
      %66 = dma.done [#allocation9], 16
    $region33: #{cross_scale_attention_forward.3} parent=1 // pred_fallthru
      _
    %v68 = vld [vmem:[#allocation2] sm:$0xf]
    %v69 = vld [vmem:[#allocation2 + $0x4] sm:$0xf]
    %v70 = vld [vmem:[#allocation2 + $0x8] sm:$0xf]
    %v71 = vld [vmem:[#allocation2 + $0xc] sm:$0xf]
    %v72 = vld [vmem:[#allocation2 + $0x10] sm:$0xf]
    %v73 = vld [vmem:[#allocation2 + $0x14] sm:$0xf]
    %v74 = vld [vmem:[#allocation2 + $0x18] sm:$0xf]
    %v75 = vld [vmem:[#allocation2 + $0x1c] sm:$0xf]
    %v76 = vld [vmem:[#allocation2 + $0x20] sm:$0xf]
    %v77 = vld [vmem:[#allocation2 + $0x24] sm:$0xf]
    %v78 = vld [vmem:[#allocation2 + $0x28] sm:$0xf]
    %v79 = vld [vmem:[#allocation2 + $0x2c] sm:$0xf]
    %v80 = vld [vmem:[#allocation2 + $0x30] sm:$0xf]
    %v81 = vld [vmem:[#allocation2 + $0x34] sm:$0xf]
    %v82 = vld [vmem:[#allocation2 + $0x38] sm:$0xf]
    %v83 = vld [vmem:[#allocation2 + $0x3c] sm:$0xf]
    %v84 = vld [vmem:[#allocation2 + $0x40] sm:$0xf]
    %v85 = vld [vmem:[#allocation2 + $0x44] sm:$0xf]
    %v86 = vld [vmem:[#allocation2 + $0x48] sm:$0xf]
    %v87 = vld [vmem:[#allocation2 + $0x4c] sm:$0xf]
    %v88 = vld [vmem:[#allocation2 + $0x50] sm:$0xf]
    %v89 = vld [vmem:[#allocation2 + $0x54] sm:$0xf]
    %v90 = vld [vmem:[#allocation2 + $0x58] sm:$0xf]
    %v91 = vld [vmem:[#allocation2 + $0x5c] sm:$0xf]
    %v92 = vld [vmem:[#allocation2 + $0x60] sm:$0xf]
    %v93 = vld [vmem:[#allocation2 + $0x64] sm:$0xf]
    %v94 = vld [vmem:[#allocation2 + $0x68] sm:$0xf]
    %v95 = vld [vmem:[#allocation2 + $0x6c] sm:$0xf]
    %v96 = vld [vmem:[#allocation2 + $0x70] sm:$0xf]
    %v97 = vld [vmem:[#allocation2 + $0x74] sm:$0xf]
    %v98 = vld [vmem:[#allocation2 + $0x78] sm:$0xf]
    %v99 = vld [vmem:[#allocation2 + $0x7c] sm:$0xf]
    %v100 = vld [vmem:[#allocation2 + $0x80] sm:$0xf]
    %v101 = vld [vmem:[#allocation2 + $0x84] sm:$0xf]
    %v102 = vld [vmem:[#allocation2 + $0x88] sm:$0xf]
    %v103 = vld [vmem:[#allocation2 + $0x8c] sm:$0xf]
    %v104 = vld [vmem:[#allocation2 + $0x90] sm:$0xf]
    %v105 = vld [vmem:[#allocation2 + $0x94] sm:$0xf]
    %v106 = vld [vmem:[#allocation2 + $0x98] sm:$0xf]
    %v107 = vld [vmem:[#allocation2 + $0x9c] sm:$0xf]
    %v108 = vld [vmem:[#allocation2 + $0xa0] sm:$0xf]
    %v109 = vld [vmem:[#allocation2 + $0xa4] sm:$0xf]
    %v110 = vld [vmem:[#allocation2 + $0xa8] sm:$0xf]
    %v111 = vld [vmem:[#allocation2 + $0xac] sm:$0xf]
    %v112 = vld [vmem:[#allocation2 + $0xb0] sm:$0xf]
    %v113 = vld [vmem:[#allocation2 + $0xb4] sm:$0xf]
    %v114 = vld [vmem:[#allocation2 + $0xb8] sm:$0xf]
    %v115 = vld [vmem:[#allocation2 + $0xbc] sm:$0xf]
    %v116 = vld [vmem:[#allocation2 + $0xc0] sm:$0xf]
    %v117 = vld [vmem:[#allocation2 + $0xc4] sm:$0xf]
    %v118 = vld [vmem:[#allocation2 + $0xc8] sm:$0xf]
    %v119 = vld [vmem:[#allocation2 + $0xcc] sm:$0xf]
    %v120 = vld [vmem:[#allocation2 + $0xd0] sm:$0xf]
    %v121 = vld [vmem:[#allocation2 + $0xd4] sm:$0xf]
    %v122 = vld [vmem:[#allocation2 + $0xd8] sm:$0xf]
    %v123 = vld [vmem:[#allocation2 + $0xdc] sm:$0xf]
    %v124 = vld [vmem:[#allocation2 + $0xe0] sm:$0xf]
    %v125 = vld [vmem:[#allocation2 + $0xe4] sm:$0xf]
    %v126 = vld [vmem:[#allocation2 + $0xe8] sm:$0xf]
    %v127 = vld [vmem:[#allocation2 + $0xec] sm:$0xf]
    %v128 = vld [vmem:[#allocation2 + $0xf0] sm:$0xf]
    %v129 = vld [vmem:[#allocation2 + $0xf4] sm:$0xf]
    %v130 = vld [vmem:[#allocation2 + $0xf8] sm:$0xf]
    %v131 = vld [vmem:[#allocation2 + $0xfc] sm:$0xf]
    %v132 = vld [vmem:[#allocation5] sm:$0xf]
    %v133 = vld [vmem:[#allocation7] sm:$0x1]
    %v135 = vlaneseq
    %v136 = vshrl.u32 %v135, 7
    %v137 = vsub.s32 0, %v136
    %v138 = vrot.slane %v133, %v137
    %v204 = vunpack.c.l.b16 %v68
    %v205 = vunpack.c.l.b16 %v69
    %v206 = vunpack.c.l.b16 %v70
    %v207 = vunpack.c.l.b16 %v71
    %v208 = vunpack.c.l.b16 %v72
    %v209 = vunpack.c.l.b16 %v73
    %v210 = vunpack.c.l.b16 %v74
    %v211 = vunpack.c.l.b16 %v75
    %v212 = vunpack.c.l.b16 %v76
    %v213 = vunpack.c.l.b16 %v77
    %v214 = vunpack.c.l.b16 %v78
    %v215 = vunpack.c.l.b16 %v79
    %v216 = vunpack.c.l.b16 %v80
    %v217 = vunpack.c.l.b16 %v81
    %v218 = vunpack.c.l.b16 %v82
    %v219 = vunpack.c.l.b16 %v83
    %v220 = vunpack.c.l.b16 %v84
    %v221 = vunpack.c.l.b16 %v85
    %v222 = vunpack.c.l.b16 %v86
    %v223 = vunpack.c.l.b16 %v87
    %v224 = vunpack.c.l.b16 %v88
    %v225 = vunpack.c.l.b16 %v89
    %v226 = vunpack.c.l.b16 %v90
    %v227 = vunpack.c.l.b16 %v91
    %v228 = vunpack.c.l.b16 %v92
    %v229 = vunpack.c.l.b16 %v93
    %v230 = vunpack.c.l.b16 %v94
    %v231 = vunpack.c.l.b16 %v95
    %v232 = vunpack.c.l.b16 %v96
    %v233 = vunpack.c.l.b16 %v97
    %v234 = vunpack.c.l.b16 %v98
    %v235 = vunpack.c.l.b16 %v99
    %v236 = vunpack.c.l.b16 %v100
    %v237 = vunpack.c.l.b16 %v101
    %v238 = vunpack.c.l.b16 %v102
    %v239 = vunpack.c.l.b16 %v103
    %v240 = vunpack.c.l.b16 %v104
    %v241 = vunpack.c.l.b16 %v105
    %v242 = vunpack.c.l.b16 %v106
    %v243 = vunpack.c.l.b16 %v107
    %v244 = vunpack.c.l.b16 %v108
    %v245 = vunpack.c.l.b16 %v109
    %v246 = vunpack.c.l.b16 %v110
    %v247 = vunpack.c.l.b16 %v111
    %v248 = vunpack.c.l.b16 %v112
    %v249 = vunpack.c.l.b16 %v113
    %v250 = vunpack.c.l.b16 %v114
    %v251 = vunpack.c.l.b16 %v115
    %v252 = vunpack.c.l.b16 %v116
    %v253 = vunpack.c.l.b16 %v117
    %v254 = vunpack.c.l.b16 %v118
    %v255 = vunpack.c.l.b16 %v119
    %v256 = vunpack.c.l.b16 %v120
    %v257 = vunpack.c.l.b16 %v121
    %v258 = vunpack.c.l.b16 %v122
    %v259 = vunpack.c.l.b16 %v123
    %v260 = vunpack.c.l.b16 %v124
    %v261 = vunpack.c.l.b16 %v125
    %v262 = vunpack.c.l.b16 %v126
    %v263 = vunpack.c.l.b16 %v127
    %v264 = vunpack.c.l.b16 %v128
    %v265 = vunpack.c.l.b16 %v129
    %v266 = vunpack.c.l.b16 %v130
    %v267 = vunpack.c.l.b16 %v131
    %v268 = vpack.c.b16 %v205, %v204
    %v269 = vpack.c.b16 %v207, %v206
    %v270 = vpack.c.b16 %v209, %v208
    %v271 = vpack.c.b16 %v211, %v210
    %v272 = vpack.c.b16 %v213, %v212
    %v273 = vpack.c.b16 %v215, %v214
    %v274 = vpack.c.b16 %v217, %v216
    %v275 = vpack.c.b16 %v219, %v218
    %v276 = vpack.c.b16 %v221, %v220
    %v277 = vpack.c.b16 %v223, %v222
    %v278 = vpack.c.b16 %v225, %v224
    %v279 = vpack.c.b16 %v227, %v226
    %v280 = vpack.c.b16 %v229, %v228
    %v281 = vpack.c.b16 %v231, %v230
    %v282 = vpack.c.b16 %v233, %v232
    %v283 = vpack.c.b16 %v235, %v234
    %v284 = vpack.c.b16 %v237, %v236
    %v285 = vpack.c.b16 %v239, %v238
    %v286 = vpack.c.b16 %v241, %v240
    %v287 = vpack.c.b16 %v243, %v242
    %v288 = vpack.c.b16 %v245, %v244
    %v289 = vpack.c.b16 %v247, %v246
    %v290 = vpack.c.b16 %v249, %v248
    %v291 = vpack.c.b16 %v251, %v250
    %v292 = vpack.c.b16 %v253, %v252
    %v293 = vpack.c.b16 %v255, %v254
    %v294 = vpack.c.b16 %v257, %v256
    %v295 = vpack.c.b16 %v259, %v258
    %v296 = vpack.c.b16 %v261, %v260
    %v297 = vpack.c.b16 %v263, %v262
    %v298 = vpack.c.b16 %v265, %v264
    %v299 = vpack.c.b16 %v267, %v266
    %vm300 = vcmask 64512
    %v302 = vsel %vm300, %v268, 0
    %v305 = vsel %vm300, %v269, 0
    %v308 = vsel %vm300, %v270, 0
    %v311 = vsel %vm300, %v271, 0
    %v314 = vsel %vm300, %v272, 0
    %v317 = vsel %vm300, %v273, 0
    %v320 = vsel %vm300, %v274, 0
    %v323 = vsel %vm300, %v275, 0
    %v326 = vsel %vm300, %v276, 0
    %v329 = vsel %vm300, %v277, 0
    %v332 = vsel %vm300, %v278, 0
    %v335 = vsel %vm300, %v279, 0
    %v338 = vsel %vm300, %v280, 0
    %v341 = vsel %vm300, %v281, 0
    %v344 = vsel %vm300, %v282, 0
    %v347 = vsel %vm300, %v283, 0
    %v350 = vsel %vm300, %v284, 0
    %v353 = vsel %vm300, %v285, 0
    %v356 = vsel %vm300, %v286, 0
    %v359 = vsel %vm300, %v287, 0
    %v362 = vsel %vm300, %v288, 0
    %v365 = vsel %vm300, %v289, 0
    %v368 = vsel %vm300, %v290, 0
    %v371 = vsel %vm300, %v291, 0
    %v374 = vsel %vm300, %v292, 0
    %v377 = vsel %vm300, %v293, 0
    %v380 = vsel %vm300, %v294, 0
    %v383 = vsel %vm300, %v295, 0
    %v386 = vsel %vm300, %v296, 0
    %v389 = vsel %vm300, %v297, 0
    %v392 = vsel %vm300, %v298, 0
    %v395 = vsel %vm300, %v299, 0
    %vm397 = vcmask 1043456
    %v399 = vsel %vm397, %v132, 0
    %401 = vmatprep.subr.bf16.mxu0 0
    %402 = vmatpush1.bf16.msra.mxu0 %v399
    %403 = vmatprep.subr.bf16.mxu0 0
    %404 = vmatpush1.bf16.msra.mxu0 0
    %405 = vmatprep.subr.bf16.mxu0 0
    %406 = vmatpush1.bf16.msra.mxu0 0
    %407 = vmatprep.subr.bf16.mxu0 0
    %408 = vmatpush1.bf16.msra.mxu0 0
    %409 = vmatprep.subr.bf16.mxu0 0
    %410 = vmatpush1.bf16.msra.mxu0 0
    %411 = vmatprep.subr.bf16.mxu0 0
    %412 = vmatpush1.bf16.msra.mxu0 0
    %413 = vmatprep.subr.bf16.mxu0 0
    %414 = vmatpush1.bf16.msra.mxu0 0
    %415 = vmatprep.subr.bf16.mxu0 0
    %416 = vmatpush1.bf16.msra.mxu0 0
    %417 = vmatprep.subr.bf16.mxu0 0
    %418 = vmatpush1.bf16.msra.mxu0 0
    %419 = vmatprep.subr.bf16.mxu0 0
    %420 = vmatpush1.bf16.msra.mxu0 0
    %421 = vmatprep.subr.bf16.mxu0 0
    %422 = vmatpush1.bf16.msra.mxu0 0
    %423 = vmatprep.subr.bf16.mxu0 0
    %424 = vmatpush1.bf16.msra.mxu0 0
    %425 = vmatprep.subr.bf16.mxu0 0
    %426 = vmatpush1.bf16.msra.mxu0 0
    %427 = vmatprep.subr.bf16.mxu0 0
    %428 = vmatpush1.bf16.msra.mxu0 0
    %429 = vmatprep.subr.bf16.mxu0 0
    %430 = vmatpush1.bf16.msra.mxu0 0
    %431 = vmatprep.subr.bf16.mxu0 0
    %432 = vmatpush1.bf16.msra.mxu0 0
    %433 = vmatprep.mubr.bf16.mxu0 0
    %434 = vmatmul.mubr.bf16.gmra.mrb[0].mxu0 %v302
    %v435 = vpop.f32.mrb[0].mxu0
    %v436 = vadd.f32 %v138, %v435
    %v437 = vpop.f32.mrb[0].mxu0
    %v438 = vpop.f32.mrb[0].mxu0
    %v439 = vadd.f32 %v138, %v438
    %v440 = vpop.f32.mrb[0].mxu0
    %441 = vmatprep.mubr.bf16.mxu0 0
    %442 = vmatmul.mubr.bf16.gmra.mrb[0].mxu0 %v305
    %v443 = vpop.f32.mrb[0].mxu0
    %v444 = vadd.f32 %v138, %v443
    %v445 = vpop.f32.mrb[0].mxu0
    %v446 = vpop.f32.mrb[0].mxu0
    %v447 = vadd.f32 %v138, %v446
    %v448 = vpop.f32.mrb[0].mxu0
    %449 = vmatprep.mubr.bf16.mxu0 0
    %450 = vmatmul.mubr.bf16.gmra.mrb[0].mxu0 %v308
    %v451 = vpop.f32.mrb[0].mxu0
    %v452 = vadd.f32 %v138, %v451
    %v453 = vpop.f32.mrb[0].mxu0
    %v454 = vpop.f32.mrb[0].mxu0
    %v455 = vadd.f32 %v138, %v454
    %v456 = vpop.f32.mrb[0].mxu0
    %457 = vmatprep.mubr.bf16.mxu0 0
    %458 = vmatmul.mubr.bf16.gmra.mrb[0].mxu0 %v311
    %v459 = vpop.f32.mrb[0].mxu0
    %v460 = vadd.f32 %v138, %v459
    %v461 = vpop.f32.mrb[0].mxu0
    %v462 = vpop.f32.mrb[0].mxu0
    %v463 = vadd.f32 %v138, %v462
    %v464 = vpop.f32.mrb[0].mxu0
    %465 = vmatprep.mubr.bf16.mxu0 0
    %466 = vmatmul.mubr.bf16.gmra.mrb[0].mxu0 %v314
    %v467 = vpop.f32.mrb[0].mxu0
    %v468 = vadd.f32 %v138, %v467
    %v469 = vpop.f32.mrb[0].mxu0
    %v470 = vpop.f32.mrb[0].mxu0
    %v471 = vadd.f32 %v138, %v470
    %v472 = vpop.f32.mrb[0].mxu0
    %473 = vmatprep.mubr.bf16.mxu0 0
    %474 = vmatmul.mubr.bf16.gmra.mrb[0].mxu0 %v317
    %v475 = vpop.f32.mrb[0].mxu0
    %v476 = vadd.f32 %v138, %v475
    %v477 = vpop.f32.mrb[0].mxu0
    %v478 = vpop.f32.mrb[0].mxu0
    %v479 = vadd.f32 %v138, %v478
    %v480 = vpop.f32.mrb[0].mxu0
    %481 = vmatprep.mubr.bf16.mxu0 0
    %482 = vmatmul.mubr.bf16.gmra.mrb[0].mxu0 %v320
    %v483 = vpop.f32.mrb[0].mxu0
    %v484 = vadd.f32 %v138, %v483
    %v485 = vpop.f32.mrb[0].mxu0
    %v486 = vpop.f32.mrb[0].mxu0
    %v487 = vadd.f32 %v138, %v486
    %v488 = vpop.f32.mrb[0].mxu0
    %489 = vmatprep.mubr.bf16.mxu0 0
    %490 = vmatmul.mubr.bf16.gmra.mrb[0].mxu0 %v323
    %v491 = vpop.f32.mrb[0].mxu0
    %v492 = vadd.f32 %v138, %v491
    %v493 = vpop.f32.mrb[0].mxu0
    %v494 = vpop.f32.mrb[0].mxu0
    %v495 = vadd.f32 %v138, %v494
    %v496 = vpop.f32.mrb[0].mxu0
    %497 = vmatprep.mubr.bf16.mxu0 0
    %498 = vmatmul.mubr.bf16.gmra.mrb[0].mxu0 %v326
    %v499 = vpop.f32.mrb[0].mxu0
    %v500 = vadd.f32 %v138, %v499
    %v501 = vpop.f32.mrb[0].mxu0
    %v502 = vpop.f32.mrb[0].mxu0
    %v503 = vadd.f32 %v138, %v502
    %v504 = vpop.f32.mrb[0].mxu0
    %505 = vmatprep.mubr.bf16.mxu0 0
    %506 = vmatmul.mubr.bf16.gmra.mrb[0].mxu0 %v329
    %v507 = vpop.f32.mrb[0].mxu0
    %v508 = vadd.f32 %v138, %v507
    %v509 = vpop.f32.mrb[0].mxu0
    %v510 = vpop.f32.mrb[0].mxu0
    %v511 = vadd.f32 %v138, %v510
    %v512 = vpop.f32.mrb[0].mxu0
    %513 = vmatprep.mubr.bf16.mxu0 0
    %514 = vmatmul.mubr.bf16.gmra.mrb[0].mxu0 %v332
    %v515 = vpop.f32.mrb[0].mxu0
    %v516 = vadd.f32 %v138, %v515
    %v517 = vpop.f32.mrb[0].mxu0
    %v518 = vpop.f32.mrb[0].mxu0
    %v519 = vadd.f32 %v138, %v518
    %v520 = vpop.f32.mrb[0].mxu0
    %521 = vmatprep.mubr.bf16.mxu0 0
    %522 = vmatmul.mubr.bf16.gmra.mrb[0].mxu0 %v335
    %v523 = vpop.f32.mrb[0].mxu0
    %v524 = vadd.f32 %v138, %v523
    %v525 = vpop.f32.mrb[0].mxu0
    %v526 = vpop.f32.mrb[0].mxu0
    %v527 = vadd.f32 %v138, %v526
    %v528 = vpop.f32.mrb[0].mxu0
    %529 = vmatprep.mubr.bf16.mxu0 0
    %530 = vmatmul.mubr.bf16.gmra.mrb[0].mxu0 %v338
    %v531 = vpop.f32.mrb[0].mxu0
    %v532 = vadd.f32 %v138, %v531
    %v533 = vpop.f32.mrb[0].mxu0
    %v534 = vpop.f32.mrb[0].mxu0
    %v535 = vadd.f32 %v138, %v534
    %v536 = vpop.f32.mrb[0].mxu0
    %537 = vmatprep.mubr.bf16.mxu0 0
    %538 = vmatmul.mubr.bf16.gmra.mrb[0].mxu0 %v341
    %v539 = vpop.f32.mrb[0].mxu0
    %v540 = vadd.f32 %v138, %v539
    %v541 = vpop.f32.mrb[0].mxu0
    %v542 = vpop.f32.mrb[0].mxu0
    %v543 = vadd.f32 %v138, %v542
    %v544 = vpop.f32.mrb[0].mxu0
    %545 = vmatprep.mubr.bf16.mxu0 0
    %546 = vmatmul.mubr.bf16.gmra.mrb[0].mxu0 %v344
    %v547 = vpop.f32.mrb[0].mxu0
    %v548 = vadd.f32 %v138, %v547
    %v549 = vpop.f32.mrb[0].mxu0
    %v550 = vpop.f32.mrb[0].mxu0
    %v551 = vadd.f32 %v138, %v550
    %v552 = vpop.f32.mrb[0].mxu0
    %553 = vmatprep.mubr.bf16.mxu0 0
    %554 = vmatmul.mubr.bf16.gmra.mrb[0].mxu0 %v347
    %v555 = vpop.f32.mrb[0].mxu0
    %v556 = vadd.f32 %v138, %v555
    %v557 = vpop.f32.mrb[0].mxu0
    %v558 = vpop.f32.mrb[0].mxu0
    %v559 = vadd.f32 %v138, %v558
    %v560 = vpop.f32.mrb[0].mxu0
    %561 = vmatprep.mubr.bf16.mxu0 0
    %562 = vmatmul.mubr.bf16.gmra.mrb[0].mxu0 %v350
    %v563 = vpop.f32.mrb[0].mxu0
    %v564 = vadd.f32 %v138, %v563
    %v565 = vpop.f32.mrb[0].mxu0
    %v566 = vpop.f32.mrb[0].mxu0
    %v567 = vadd.f32 %v138, %v566
    %v568 = vpop.f32.mrb[0].mxu0
    %569 = vmatprep.mubr.bf16.mxu0 0
    %570 = vmatmul.mubr.bf16.gmra.mrb[0].mxu0 %v353
    %v571 = vpop.f32.mrb[0].mxu0
    %v572 = vadd.f32 %v138, %v571
    %v573 = vpop.f32.mrb[0].mxu0
    %v574 = vpop.f32.mrb[0].mxu0
    %v575 = vadd.f32 %v138, %v574
    %v576 = vpop.f32.mrb[0].mxu0
    %577 = vmatprep.mubr.bf16.mxu0 0
    %578 = vmatmul.mubr.bf16.gmra.mrb[0].mxu0 %v356
    %v579 = vpop.f32.mrb[0].mxu0
    %v580 = vadd.f32 %v138, %v579
    %v581 = vpop.f32.mrb[0].mxu0
    %v582 = vpop.f32.mrb[0].mxu0
    %v583 = vadd.f32 %v138, %v582
    %v584 = vpop.f32.mrb[0].mxu0
    %585 = vmatprep.mubr.bf16.mxu0 0
    %586 = vmatmul.mubr.bf16.gmra.mrb[0].mxu0 %v359
    %v587 = vpop.f32.mrb[0].mxu0
    %v588 = vadd.f32 %v138, %v587
    %v589 = vpop.f32.mrb[0].mxu0
    %v590 = vpop.f32.mrb[0].mxu0
    %v591 = vadd.f32 %v138, %v590
    %v592 = vpop.f32.mrb[0].mxu0
    %593 = vmatprep.mubr.bf16.mxu0 0
    %594 = vmatmul.mubr.bf16.gmra.mrb[0].mxu0 %v362
    %v595 = vpop.f32.mrb[0].mxu0
    %v596 = vadd.f32 %v138, %v595
    %v597 = vpop.f32.mrb[0].mxu0
    %v598 = vpop.f32.mrb[0].mxu0
    %v599 = vadd.f32 %v138, %v598
    %v600 = vpop.f32.mrb[0].mxu0
    %601 = vmatprep.mubr.bf16.mxu0 0
    %602 = vmatmul.mubr.bf16.gmra.mrb[0].mxu0 %v365
    %v603 = vpop.f32.mrb[0].mxu0
    %v604 = vadd.f32 %v138, %v603
    %v605 = vpop.f32.mrb[0].mxu0
    %v606 = vpop.f32.mrb[0].mxu0
    %v607 = vadd.f32 %v138, %v606
    %v608 = vpop.f32.mrb[0].mxu0
    %609 = vmatprep.mubr.bf16.mxu0 0
    %610 = vmatmul.mubr.bf16.gmra.mrb[0].mxu0 %v368
    %v611 = vpop.f32.mrb[0].mxu0
    %v612 = vadd.f32 %v138, %v611
    %v613 = vpop.f32.mrb[0].mxu0
    %v614 = vpop.f32.mrb[0].mxu0
    %v615 = vadd.f32 %v138, %v614
    %v616 = vpop.f32.mrb[0].mxu0
    %617 = vmatprep.mubr.bf16.mxu0 0
    %618 = vmatmul.mubr.bf16.gmra.mrb[0].mxu0 %v371
    %v619 = vpop.f32.mrb[0].mxu0
    %v620 = vadd.f32 %v138, %v619
    %v621 = vpop.f32.mrb[0].mxu0
    %v622 = vpop.f32.mrb[0].mxu0
    %v623 = vadd.f32 %v138, %v622
    %v624 = vpop.f32.mrb[0].mxu0
    %625 = vmatprep.mubr.bf16.mxu0 0
    %626 = vmatmul.mubr.bf16.gmra.mrb[0].mxu0 %v374
    %v627 = vpop.f32.mrb[0].mxu0
    %v628 = vadd.f32 %v138, %v627
    %v629 = vpop.f32.mrb[0].mxu0
    %v630 = vpop.f32.mrb[0].mxu0
    %v631 = vadd.f32 %v138, %v630
    %v632 = vpop.f32.mrb[0].mxu0
    %633 = vmatprep.mubr.bf16.mxu0 0
    %634 = vmatmul.mubr.bf16.gmra.mrb[0].mxu0 %v377
    %v635 = vpop.f32.mrb[0].mxu0
    %v636 = vadd.f32 %v138, %v635
    %v637 = vpop.f32.mrb[0].mxu0
    %v638 = vpop.f32.mrb[0].mxu0
    %v639 = vadd.f32 %v138, %v638
    %v640 = vpop.f32.mrb[0].mxu0
    %641 = vmatprep.mubr.bf16.mxu0 0
    %642 = vmatmul.mubr.bf16.gmra.mrb[0].mxu0 %v380
    %v643 = vpop.f32.mrb[0].mxu0
    %v644 = vadd.f32 %v138, %v643
    %v645 = vpop.f32.mrb[0].mxu0
    %v646 = vpop.f32.mrb[0].mxu0
    %v647 = vadd.f32 %v138, %v646
    %v648 = vpop.f32.mrb[0].mxu0
    %649 = vmatprep.mubr.bf16.mxu0 0
    %650 = vmatmul.mubr.bf16.gmra.mrb[0].mxu0 %v383
    %v651 = vpop.f32.mrb[0].mxu0
    %v652 = vadd.f32 %v138, %v651
    %v653 = vpop.f32.mrb[0].mxu0
    %v654 = vpop.f32.mrb[0].mxu0
    %v655 = vadd.f32 %v138, %v654
    %v656 = vpop.f32.mrb[0].mxu0
    %657 = vmatprep.mubr.bf16.mxu0 0
    %658 = vmatmul.mubr.bf16.gmra.mrb[0].mxu0 %v386
    %v659 = vpop.f32.mrb[0].mxu0
    %v660 = vadd.f32 %v138, %v659
    %v661 = vpop.f32.mrb[0].mxu0
    %v662 = vpop.f32.mrb[0].mxu0
    %v663 = vadd.f32 %v138, %v662
    %v664 = vpop.f32.mrb[0].mxu0
    %665 = vmatprep.mubr.bf16.mxu0 0
    %666 = vmatmul.mubr.bf16.gmra.mrb[0].mxu0 %v389
    %v667 = vpop.f32.mrb[0].mxu0
    %v668 = vadd.f32 %v138, %v667
    %v669 = vpop.f32.mrb[0].mxu0
    %v670 = vpop.f32.mrb[0].mxu0
    %v671 = vadd.f32 %v138, %v670
    %v672 = vpop.f32.mrb[0].mxu0
    %673 = vmatprep.mubr.bf16.mxu0 0
    %674 = vmatmul.mubr.bf16.gmra.mrb[0].mxu0 %v392
    %v675 = vpop.f32.mrb[0].mxu0
    %v676 = vadd.f32 %v138, %v675
    %v677 = vpop.f32.mrb[0].mxu0
    %v678 = vpop.f32.mrb[0].mxu0
    %v679 = vadd.f32 %v138, %v678
    %v680 = vpop.f32.mrb[0].mxu0
    %681 = vmatprep.mubr.bf16.mxu0 0
    %682 = vmatmul.mubr.bf16.gmra.mrb[0].mxu0 %v395
    %v683 = vpop.f32.mrb[0].mxu0
    %v684 = vadd.f32 %v138, %v683
    %v685 = vpop.f32.mrb[0].mxu0
    %v686 = vpop.f32.mrb[0].mxu0
    %v687 = vadd.f32 %v138, %v686
    %v688 = vpop.f32.mrb[0].mxu0
    %689 = vdwg.mxu0
    %vm690 = vcmp.ge.f32.partialorder %v436, 0.0
    %vm691 = vcmp.ge.f32.partialorder %v439, 0.0
    %vm692 = vcmp.ge.f32.partialorder %v444, 0.0
    %vm693 = vcmp.ge.f32.partialorder %v447, 0.0
    %vm694 = vcmp.ge.f32.partialorder %v452, 0.0
    %vm695 = vcmp.ge.f32.partialorder %v455, 0.0
    %vm696 = vcmp.ge.f32.partialorder %v460, 0.0
    %vm697 = vcmp.ge.f32.partialorder %v463, 0.0
    %vm698 = vcmp.ge.f32.partialorder %v468, 0.0
    %vm699 = vcmp.ge.f32.partialorder %v471, 0.0
    %vm700 = vcmp.ge.f32.partialorder %v476, 0.0
    %vm701 = vcmp.ge.f32.partialorder %v479, 0.0
    %vm702 = vcmp.ge.f32.partialorder %v484, 0.0
    %vm703 = vcmp.ge.f32.partialorder %v487, 0.0
    %vm704 = vcmp.ge.f32.partialorder %v492, 0.0
    %vm705 = vcmp.ge.f32.partialorder %v495, 0.0
    %vm706 = vcmp.ge.f32.partialorder %v500, 0.0
    %vm707 = vcmp.ge.f32.partialorder %v503, 0.0
    %vm708 = vcmp.ge.f32.partialorder %v508, 0.0
    %vm709 = vcmp.ge.f32.partialorder %v511, 0.0
    %vm710 = vcmp.ge.f32.partialorder %v516, 0.0
    %vm711 = vcmp.ge.f32.partialorder %v519, 0.0
    %vm712 = vcmp.ge.f32.partialorder %v524, 0.0
    %vm713 = vcmp.ge.f32.partialorder %v527, 0.0
    %vm714 = vcmp.ge.f32.partialorder %v532, 0.0
    %vm715 = vcmp.ge.f32.partialorder %v535, 0.0
    %vm716 = vcmp.ge.f32.partialorder %v540, 0.0
    %vm717 = vcmp.ge.f32.partialorder %v543, 0.0
    %vm718 = vcmp.ge.f32.partialorder %v548, 0.0
    %vm719 = vcmp.ge.f32.partialorder %v551, 0.0
    %vm720 = vcmp.ge.f32.partialorder %v556, 0.0
    %vm721 = vcmp.ge.f32.partialorder %v559, 0.0
    %vm722 = vcmp.ge.f32.partialorder %v564, 0.0
    %vm723 = vcmp.ge.f32.partialorder %v567, 0.0
    %vm724 = vcmp.ge.f32.partialorder %v572, 0.0
    %vm725 = vcmp.ge.f32.partialorder %v575, 0.0
    %vm726 = vcmp.ge.f32.partialorder %v580, 0.0
    %vm727 = vcmp.ge.f32.partialorder %v583, 0.0
    %vm728 = vcmp.ge.f32.partialorder %v588, 0.0
    %vm729 = vcmp.ge.f32.partialorder %v591, 0.0
    %vm730 = vcmp.ge.f32.partialorder %v596, 0.0
    %vm731 = vcmp.ge.f32.partialorder %v599, 0.0
    %vm732 = vcmp.ge.f32.partialorder %v604, 0.0
    %vm733 = vcmp.ge.f32.partialorder %v607, 0.0
    %vm734 = vcmp.ge.f32.partialorder %v612, 0.0
    %vm735 = vcmp.ge.f32.partialorder %v615, 0.0
    %vm736 = vcmp.ge.f32.partialorder %v620, 0.0
    %vm737 = vcmp.ge.f32.partialorder %v623, 0.0
    %vm738 = vcmp.ge.f32.partialorder %v628, 0.0
    %vm739 = vcmp.ge.f32.partialorder %v631, 0.0
    %vm740 = vcmp.ge.f32.partialorder %v636, 0.0
    %vm741 = vcmp.ge.f32.partialorder %v639, 0.0
    %vm742 = vcmp.ge.f32.partialorder %v644, 0.0
    %vm743 = vcmp.ge.f32.partialorder %v647, 0.0
    %vm744 = vcmp.ge.f32.partialorder %v652, 0.0
    %vm745 = vcmp.ge.f32.partialorder %v655, 0.0
    %vm746 = vcmp.ge.f32.partialorder %v660, 0.0
    %vm747 = vcmp.ge.f32.partialorder %v663, 0.0
    %vm748 = vcmp.ge.f32.partialorder %v668, 0.0
    %vm749 = vcmp.ge.f32.partialorder %v671, 0.0
    %vm750 = vcmp.ge.f32.partialorder %v676, 0.0
    %vm751 = vcmp.ge.f32.partialorder %v679, 0.0
    %vm752 = vcmp.ge.f32.partialorder %v684, 0.0
    %vm753 = vcmp.ge.f32.partialorder %v687, 0.0
    %v754 = vld [vmem:[#allocation8] sm:$0x1]
    %v756 = vlaneseq
    %v757 = vshrl.u32 %v756, 7
    %v758 = vsub.s32 0, %v757
    %v759 = vrot.slane %v754, %v758
    %v761 = vmul.f32 %v759, %v436
    %v762 = vmul.f32 %v759, %v439
    %v763 = vmul.f32 %v759, %v444
    %v764 = vmul.f32 %v759, %v447
    %v765 = vmul.f32 %v759, %v452
    %v766 = vmul.f32 %v759, %v455
    %v767 = vmul.f32 %v759, %v460
    %v768 = vmul.f32 %v759, %v463
    %v769 = vmul.f32 %v759, %v468
    %v770 = vmul.f32 %v759, %v471
    %v771 = vmul.f32 %v759, %v476
    %v772 = vmul.f32 %v759, %v479
    %v773 = vmul.f32 %v759, %v484
    %v774 = vmul.f32 %v759, %v487
    %v775 = vmul.f32 %v759, %v492
    %v776 = vmul.f32 %v759, %v495
    %v777 = vmul.f32 %v759, %v500
    %v778 = vmul.f32 %v759, %v503
    %v779 = vmul.f32 %v759, %v508
    %v780 = vmul.f32 %v759, %v511
    %v781 = vmul.f32 %v759, %v516
    %v782 = vmul.f32 %v759, %v519
    %v783 = vmul.f32 %v759, %v524
    %v784 = vmul.f32 %v759, %v527
    %v785 = vmul.f32 %v759, %v532
    %v786 = vmul.f32 %v759, %v535
    %v787 = vmul.f32 %v759, %v540
    %v788 = vmul.f32 %v759, %v543
    %v789 = vmul.f32 %v759, %v548
    %v790 = vmul.f32 %v759, %v551
    %v791 = vmul.f32 %v759, %v556
    %v792 = vmul.f32 %v759, %v559
    %v793 = vmul.f32 %v759, %v564
    %v794 = vmul.f32 %v759, %v567
    %v795 = vmul.f32 %v759, %v572
    %v796 = vmul.f32 %v759, %v575
    %v797 = vmul.f32 %v759, %v580
    %v798 = vmul.f32 %v759, %v583
    %v799 = vmul.f32 %v759, %v588
    %v800 = vmul.f32 %v759, %v591
    %v801 = vmul.f32 %v759, %v596
    %v802 = vmul.f32 %v759, %v599
    %v803 = vmul.f32 %v759, %v604
    %v804 = vmul.f32 %v759, %v607
    %v805 = vmul.f32 %v759, %v612
    %v806 = vmul.f32 %v759, %v615
    %v807 = vmul.f32 %v759, %v620
    %v808 = vmul.f32 %v759, %v623
    %v809 = vmul.f32 %v759, %v628
    %v810 = vmul.f32 %v759, %v631
    %v811 = vmul.f32 %v759, %v636
    %v812 = vmul.f32 %v759, %v639
    %v813 = vmul.f32 %v759, %v644
    %v814 = vmul.f32 %v759, %v647
    %v815 = vmul.f32 %v759, %v652
    %v816 = vmul.f32 %v759, %v655
    %v817 = vmul.f32 %v759, %v660
    %v818 = vmul.f32 %v759, %v663
    %v819 = vmul.f32 %v759, %v668
    %v820 = vmul.f32 %v759, %v671
    %v821 = vmul.f32 %v759, %v676
    %v822 = vmul.f32 %v759, %v679
    %v823 = vmul.f32 %v759, %v684
    %v824 = vmul.f32 %v759, %v687
    %v825 = vsel %vm690, %v436, %v761
    %v826 = vsel %vm691, %v439, %v762
    %v827 = vsel %vm692, %v444, %v763
    %v828 = vsel %vm693, %v447, %v764
    %v829 = vsel %vm694, %v452, %v765
    %v830 = vsel %vm695, %v455, %v766
    %v831 = vsel %vm696, %v460, %v767
    %v832 = vsel %vm697, %v463, %v768
    %v833 = vsel %vm698, %v468, %v769
    %v834 = vsel %vm699, %v471, %v770
    %v835 = vsel %vm700, %v476, %v771
    %v836 = vsel %vm701, %v479, %v772
    %v837 = vsel %vm702, %v484, %v773
    %v838 = vsel %vm703, %v487, %v774
    %v839 = vsel %vm704, %v492, %v775
    %v840 = vsel %vm705, %v495, %v776
    %v841 = vsel %vm706, %v500, %v777
    %v842 = vsel %vm707, %v503, %v778
    %v843 = vsel %vm708, %v508, %v779
    %v844 = vsel %vm709, %v511, %v780
    %v845 = vsel %vm710, %v516, %v781
    %v846 = vsel %vm711, %v519, %v782
    %v847 = vsel %vm712, %v524, %v783
    %v848 = vsel %vm713, %v527, %v784
    %v849 = vsel %vm714, %v532, %v785
    %v850 = vsel %vm715, %v535, %v786
    %v851 = vsel %vm716, %v540, %v787
    %v852 = vsel %vm717, %v543, %v788
    %v853 = vsel %vm718, %v548, %v789
    %v854 = vsel %vm719, %v551, %v790
    %v855 = vsel %vm720, %v556, %v791
    %v856 = vsel %vm721, %v559, %v792
    %v857 = vsel %vm722, %v564, %v793
    %v858 = vsel %vm723, %v567, %v794
    %v859 = vsel %vm724, %v572, %v795
    %v860 = vsel %vm725, %v575, %v796
    %v861 = vsel %vm726, %v580, %v797
    %v862 = vsel %vm727, %v583, %v798
    %v863 = vsel %vm728, %v588, %v799
    %v864 = vsel %vm729, %v591, %v800
    %v865 = vsel %vm730, %v596, %v801
    %v866 = vsel %vm731, %v599, %v802
    %v867 = vsel %vm732, %v604, %v803
    %v868 = vsel %vm733, %v607, %v804
    %v869 = vsel %vm734, %v612, %v805
    %v870 = vsel %vm735, %v615, %v806
    %v871 = vsel %vm736, %v620, %v807
    %v872 = vsel %vm737, %v623, %v808
    %v873 = vsel %vm738, %v628, %v809
    %v874 = vsel %vm739, %v631, %v810
    %v875 = vsel %vm740, %v636, %v811
    %v876 = vsel %vm741, %v639, %v812
    %v877 = vsel %vm742, %v644, %v813
    %v878 = vsel %vm743, %v647, %v814
    %v879 = vsel %vm744, %v652, %v815
    %v880 = vsel %vm745, %v655, %v816
    %v881 = vsel %vm746, %v660, %v817
    %v882 = vsel %vm747, %v663, %v818
    %v883 = vsel %vm748, %v668, %v819
    %v884 = vsel %vm749, %v671, %v820
    %v885 = vsel %vm750, %v676, %v821
    %v886 = vsel %vm751, %v679, %v822
    %v887 = vsel %vm752, %v684, %v823
    %v888 = vsel %vm753, %v687, %v824
    %vm889 = vcmask 97280
    %890 = vst.msk [vmem:[#allocation10] sm:$0xff] %vm889, %v825
    %891 = vst.msk [vmem:[#allocation10 + $0x8] sm:$0xff] %vm889, %v826
    %892 = vst.msk [vmem:[#allocation10 + $0x10] sm:$0xff] %vm889, %v827
    %893 = vst.msk [vmem:[#allocation10 + $0x18] sm:$0xff] %vm889, %v828
    %894 = vst.msk [vmem:[#allocation10 + $0x20] sm:$0xff] %vm889, %v829
    %895 = vst.msk [vmem:[#allocation10 + $0x28] sm:$0xff] %vm889, %v830
    %896 = vst.msk [vmem:[#allocation10 + $0x30] sm:$0xff] %vm889, %v831
    %897 = vst.msk [vmem:[#allocation10 + $0x38] sm:$0xff] %vm889, %v832
    %898 = vst.msk [vmem:[#allocation10 + $0x40] sm:$0xff] %vm889, %v833
    %899 = vst.msk [vmem:[#allocation10 + $0x48] sm:$0xff] %vm889, %v834
    %900 = vst.msk [vmem:[#allocation10 + $0x50] sm:$0xff] %vm889, %v835
    %901 = vst.msk [vmem:[#allocation10 + $0x58] sm:$0xff] %vm889, %v836
    %902 = vst.msk [vmem:[#allocation10 + $0x60] sm:$0xff] %vm889, %v837
    %903 = vst.msk [vmem:[#allocation10 + $0x68] sm:$0xff] %vm889, %v838
    %904 = vst.msk [vmem:[#allocation10 + $0x70] sm:$0xff] %vm889, %v839
    %905 = vst.msk [vmem:[#allocation10 + $0x78] sm:$0xff] %vm889, %v840
    %906 = vst.msk [vmem:[#allocation10 + $0x80] sm:$0xff] %vm889, %v841
    %907 = vst.msk [vmem:[#allocation10 + $0x88] sm:$0xff] %vm889, %v842
    %908 = vst.msk [vmem:[#allocation10 + $0x90] sm:$0xff] %vm889, %v843
    %909 = vst.msk [vmem:[#allocation10 + $0x98] sm:$0xff] %vm889, %v844
    %910 = vst.msk [vmem:[#allocation10 + $0xa0] sm:$0xff] %vm889, %v845
    %911 = vst.msk [vmem:[#allocation10 + $0xa8] sm:$0xff] %vm889, %v846
    %912 = vst.msk [vmem:[#allocation10 + $0xb0] sm:$0xff] %vm889, %v847
    %913 = vst.msk [vmem:[#allocation10 + $0xb8] sm:$0xff] %vm889, %v848
    %914 = vst.msk [vmem:[#allocation10 + $0xc0] sm:$0xff] %vm889, %v849
    %915 = vst.msk [vmem:[#allocation10 + $0xc8] sm:$0xff] %vm889, %v850
    %916 = vst.msk [vmem:[#allocation10 + $0xd0] sm:$0xff] %vm889, %v851
    %917 = vst.msk [vmem:[#allocation10 + $0xd8] sm:$0xff] %vm889, %v852
    %918 = vst.msk [vmem:[#allocation10 + $0xe0] sm:$0xff] %vm889, %v853
    %919 = vst.msk [vmem:[#allocation10 + $0xe8] sm:$0xff] %vm889, %v854
    %920 = vst.msk [vmem:[#allocation10 + $0xf0] sm:$0xff] %vm889, %v855
    %921 = vst.msk [vmem:[#allocation10 + $0xf8] sm:$0xff] %vm889, %v856
    %922 = vst.msk [vmem:[#allocation10 + $0x100] sm:$0xff] %vm889, %v857
    %923 = vst.msk [vmem:[#allocation10 + $0x108] sm:$0xff] %vm889, %v858
    %924 = vst.msk [vmem:[#allocation10 + $0x110] sm:$0xff] %vm889, %v859
    %925 = vst.msk [vmem:[#allocation10 + $0x118] sm:$0xff] %vm889, %v860
    %926 = vst.msk [vmem:[#allocation10 + $0x120] sm:$0xff] %vm889, %v861
    %927 = vst.msk [vmem:[#allocation10 + $0x128] sm:$0xff] %vm889, %v862
    %928 = vst.msk [vmem:[#allocation10 + $0x130] sm:$0xff] %vm889, %v863
    %929 = vst.msk [vmem:[#allocation10 + $0x138] sm:$0xff] %vm889, %v864
    %930 = vst.msk [vmem:[#allocation10 + $0x140] sm:$0xff] %vm889, %v865
    %931 = vst.msk [vmem:[#allocation10 + $0x148] sm:$0xff] %vm889, %v866
    %932 = vst.msk [vmem:[#allocation10 + $0x150] sm:$0xff] %vm889, %v867
    %933 = vst.msk [vmem:[#allocation10 + $0x158] sm:$0xff] %vm889, %v868
    %934 = vst.msk [vmem:[#allocation10 + $0x160] sm:$0xff] %vm889, %v869
    %935 = vst.msk [vmem:[#allocation10 + $0x168] sm:$0xff] %vm889, %v870
    %936 = vst.msk [vmem:[#allocation10 + $0x170] sm:$0xff] %vm889, %v871
    %937 = vst.msk [vmem:[#allocation10 + $0x178] sm:$0xff] %vm889, %v872
    %938 = vst.msk [vmem:[#allocation10 + $0x180] sm:$0xff] %vm889, %v873
    %939 = vst.msk [vmem:[#allocation10 + $0x188] sm:$0xff] %vm889, %v874
    %940 = vst.msk [vmem:[#allocation10 + $0x190] sm:$0xff] %vm889, %v875
    %941 = vst.msk [vmem:[#allocation10 + $0x198] sm:$0xff] %vm889, %v876
    %942 = vst.msk [vmem:[#allocation10 + $0x1a0] sm:$0xff] %vm889, %v877
    %943 = vst.msk [vmem:[#allocation10 + $0x1a8] sm:$0xff] %vm889, %v878
    %944 = vst.msk [vmem:[#allocation10 + $0x1b0] sm:$0xff] %vm889, %v879
    %945 = vst.msk [vmem:[#allocation10 + $0x1b8] sm:$0xff] %vm889, %v880
    %946 = vst.msk [vmem:[#allocation10 + $0x1c0] sm:$0xff] %vm889, %v881
    %947 = vst.msk [vmem:[#allocation10 + $0x1c8] sm:$0xff] %vm889, %v882
    %948 = vst.msk [vmem:[#allocation10 + $0x1d0] sm:$0xff] %vm889, %v883
    %949 = vst.msk [vmem:[#allocation10 + $0x1d8] sm:$0xff] %vm889, %v884
    %950 = vst.msk [vmem:[#allocation10 + $0x1e0] sm:$0xff] %vm889, %v885
    %951 = vst.msk [vmem:[#allocation10 + $0x1e8] sm:$0xff] %vm889, %v886
    %952 = vst.msk [vmem:[#allocation10 + $0x1f0] sm:$0xff] %vm889, %v887
    %953 = vst.msk [vmem:[#allocation10 + $0x1f8] sm:$0xff] %vm889, %v888
    // Predicated region
    $region34: #{cross_scale_attention_forward.3} parent=1 // pred_check
      _
    $region35: #{cross_scale_attention_forward.3} parent=1 // pred_check_branch
      %955 = sbr.rel (0) target = $region37
    $region36: #{cross_scale_attention_forward.3} parent=1 // pred_region
      %s957 = ssub.s32 8192, 8192
      %958 = vsyncadd [#allocation4], %s957
      %s959 = sshll.u32 [#allocation10], 4
      %s960 = int_to_ptr.vmem [resolvable:$true] %s959
      %965 = dma.vmem_to_hbm [thread:$0]  %s960, 8192, %s4, [#allocation4], 128, 128, 8
    $region37: #{cross_scale_attention_forward.3} parent=1 // pred_fallthru
      _
    // Predicated region
    $region38: #{cross_scale_attention_forward.3} parent=1 // pred_check
      _
    $region39: #{cross_scale_attention_forward.3} parent=1 // pred_check_branch
      %967 = sbr.rel (0) target = $region41
    $region40: #{cross_scale_attention_forward.3} parent=1 // pred_region
      %968 = dma.done [#allocation4], 8192
    $region41: #{cross_scale_attention_forward.3} parent=1 // pred_fallthru
      _
    %969 = vsyncpa [#allocation3], 1
    %970 = vsyncpa [#allocation6], 1
    %971 = vsyncpa [#allocation9], 1
    %972 = vsyncpa [#allocation4], 1

// kernel: cross_scale_attention_forward.4
$region0: #{cross_scale_attention_forward.4}
  #allocation0 [shape = 'u32[]', space=smem, size = 0x4, offset = 0x4, fixed_abs, tag = 'smem constant byte address 0x4 - core index']
  #allocation1 [shape = 'u32[144,128]{1,0:T(1,128)}', space=vmem, size = 0x12000, scoped, tag = 'internal scratch']
  %s0 = inlined_call_operand.hbm [shape: bf16[128,8], index: 0, kind: input, shape index: {}]
  %s1 = inlined_call_operand.hbm [shape: bf16[8,4], index: 1, kind: input, shape index: {}]
  %s2 = inlined_call_operand.hbm [shape: f32[1,4], index: 2, kind: input, shape index: {}]
  %s3 = inlined_call_operand.hbm [shape: f32[1,4], index: 3, kind: input, shape index: {}]
  %s4 = inlined_call_operand.hbm [shape: f32[128,4], index: 4, kind: output, shape index: {}]
  %s5 = sld [smem:[#allocation0]]
  $region42: #{cross_scale_attention_forward.4} parent=0
    _
  %s7 = ssub.s32 1, %s5
  %s8 = scalar_select 0, %s7, %s5
  $region1: #{cross_scale_attention_forward.4} parent=0
    #allocation2 [shape = 'u8[32768]{0}', space=vmem, size = 0x8000, scoped, tag = 'input window, operand 0, single buffered']
    #allocation3 [shape = 's32[1]{0}', space=sflag, size = 0x4, scoped, tag = 'scoped memory for cross_scale_attention_forward.4']
    #allocation4 [shape = 's32[1]{0}', space=sflag, size = 0x4, scoped, tag = 'scoped memory for cross_scale_attention_forward.4']
    #allocation5 [shape = 'u8[2048]{0}', space=vmem, size = 0x800, scoped, tag = 'input window, operand 1, single buffered']
    #allocation6 [shape = 's32[1]{0}', space=sflag, size = 0x4, scoped, tag = 'scoped memory for cross_scale_attention_forward.4']
    #allocation7 [shape = 'u8[512]{0}', space=vmem, size = 0x400, scoped, tag = 'input window, operand 2, single buffered']
    #allocation8 [shape = 'u8[512]{0}', space=vmem, size = 0x400, scoped, tag = 'input window, operand 3, single buffered']
    #allocation9 [shape = 's32[1]{0}', space=sflag, size = 0x4, scoped, tag = 'scoped memory for cross_scale_attention_forward.4']
    #allocation10 [shape = 'u8[65536]{0}', space=vmem, size = 0x10000, scoped, tag = 'output window, operand 0, single buffered']
    %9 = vsyncpa [#allocation3], 0
    %10 = vsyncpa [#allocation6], 0
    %11 = vsyncpa [#allocation9], 0
    %12 = vsyncpa [#allocation4], 0
    // Predicated region
    $region2: #{cross_scale_attention_forward.4} parent=1 // pred_check
      _
    $region3: #{cross_scale_attention_forward.4} parent=1 // pred_check_branch
      %14 = sbr.rel (0) target = $region5
    $region4: #{cross_scale_attention_forward.4} parent=1 // pred_region
      %s16 = ssub.s32 1024, 1024
      %17 = vsyncadd [#allocation3], %s16
      %s18 = sshll.u32 [#allocation2], 4
      %s19 = int_to_ptr.vmem [resolvable:$true] %s18
      %24 = dma.hbm_to_vmem [thread:$0]  %s0, 1024, %s19, [#allocation3], 64, 64, 4
    $region5: #{cross_scale_attention_forward.4} parent=1 // pred_fallthru
      _
    // Predicated region
    $region6: #{cross_scale_attention_forward.4} parent=1 // pred_check
      _
    $region7: #{cross_scale_attention_forward.4} parent=1 // pred_check_branch
      %26 = sbr.rel (0) target = $region9
    $region8: #{cross_scale_attention_forward.4} parent=1 // pred_region
      %s28 = ssub.s32 64, 64
      %29 = vsyncadd [#allocation6], %s28
      %s31 = sshll.u32 [#allocation5], 4
      %s32 = int_to_ptr.vmem [resolvable:$true] %s31
      %34 = dma.hbm_to_vmem [thread:$0]  %s1, 64, %s32, [#allocation6]
    $region9: #{cross_scale_attention_forward.4} parent=1 // pred_fallthru
      _
    // Predicated region
    $region10: #{cross_scale_attention_forward.4} parent=1 // pred_check
      _
    $region11: #{cross_scale_attention_forward.4} parent=1 // pred_check_branch
      %36 = sbr.rel (0) target = $region13
    $region12: #{cross_scale_attention_forward.4} parent=1 // pred_region
      %s38 = ssub.s32 16, 16
      %39 = vsyncadd [#allocation6], %s38
      %s41 = sshll.u32 [#allocation7], 4
      %s42 = int_to_ptr.vmem [resolvable:$true] %s41
      %44 = dma.hbm_to_vmem [thread:$0]  %s2, 16, %s42, [#allocation6]
    $region13: #{cross_scale_attention_forward.4} parent=1 // pred_fallthru
      _
    // Predicated region
    $region14: #{cross_scale_attention_forward.4} parent=1 // pred_check
      _
    $region15: #{cross_scale_attention_forward.4} parent=1 // pred_check_branch
      %46 = sbr.rel (0) target = $region17
    $region16: #{cross_scale_attention_forward.4} parent=1 // pred_region
      %s48 = ssub.s32 16, 16
      %49 = vsyncadd [#allocation9], %s48
      %s51 = sshll.u32 [#allocation8], 4
      %s52 = int_to_ptr.vmem [resolvable:$true] %s51
      %54 = dma.hbm_to_vmem [thread:$0]  %s3, 16, %s52, [#allocation9]
    $region17: #{cross_scale_attention_forward.4} parent=1 // pred_fallthru
      _
    // Predicated region
    $region18: #{cross_scale_attention_forward.4} parent=1 // pred_check
      _
    $region19: #{cross_scale_attention_forward.4} parent=1 // pred_check_branch
      %56 = sbr.rel (0) target = $region21
    $region20: #{cross_scale_attention_forward.4} parent=1 // pred_region
      %57 = dma.done [#allocation3], 1024
    $region21: #{cross_scale_attention_forward.4} parent=1 // pred_fallthru
      _
    // Predicated region
    $region22: #{cross_scale_attention_forward.4} parent=1 // pred_check
      _
    $region23: #{cross_scale_attention_forward.4} parent=1 // pred_check_branch
      %59 = sbr.rel (0) target = $region25
    $region24: #{cross_scale_attention_forward.4} parent=1 // pred_region
      %60 = dma.done [#allocation6], 64
    $region25: #{cross_scale_attention_forward.4} parent=1 // pred_fallthru
      _
    // Predicated region
    $region26: #{cross_scale_attention_forward.4} parent=1 // pred_check
      _
    $region27: #{cross_scale_attention_forward.4} parent=1 // pred_check_branch
      %62 = sbr.rel (0) target = $region29
    $region28: #{cross_scale_attention_forward.4} parent=1 // pred_region
      %63 = dma.done [#allocation6], 16
    $region29: #{cross_scale_attention_forward.4} parent=1 // pred_fallthru
      _
    // Predicated region
    $region30: #{cross_scale_attention_forward.4} parent=1 // pred_check
      _
    $region31: #{cross_scale_attention_forward.4} parent=1 // pred_check_branch
      %65 = sbr.rel (0) target = $region33
    $region32: #{cross_scale_attention_forward.4} parent=1 // pred_region
      %66 = dma.done [#allocation9], 16
    $region33: #{cross_scale_attention_forward.4} parent=1 // pred_fallthru
      _
    %v68 = vld [vmem:[#allocation2] sm:$0xf]
    %v69 = vld [vmem:[#allocation2 + $0x4] sm:$0xf]
    %v70 = vld [vmem:[#allocation2 + $0x8] sm:$0xf]
    %v71 = vld [vmem:[#allocation2 + $0xc] sm:$0xf]
    %v72 = vld [vmem:[#allocation2 + $0x10] sm:$0xf]
    %v73 = vld [vmem:[#allocation2 + $0x14] sm:$0xf]
    %v74 = vld [vmem:[#allocation2 + $0x18] sm:$0xf]
    %v75 = vld [vmem:[#allocation2 + $0x1c] sm:$0xf]
    %v76 = vld [vmem:[#allocation2 + $0x20] sm:$0xf]
    %v77 = vld [vmem:[#allocation2 + $0x24] sm:$0xf]
    %v78 = vld [vmem:[#allocation2 + $0x28] sm:$0xf]
    %v79 = vld [vmem:[#allocation2 + $0x2c] sm:$0xf]
    %v80 = vld [vmem:[#allocation2 + $0x30] sm:$0xf]
    %v81 = vld [vmem:[#allocation2 + $0x34] sm:$0xf]
    %v82 = vld [vmem:[#allocation2 + $0x38] sm:$0xf]
    %v83 = vld [vmem:[#allocation2 + $0x3c] sm:$0xf]
    %v84 = vld [vmem:[#allocation5] sm:$0xf]
    %v85 = vld [vmem:[#allocation7] sm:$0x1]
    %v87 = vlaneseq
    %v88 = vshrl.u32 %v87, 7
    %v89 = vsub.s32 0, %v88
    %v90 = vrot.slane %v85, %v89
    %v108 = vunpack.c.l.b16 %v68
    %v109 = vunpack.c.l.b16 %v69
    %v110 = vunpack.c.l.b16 %v70
    %v111 = vunpack.c.l.b16 %v71
    %v112 = vunpack.c.l.b16 %v72
    %v113 = vunpack.c.l.b16 %v73
    %v114 = vunpack.c.l.b16 %v74
    %v115 = vunpack.c.l.b16 %v75
    %v116 = vunpack.c.l.b16 %v76
    %v117 = vunpack.c.l.b16 %v77
    %v118 = vunpack.c.l.b16 %v78
    %v119 = vunpack.c.l.b16 %v79
    %v120 = vunpack.c.l.b16 %v80
    %v121 = vunpack.c.l.b16 %v81
    %v122 = vunpack.c.l.b16 %v82
    %v123 = vunpack.c.l.b16 %v83
    %v124 = vpack.c.b16 %v109, %v108
    %v125 = vpack.c.b16 %v111, %v110
    %v126 = vpack.c.b16 %v113, %v112
    %v127 = vpack.c.b16 %v115, %v114
    %v128 = vpack.c.b16 %v117, %v116
    %v129 = vpack.c.b16 %v119, %v118
    %v130 = vpack.c.b16 %v121, %v120
    %v131 = vpack.c.b16 %v123, %v122
    %vm132 = vcmask 64512
    %v134 = vsel %vm132, %v124, 0
    %v137 = vsel %vm132, %v125, 0
    %v140 = vsel %vm132, %v126, 0
    %v143 = vsel %vm132, %v127, 0
    %v146 = vsel %vm132, %v128, 0
    %v149 = vsel %vm132, %v129, 0
    %v152 = vsel %vm132, %v130, 0
    %v155 = vsel %vm132, %v131, 0
    %vm157 = vcmask 1043456
    %v159 = vsel %vm157, %v84, 0
    %161 = vmatprep.subr.bf16.mxu0 0
    %162 = vmatpush1.bf16.msra.mxu0 %v159
    %163 = vmatprep.subr.bf16.mxu0 0
    %164 = vmatpush1.bf16.msra.mxu0 0
    %165 = vmatprep.subr.bf16.mxu0 0
    %166 = vmatpush1.bf16.msra.mxu0 0
    %167 = vmatprep.subr.bf16.mxu0 0
    %168 = vmatpush1.bf16.msra.mxu0 0
    %169 = vmatprep.subr.bf16.mxu0 0
    %170 = vmatpush1.bf16.msra.mxu0 0
    %171 = vmatprep.subr.bf16.mxu0 0
    %172 = vmatpush1.bf16.msra.mxu0 0
    %173 = vmatprep.subr.bf16.mxu0 0
    %174 = vmatpush1.bf16.msra.mxu0 0
    %175 = vmatprep.subr.bf16.mxu0 0
    %176 = vmatpush1.bf16.msra.mxu0 0
    %177 = vmatprep.subr.bf16.mxu0 0
    %178 = vmatpush1.bf16.msra.mxu0 0
    %179 = vmatprep.subr.bf16.mxu0 0
    %180 = vmatpush1.bf16.msra.mxu0 0
    %181 = vmatprep.subr.bf16.mxu0 0
    %182 = vmatpush1.bf16.msra.mxu0 0
    %183 = vmatprep.subr.bf16.mxu0 0
    %184 = vmatpush1.bf16.msra.mxu0 0
    %185 = vmatprep.subr.bf16.mxu0 0
    %186 = vmatpush1.bf16.msra.mxu0 0
    %187 = vmatprep.subr.bf16.mxu0 0
    %188 = vmatpush1.bf16.msra.mxu0 0
    %189 = vmatprep.subr.bf16.mxu0 0
    %190 = vmatpush1.bf16.msra.mxu0 0
    %191 = vmatprep.subr.bf16.mxu0 0
    %192 = vmatpush1.bf16.msra.mxu0 0
    %193 = vmatprep.mubr.bf16.mxu0 0
    %194 = vmatmul.mubr.bf16.gmra.mrb[0].mxu0 %v134
    %v195 = vpop.f32.mrb[0].mxu0
    %v196 = vadd.f32 %v90, %v195
    %v197 = vpop.f32.mrb[0].mxu0
    %v198 = vpop.f32.mrb[0].mxu0
    %v199 = vadd.f32 %v90, %v198
    %v200 = vpop.f32.mrb[0].mxu0
    %201 = vmatprep.mubr.bf16.mxu0 0
    %202 = vmatmul.mubr.bf16.gmra.mrb[0].mxu0 %v137
    %v203 = vpop.f32.mrb[0].mxu0
    %v204 = vadd.f32 %v90, %v203
    %v205 = vpop.f32.mrb[0].mxu0
    %v206 = vpop.f32.mrb[0].mxu0
    %v207 = vadd.f32 %v90, %v206
    %v208 = vpop.f32.mrb[0].mxu0
    %209 = vmatprep.mubr.bf16.mxu0 0
    %210 = vmatmul.mubr.bf16.gmra.mrb[0].mxu0 %v140
    %v211 = vpop.f32.mrb[0].mxu0
    %v212 = vadd.f32 %v90, %v211
    %v213 = vpop.f32.mrb[0].mxu0
    %v214 = vpop.f32.mrb[0].mxu0
    %v215 = vadd.f32 %v90, %v214
    %v216 = vpop.f32.mrb[0].mxu0
    %217 = vmatprep.mubr.bf16.mxu0 0
    %218 = vmatmul.mubr.bf16.gmra.mrb[0].mxu0 %v143
    %v219 = vpop.f32.mrb[0].mxu0
    %v220 = vadd.f32 %v90, %v219
    %v221 = vpop.f32.mrb[0].mxu0
    %v222 = vpop.f32.mrb[0].mxu0
    %v223 = vadd.f32 %v90, %v222
    %v224 = vpop.f32.mrb[0].mxu0
    %225 = vmatprep.mubr.bf16.mxu0 0
    %226 = vmatmul.mubr.bf16.gmra.mrb[0].mxu0 %v146
    %v227 = vpop.f32.mrb[0].mxu0
    %v228 = vadd.f32 %v90, %v227
    %v229 = vpop.f32.mrb[0].mxu0
    %v230 = vpop.f32.mrb[0].mxu0
    %v231 = vadd.f32 %v90, %v230
    %v232 = vpop.f32.mrb[0].mxu0
    %233 = vmatprep.mubr.bf16.mxu0 0
    %234 = vmatmul.mubr.bf16.gmra.mrb[0].mxu0 %v149
    %v235 = vpop.f32.mrb[0].mxu0
    %v236 = vadd.f32 %v90, %v235
    %v237 = vpop.f32.mrb[0].mxu0
    %v238 = vpop.f32.mrb[0].mxu0
    %v239 = vadd.f32 %v90, %v238
    %v240 = vpop.f32.mrb[0].mxu0
    %241 = vmatprep.mubr.bf16.mxu0 0
    %242 = vmatmul.mubr.bf16.gmra.mrb[0].mxu0 %v152
    %v243 = vpop.f32.mrb[0].mxu0
    %v244 = vadd.f32 %v90, %v243
    %v245 = vpop.f32.mrb[0].mxu0
    %v246 = vpop.f32.mrb[0].mxu0
    %v247 = vadd.f32 %v90, %v246
    %v248 = vpop.f32.mrb[0].mxu0
    %249 = vmatprep.mubr.bf16.mxu0 0
    %250 = vmatmul.mubr.bf16.gmra.mrb[0].mxu0 %v155
    %v251 = vpop.f32.mrb[0].mxu0
    %v252 = vadd.f32 %v90, %v251
    %v253 = vpop.f32.mrb[0].mxu0
    %v254 = vpop.f32.mrb[0].mxu0
    %v255 = vadd.f32 %v90, %v254
    %v256 = vpop.f32.mrb[0].mxu0
    %257 = vdwg.mxu0
    %vm258 = vcmp.ge.f32.partialorder %v196, 0.0
    %vm259 = vcmp.ge.f32.partialorder %v199, 0.0
    %vm260 = vcmp.ge.f32.partialorder %v204, 0.0
    %vm261 = vcmp.ge.f32.partialorder %v207, 0.0
    %vm262 = vcmp.ge.f32.partialorder %v212, 0.0
    %vm263 = vcmp.ge.f32.partialorder %v215, 0.0
    %vm264 = vcmp.ge.f32.partialorder %v220, 0.0
    %vm265 = vcmp.ge.f32.partialorder %v223, 0.0
    %vm266 = vcmp.ge.f32.partialorder %v228, 0.0
    %vm267 = vcmp.ge.f32.partialorder %v231, 0.0
    %vm268 = vcmp.ge.f32.partialorder %v236, 0.0
    %vm269 = vcmp.ge.f32.partialorder %v239, 0.0
    %vm270 = vcmp.ge.f32.partialorder %v244, 0.0
    %vm271 = vcmp.ge.f32.partialorder %v247, 0.0
    %vm272 = vcmp.ge.f32.partialorder %v252, 0.0
    %vm273 = vcmp.ge.f32.partialorder %v255, 0.0
    %v274 = vld [vmem:[#allocation8] sm:$0x1]
    %v276 = vlaneseq
    %v277 = vshrl.u32 %v276, 7
    %v278 = vsub.s32 0, %v277
    %v279 = vrot.slane %v274, %v278
    %v281 = vmul.f32 %v279, %v196
    %v282 = vmul.f32 %v279, %v199
    %v283 = vmul.f32 %v279, %v204
    %v284 = vmul.f32 %v279, %v207
    %v285 = vmul.f32 %v279, %v212
    %v286 = vmul.f32 %v279, %v215
    %v287 = vmul.f32 %v279, %v220
    %v288 = vmul.f32 %v279, %v223
    %v289 = vmul.f32 %v279, %v228
    %v290 = vmul.f32 %v279, %v231
    %v291 = vmul.f32 %v279, %v236
    %v292 = vmul.f32 %v279, %v239
    %v293 = vmul.f32 %v279, %v244
    %v294 = vmul.f32 %v279, %v247
    %v295 = vmul.f32 %v279, %v252
    %v296 = vmul.f32 %v279, %v255
    %v297 = vsel %vm258, %v196, %v281
    %v298 = vsel %vm259, %v199, %v282
    %v299 = vsel %vm260, %v204, %v283
    %v300 = vsel %vm261, %v207, %v284
    %v301 = vsel %vm262, %v212, %v285
    %v302 = vsel %vm263, %v215, %v286
    %v303 = vsel %vm264, %v220, %v287
    %v304 = vsel %vm265, %v223, %v288
    %v305 = vsel %vm266, %v228, %v289
    %v306 = vsel %vm267, %v231, %v290
    %v307 = vsel %vm268, %v236, %v291
    %v308 = vsel %vm269, %v239, %v292
    %v309 = vsel %vm270, %v244, %v293
    %v310 = vsel %vm271, %v247, %v294
    %v311 = vsel %vm272, %v252, %v295
    %v312 = vsel %vm273, %v255, %v296
    %vm313 = vcmask 31744
    %314 = vst.msk [vmem:[#allocation10] sm:$0xff] %vm313, %v297
    %315 = vst.msk [vmem:[#allocation10 + $0x8] sm:$0xff] %vm313, %v298
    %316 = vst.msk [vmem:[#allocation10 + $0x10] sm:$0xff] %vm313, %v299
    %317 = vst.msk [vmem:[#allocation10 + $0x18] sm:$0xff] %vm313, %v300
    %318 = vst.msk [vmem:[#allocation10 + $0x20] sm:$0xff] %vm313, %v301
    %319 = vst.msk [vmem:[#allocation10 + $0x28] sm:$0xff] %vm313, %v302
    %320 = vst.msk [vmem:[#allocation10 + $0x30] sm:$0xff] %vm313, %v303
    %321 = vst.msk [vmem:[#allocation10 + $0x38] sm:$0xff] %vm313, %v304
    %322 = vst.msk [vmem:[#allocation10 + $0x40] sm:$0xff] %vm313, %v305
    %323 = vst.msk [vmem:[#allocation10 + $0x48] sm:$0xff] %vm313, %v306
    %324 = vst.msk [vmem:[#allocation10 + $0x50] sm:$0xff] %vm313, %v307
    %325 = vst.msk [vmem:[#allocation10 + $0x58] sm:$0xff] %vm313, %v308
    %326 = vst.msk [vmem:[#allocation10 + $0x60] sm:$0xff] %vm313, %v309
    %327 = vst.msk [vmem:[#allocation10 + $0x68] sm:$0xff] %vm313, %v310
    %328 = vst.msk [vmem:[#allocation10 + $0x70] sm:$0xff] %vm313, %v311
    %329 = vst.msk [vmem:[#allocation10 + $0x78] sm:$0xff] %vm313, %v312
    // Predicated region
    $region34: #{cross_scale_attention_forward.4} parent=1 // pred_check
      _
    $region35: #{cross_scale_attention_forward.4} parent=1 // pred_check_branch
      %331 = sbr.rel (0) target = $region37
    $region36: #{cross_scale_attention_forward.4} parent=1 // pred_region
      %s333 = ssub.s32 2048, 2048
      %334 = vsyncadd [#allocation4], %s333
      %s335 = sshll.u32 [#allocation10], 4
      %s336 = int_to_ptr.vmem [resolvable:$true] %s335
      %341 = dma.vmem_to_hbm [thread:$0]  %s336, 2048, %s4, [#allocation4], 128, 128, 8
    $region37: #{cross_scale_attention_forward.4} parent=1 // pred_fallthru
      _
    // Predicated region
    $region38: #{cross_scale_attention_forward.4} parent=1 // pred_check
      _
    $region39: #{cross_scale_attention_forward.4} parent=1 // pred_check_branch
      %343 = sbr.rel (0) target = $region41
    $region40: #{cross_scale_attention_forward.4} parent=1 // pred_region
      %344 = dma.done [#allocation4], 2048
    $region41: #{cross_scale_attention_forward.4} parent=1 // pred_fallthru
      _
    %345 = vsyncpa [#allocation3], 1
    %346 = vsyncpa [#allocation6], 1
    %347 = vsyncpa [#allocation9], 1
    %348 = vsyncpa [#allocation4], 1

// kernel: cross_scale_attention_forward.5
$region0: #{cross_scale_attention_forward.5}
  #allocation0 [shape = 'u32[]', space=smem, size = 0x4, offset = 0x4, fixed_abs, tag = 'smem constant byte address 0x4 - core index']
  #allocation1 [shape = 'u32[144,128]{1,0:T(1,128)}', space=vmem, size = 0x12000, scoped, tag = 'internal scratch']
  %s0 = inlined_call_operand.hbm [shape: bf16[2,256,36], index: 0, kind: input, shape index: {}]
  %s1 = inlined_call_operand.hbm [shape: bf16[2,36,64], index: 1, kind: input, shape index: {}]
  %s2 = inlined_call_operand.hbm [shape: bf16[2,64,288], index: 2, kind: input, shape index: {}]
  %s3 = inlined_call_operand.hbm [shape: f32[2,256,288], index: 3, kind: output, shape index: {}]
  %s4 = sld [smem:[#allocation0]]
  $region57: #{cross_scale_attention_forward.5} parent=0
    _
  %s6 = ssub.s32 1, %s4
  %s7 = scalar_select 0, %s6, %s4
  $region1: #{cross_scale_attention_forward.5} parent=0
    #allocation2 [shape = 'u8[131072]{0}', space=vmem, size = 0x20000, scoped, tag = 'input window, operand 0']
    #allocation3 [shape = 's32[2]{0}', space=sflag, size = 0x8, scoped, tag = 'scoped memory for cross_scale_attention_forward.5']
    #allocation4 [shape = 's32[2]{0}', space=sflag, size = 0x8, scoped, tag = 'scoped memory for cross_scale_attention_forward.5']
    #allocation5 [shape = 'u8[20480]{0}', space=vmem, size = 0x5000, scoped, tag = 'input window, operand 1']
    #allocation6 [shape = 's32[2]{0}', space=sflag, size = 0x8, scoped, tag = 'scoped memory for cross_scale_attention_forward.5']
    #allocation7 [shape = 'u8[98304]{0}', space=vmem, size = 0x18000, scoped, tag = 'input window, operand 2']
    #allocation8 [shape = 'u8[786432]{0}', space=vmem, size = 0xc0000, scoped, tag = 'output window, operand 0']
    %8 = vsyncpa [#allocation3], 0
    %s9 = scalar_lea.sflag [#allocation3], 1
    %10 = vsyncpa %s9, 0
    %11 = vsyncpa [#allocation6], 0
    %s12 = scalar_lea.sflag [#allocation6], 1
    %13 = vsyncpa %s12, 0
    %14 = vsyncpa [#allocation4], 0
    %s15 = scalar_lea.sflag [#allocation4], 1
    %16 = vsyncpa %s15, 0
    loop: start=0, step=1, limit=4
    $region2: #{cross_scale_attention_forward.5} parent=1 // loop_pre_header
      _
    $region3: #{cross_scale_attention_forward.5} parent=1 // loop_header
      %s18 = sphi 0, %s22
      %p19 = scmp.ge.s32.totalorder %s18, 4
      %s25 = sphi 0, %s37
      %s26 = sphi 0, %s33
      %s27 = sphi 0, %s25
      %s28 = sphi 0, %s26
      %s29 = sphi 0, %s27
      %s30 = sphi 0, %s28
      %s42 = sphi 0, %s44
      %s45 = sphi 0, %s42
      %s46 = sphi 0, %s45
      %s62 = sphi 0, %s46
      %s68 = sphi 0, %s70
      %s71 = sphi 0, %s68
      %s72 = sphi 0, %s71
      %s88 = sphi 0, %s72
      %s94 = sphi 0, %s96
      %s97 = sphi 0, %s94
      %s98 = sphi 0, %s97
      %s114 = sphi 0, %s98
      %s122 = sphi 0, %s124
      %s125 = sphi 0, %s122
      %s126 = sphi 0, %s125
      %s142 = sphi 0, %s126
    $region4: #{cross_scale_attention_forward.5} parent=1 // loop_header_branch
      %21 = sbr.rel (%p19) target = $region8
    $region5: #{cross_scale_attention_forward.5} parent=1 // loop_body
      %s23 = ssub.s32 %s18, 1
      %s24 = ssub.s32 %s18, 2
      %s31 = sadd.s32 1, %s26
      %p32 = scmp.ge.s32.totalorder %s31, 1
      %s33 = scalar_select %p32, 0, %s31
      %s34 = sadd.s32 1, %s25
      %s35 = scalar_select %p32, %s34, %s25
      %p36 = scmp.ge.s32.totalorder %s35, 2
      %s37 = scalar_select %p36, 0, %s35
      %s38 = ssub.s32 %s25, %s37
      %s39 = ssub.s32 %s26, %s33
      %s40 = sor.u32 %s38, %s39
      %p41 = scmp.eq.s32.totalorder %s40, 0
      %s43 = sadd.s32 %s42, 1
      %s44 = scalar_select %p41, %s42, %s43
      %p47 = pneg %p41
      %p48 = scmp.eq.s32.totalorder %s18, 1
      %p49 = por %p47, %p48
      %p50 = scmp.ne.s32.totalorder %s42, %s45
      %p51 = scmp.eq.s32.totalorder %s18, 0
      %p52 = por %p50, %p51
      %p53 = scmp.ne.s32.totalorder %s42, %s45
      %p54 = scmp.eq.s32.totalorder %s23, 1
      %p55 = por %p53, %p54
      %p56 = scmp.ne.s32.totalorder %s45, %s46
      %p57 = scmp.eq.s32.totalorder %s23, 0
      %p58 = por %p56, %p57
      %p59 = scmp.ne.s32.totalorder %s45, %s46
      %p60 = scmp.eq.s32.totalorder %s24, 1
      %p61 = por %p59, %p60
      %p63 = scmp.ne.s32.totalorder %s46, %s62
      %p64 = scmp.eq.s32.totalorder %s24, 0
      %p65 = por %p63, %p64
      %s66 = ssub.s32 %s25, %s37
      %p67 = scmp.eq.s32.totalorder %s66, 0
      %s69 = sadd.s32 %s68, 1
      %s70 = scalar_select %p67, %s68, %s69
      %p73 = pneg %p67
      %p74 = scmp.eq.s32.totalorder %s18, 1
      %p75 = por %p73, %p74
      %p76 = scmp.ne.s32.totalorder %s68, %s71
      %p77 = scmp.eq.s32.totalorder %s18, 0
      %p78 = por %p76, %p77
      %p79 = scmp.ne.s32.totalorder %s68, %s71
      %p80 = scmp.eq.s32.totalorder %s23, 1
      %p81 = por %p79, %p80
      %p82 = scmp.ne.s32.totalorder %s71, %s72
      %p83 = scmp.eq.s32.totalorder %s23, 0
      %p84 = por %p82, %p83
      %p85 = scmp.ne.s32.totalorder %s71, %s72
      %p86 = scmp.eq.s32.totalorder %s24, 1
      %p87 = por %p85, %p86
      %p89 = scmp.ne.s32.totalorder %s72, %s88
      %p90 = scmp.eq.s32.totalorder %s24, 0
      %p91 = por %p89, %p90
      %s92 = ssub.s32 %s25, %s37
      %p93 = scmp.eq.s32.totalorder %s92, 0
      %s95 = sadd.s32 %s94, 1
      %s96 = scalar_select %p93, %s94, %s95
      %p99 = pneg %p93
      %p100 = scmp.eq.s32.totalorder %s18, 1
      %p101 = por %p99, %p100
      %p102 = scmp.ne.s32.totalorder %s94, %s97
      %p103 = scmp.eq.s32.totalorder %s18, 0
      %p104 = por %p102, %p103
      %p105 = scmp.ne.s32.totalorder %s94, %s97
      %p106 = scmp.eq.s32.totalorder %s23, 1
      %p107 = por %p105, %p106
      %p108 = scmp.ne.s32.totalorder %s97, %s98
      %p109 = scmp.eq.s32.totalorder %s23, 0
      %p110 = por %p108, %p109
      %p111 = scmp.ne.s32.totalorder %s97, %s98
      %p112 = scmp.eq.s32.totalorder %s24, 1
      %p113 = por %p111, %p112
      %p115 = scmp.ne.s32.totalorder %s98, %s114
      %p116 = scmp.eq.s32.totalorder %s24, 0
      %p117 = por %p115, %p116
      %s118 = ssub.s32 %s25, %s37
      %s119 = ssub.s32 %s26, %s33
      %s120 = sor.u32 %s118, %s119
      %p121 = scmp.eq.s32.totalorder %s120, 0
      %s123 = sadd.s32 %s122, 1
      %s124 = scalar_select %p121, %s122, %s123
      %p127 = pneg %p121
      %p128 = scmp.eq.s32.totalorder %s18, 1
      %p129 = por %p127, %p128
      %p130 = scmp.ne.s32.totalorder %s122, %s125
      %p131 = scmp.eq.s32.totalorder %s18, 0
      %p132 = por %p130, %p131
      %p133 = scmp.ne.s32.totalorder %s122, %s125
      %p134 = scmp.eq.s32.totalorder %s23, 1
      %p135 = por %p133, %p134
      %p136 = scmp.ne.s32.totalorder %s125, %s126
      %p137 = scmp.eq.s32.totalorder %s23, 0
      %p138 = por %p136, %p137
      %p139 = scmp.ne.s32.totalorder %s125, %s126
      %p140 = scmp.eq.s32.totalorder %s24, 1
      %p141 = por %p139, %p140
      %p143 = scmp.ne.s32.totalorder %s126, %s142
      %p144 = scmp.eq.s32.totalorder %s24, 0
      %p145 = por %p143, %p144
      %p146 = scmp.le.s32.totalorder 1, %s18
      %p147 = scmp.lt.s32.totalorder %s18, 3
      %p148 = pnand %p146, %p147
      %p149 = pneg %p148
      // Predicated region
      $region9: #{cross_scale_attention_forward.5} parent=5 // pred_check
        _
      $region10: #{cross_scale_attention_forward.5} parent=5 // pred_check_branch
        %151 = sbr.rel (%p148) target = $region12
      $region11: #{cross_scale_attention_forward.5} parent=5 // pred_region
        %s152 = ssub.s32 %s18, 1
      $region12: #{cross_scale_attention_forward.5} parent=5 // pred_fallthru
        _
      %p153 = scmp.lt.s32.totalorder %s18, 2
      // Predicated region
      $region13: #{cross_scale_attention_forward.5} parent=5 // pred_check
        %p154 = pneg %p153
      $region14: #{cross_scale_attention_forward.5} parent=5 // pred_check_branch
        %156 = sbr.rel (%p154) target = $region16
      $region15: #{cross_scale_attention_forward.5} parent=5 // pred_region
        // Predicated region
        $region17: #{cross_scale_attention_forward.5} parent=15 // pred_check
          %p157 = pneg %p52
        $region18: #{cross_scale_attention_forward.5} parent=15 // pred_check_branch
          %159 = sbr.rel (%p157) target = $region20
        $region19: #{cross_scale_attention_forward.5} parent=15 // pred_region
          %s160 = sand.u32 %s42, 1
          %s161 = scalar_lea.sflag [#allocation3], %s160
          %s162 = sand.u32 %s42, 1
          %s163 = smul.addr %s162, 128
          %s164 = scalar_lea.vmem [#allocation2], %s163
          %s165 = smul.u32 32, %s26
          %s167 = ssub.s32 2048, 2048
          %168 = vsyncadd %s161, %s167
          %s169 = smul.addr %s25, 32
          %s170 = sadd.s32 %s165, %s169
          %s171 = smul.addr %s170, 64
          %s172 = scalar_lea.hbm %s0, %s171
          %s173 = sshll.u32 %s164, 4
          %s174 = int_to_ptr.vmem [resolvable:$true] %s173
          %179 = dma.hbm_to_vmem [thread:$0]  %s172, 2048, %s174, %s161, 64, 64, 4
        $region20: #{cross_scale_attention_forward.5} parent=15 // pred_fallthru
          _
        // Predicated region
        $region21: #{cross_scale_attention_forward.5} parent=15 // pred_check
          %p180 = pneg %p78
        $region22: #{cross_scale_attention_forward.5} parent=15 // pred_check_branch
          %182 = sbr.rel (%p180) target = $region24
        $region23: #{cross_scale_attention_forward.5} parent=15 // pred_region
          %s183 = sand.u32 %s18, 1
          %s184 = scalar_lea.sflag [#allocation6], %s183
          %s185 = sand.u32 %s68, 1
          %s186 = smul.addr %s185, 20
          %s187 = scalar_lea.vmem [#allocation5], %s186
          %s189 = ssub.s32 320, 320
          %190 = vsyncadd %s184, %s189
          %s191 = smul.addr %s25, 5
          %s192 = smul.addr %s191, 64
          %s193 = scalar_lea.hbm %s1, %s192
          %s194 = sshll.u32 %s187, 4
          %s195 = int_to_ptr.vmem [resolvable:$true] %s194
          %200 = dma.hbm_to_vmem [thread:$0]  %s193, 320, %s195, %s184, 64, 64, 4
        $region24: #{cross_scale_attention_forward.5} parent=15 // pred_fallthru
          _
        // Predicated region
        $region25: #{cross_scale_attention_forward.5} parent=15 // pred_check
          %p201 = pneg %p104
        $region26: #{cross_scale_attention_forward.5} parent=15 // pred_check_branch
          %203 = sbr.rel (%p201) target = $region28
        $region27: #{cross_scale_attention_forward.5} parent=15 // pred_region
          %s204 = sand.u32 %s18, 1
          %s205 = scalar_lea.sflag [#allocation6], %s204
          %s206 = sand.u32 %s94, 1
          %s207 = smul.addr %s206, 96
          %s208 = scalar_lea.vmem [#allocation7], %s207
          %s210 = ssub.s32 1536, 1536
          %211 = vsyncadd %s205, %s210
          %s212 = smul.addr %s25, 24
          %s213 = smul.addr %s212, 64
          %s214 = scalar_lea.hbm %s2, %s213
          %s215 = sshll.u32 %s208, 4
          %s216 = int_to_ptr.vmem [resolvable:$true] %s215
          %221 = dma.hbm_to_vmem [thread:$0]  %s214, 1536, %s216, %s205, 192, 192, 12
        $region28: #{cross_scale_attention_forward.5} parent=15 // pred_fallthru
          _
      $region16: #{cross_scale_attention_forward.5} parent=5 // pred_fallthru
        _
      %p222 = scmp.le.s32.totalorder 1, %s18
      %p223 = scmp.lt.s32.totalorder %s18, 3
      %p224 = pnand %p222, %p223
      %p225 = pneg %p224
      // Predicated region
      $region29: #{cross_scale_attention_forward.5} parent=5 // pred_check
        _
      $region30: #{cross_scale_attention_forward.5} parent=5 // pred_check_branch
        %227 = sbr.rel (%p224) target = $region32
      $region31: #{cross_scale_attention_forward.5} parent=5 // pred_region
        %s228 = ssub.s32 %s18, 1
        %s229 = sand.u32 %s45, 1
        %s230 = scalar_lea.sflag [#allocation3], %s229
        %s231 = sand.u32 %s45, 1
        %s232 = smul.addr %s231, 128
        %s233 = scalar_lea.vmem [#allocation2], %s232
        // Predicated region
        $region33: #{cross_scale_attention_forward.5} parent=31 // pred_check
          %p234 = pneg %p58
        $region34: #{cross_scale_attention_forward.5} parent=31 // pred_check_branch
          %236 = sbr.rel (%p234) target = $region36
        $region35: #{cross_scale_attention_forward.5} parent=31 // pred_region
          %237 = dma.done %s230, 2048
        $region36: #{cross_scale_attention_forward.5} parent=31 // pred_fallthru
          _
        %s238 = sand.u32 %s23, 1
        %s239 = scalar_lea.sflag [#allocation6], %s238
        %s240 = sand.u32 %s71, 1
        %s241 = smul.addr %s240, 20
        %s242 = scalar_lea.vmem [#allocation5], %s241
        // Predicated region
        $region37: #{cross_scale_attention_forward.5} parent=31 // pred_check
          %p243 = pneg %p84
        $region38: #{cross_scale_attention_forward.5} parent=31 // pred_check_branch
          %245 = sbr.rel (%p243) target = $region40
        $region39: #{cross_scale_attention_forward.5} parent=31 // pred_region
          %246 = dma.done %s239, 320
        $region40: #{cross_scale_attention_forward.5} parent=31 // pred_fallthru
          _
        %s247 = sand.u32 %s23, 1
        %s248 = scalar_lea.sflag [#allocation6], %s247
        %s249 = sand.u32 %s97, 1
        %s250 = smul.addr %s249, 96
        %s251 = scalar_lea.vmem [#allocation7], %s250
        // Predicated region
        $region41: #{cross_scale_attention_forward.5} parent=31 // pred_check
          %p252 = pneg %p110
        $region42: #{cross_scale_attention_forward.5} parent=31 // pred_check_branch
          %254 = sbr.rel (%p252) target = $region44
        $region43: #{cross_scale_attention_forward.5} parent=31 // pred_region
          %255 = dma.done %s248, 1536
        $region44: #{cross_scale_attention_forward.5} parent=31 // pred_fallthru
          _
        %s256 = sand.u32 %s45, 1
        %s257 = scalar_lea.sflag [#allocation3], %s256
        %s258 = sand.u32 %s45, 1
        %s259 = smul.addr %s258, 128
        %s260 = scalar_lea.vmem [#allocation2], %s259
        %p261 = pneg %p58
        %p262 = pneg %p55
        %s263 = sand.u32 %s23, 1
        %s264 = scalar_lea.sflag [#allocation6], %s263
        %s265 = sand.u32 %s71, 1
        %s266 = smul.addr %s265, 20
        %s267 = scalar_lea.vmem [#allocation5], %s266
        %p268 = pneg %p84
        %p269 = pneg %p81
        %s270 = sand.u32 %s23, 1
        %s271 = scalar_lea.sflag [#allocation6], %s270
        %s272 = sand.u32 %s97, 1
        %s273 = smul.addr %s272, 96
        %s274 = scalar_lea.vmem [#allocation7], %s273
        %p275 = pneg %p110
        %p276 = pneg %p107
        %p277 = pneg %p138
        %p278 = pneg %p135
        %s279 = sand.u32 %s125, 1
        %s280 = scalar_lea.sflag [#allocation4], %s279
        %s281 = sand.u32 %s125, 1
        %s282 = smul.addr %s281, 768
        %s283 = scalar_lea.vmem [#allocation8], %s282
        %s284 = smul.u32 32, %s28
        %s285 = smul.u32 32, %s28
        %v287 = vld [vmem:[%s233] sm:$0xf]
        %v288 = vld [vmem:[%s233 + $0x4] sm:$0xf]
        %v289 = vld [vmem:[%s233 + $0x8] sm:$0xf]
        %v290 = vld [vmem:[%s233 + $0xc] sm:$0xf]
        %v291 = vld [vmem:[%s233 + $0x10] sm:$0xf]
        %v292 = vld [vmem:[%s233 + $0x14] sm:$0xf]
        %v293 = vld [vmem:[%s233 + $0x18] sm:$0xf]
        %v294 = vld [vmem:[%s233 + $0x1c] sm:$0xf]
        %v295 = vld [vmem:[%s233 + $0x20] sm:$0xf]
        %v296 = vld [vmem:[%s233 + $0x24] sm:$0xf]
        %v297 = vld [vmem:[%s233 + $0x28] sm:$0xf]
        %v298 = vld [vmem:[%s233 + $0x2c] sm:$0xf]
        %v299 = vld [vmem:[%s233 + $0x30] sm:$0xf]
        %v300 = vld [vmem:[%s233 + $0x34] sm:$0xf]
        %v301 = vld [vmem:[%s233 + $0x38] sm:$0xf]
        %v302 = vld [vmem:[%s233 + $0x3c] sm:$0xf]
        %v303 = vld [vmem:[%s233 + $0x40] sm:$0xf]
        %v304 = vld [vmem:[%s233 + $0x44] sm:$0xf]
        %v305 = vld [vmem:[%s233 + $0x48] sm:$0xf]
        %v306 = vld [vmem:[%s233 + $0x4c] sm:$0xf]
        %v307 = vld [vmem:[%s233 + $0x50] sm:$0xf]
        %v308 = vld [vmem:[%s233 + $0x54] sm:$0xf]
        %v309 = vld [vmem:[%s233 + $0x58] sm:$0xf]
        %v310 = vld [vmem:[%s233 + $0x5c] sm:$0xf]
        %v311 = vld [vmem:[%s233 + $0x60] sm:$0xf]
        %v312 = vld [vmem:[%s233 + $0x64] sm:$0xf]
        %v313 = vld [vmem:[%s233 + $0x68] sm:$0xf]
        %v314 = vld [vmem:[%s233 + $0x6c] sm:$0xf]
        %v315 = vld [vmem:[%s233 + $0x70] sm:$0xf]
        %v316 = vld [vmem:[%s233 + $0x74] sm:$0xf]
        %v317 = vld [vmem:[%s233 + $0x78] sm:$0xf]
        %v318 = vld [vmem:[%s233 + $0x7c] sm:$0xf]
        %v319 = vld [vmem:[%s242] sm:$0xf]
        %v320 = vld [vmem:[%s242 + $0x4] sm:$0xf]
        %v321 = vld [vmem:[%s242 + $0x8] sm:$0xf]
        %v322 = vld [vmem:[%s242 + $0xc] sm:$0xf]
        %v323 = vld [vmem:[%s242 + $0x10] sm:$0x3]
        %v356 = vunpack.c.l.b16 %v287
        %v357 = vunpack.c.l.b16 %v288
        %v358 = vunpack.c.l.b16 %v289
        %v359 = vunpack.c.l.b16 %v290
        %v360 = vunpack.c.l.b16 %v291
        %v361 = vunpack.c.l.b16 %v292
        %v362 = vunpack.c.l.b16 %v293
        %v363 = vunpack.c.l.b16 %v294
        %v364 = vunpack.c.l.b16 %v295
        %v365 = vunpack.c.l.b16 %v296
        %v366 = vunpack.c.l.b16 %v297
        %v367 = vunpack.c.l.b16 %v298
        %v368 = vunpack.c.l.b16 %v299
        %v369 = vunpack.c.l.b16 %v300
        %v370 = vunpack.c.l.b16 %v301
        %v371 = vunpack.c.l.b16 %v302
        %v372 = vunpack.c.l.b16 %v303
        %v373 = vunpack.c.l.b16 %v304
        %v374 = vunpack.c.l.b16 %v305
        %v375 = vunpack.c.l.b16 %v306
        %v376 = vunpack.c.l.b16 %v307
        %v377 = vunpack.c.l.b16 %v308
        %v378 = vunpack.c.l.b16 %v309
        %v379 = vunpack.c.l.b16 %v310
        %v380 = vunpack.c.l.b16 %v311
        %v381 = vunpack.c.l.b16 %v312
        %v382 = vunpack.c.l.b16 %v313
        %v383 = vunpack.c.l.b16 %v314
        %v384 = vunpack.c.l.b16 %v315
        %v385 = vunpack.c.l.b16 %v316
        %v386 = vunpack.c.l.b16 %v317
        %v387 = vunpack.c.l.b16 %v318
        %v388 = vpack.c.b16 %v357, %v356
        %v389 = vpack.c.b16 %v359, %v358
        %v390 = vpack.c.b16 %v361, %v360
        %v391 = vpack.c.b16 %v363, %v362
        %v392 = vpack.c.b16 %v365, %v364
        %v393 = vpack.c.b16 %v367, %v366
        %v394 = vpack.c.b16 %v369, %v368
        %v395 = vpack.c.b16 %v371, %v370
        %v396 = vpack.c.b16 %v373, %v372
        %v397 = vpack.c.b16 %v375, %v374
        %v398 = vpack.c.b16 %v377, %v376
        %v399 = vpack.c.b16 %v379, %v378
        %v400 = vpack.c.b16 %v381, %v380
        %v401 = vpack.c.b16 %v383, %v382
        %v402 = vpack.c.b16 %v385, %v384
        %v403 = vpack.c.b16 %v387, %v386
        %v409 = vunpack.c.l.b16 %v319
        %v410 = vunpack.c.l.b16 %v320
        %v411 = vunpack.c.l.b16 %v321
        %v412 = vunpack.c.l.b16 %v322
        %v413 = vunpack.c.l.b16 %v323
        %v414 = vpack.c.b16 %v410, %v409
        %v415 = vpack.c.b16 %v412, %v411
        %v416 = vpack.c.b16 %v413, %v413
        %vm419 = vcmask 293888
        %v421 = vsel %vm419, %v388, 0
        %v424 = vsel %vm419, %v389, 0
        %v427 = vsel %vm419, %v390, 0
        %v430 = vsel %vm419, %v391, 0
        %v433 = vsel %vm419, %v392, 0
        %v436 = vsel %vm419, %v393, 0
        %v439 = vsel %vm419, %v394, 0
        %v442 = vsel %vm419, %v395, 0
        %v445 = vsel %vm419, %v396, 0
        %v448 = vsel %vm419, %v397, 0
        %v451 = vsel %vm419, %v398, 0
        %v454 = vsel %vm419, %v399, 0
        %v457 = vsel %vm419, %v400, 0
        %v460 = vsel %vm419, %v401, 0
        %v463 = vsel %vm419, %v402, 0
        %v466 = vsel %vm419, %v403, 0
        %vm468 = vcmask 1041408
        %v470 = vsel %vm468, %v416, 0
        %472 = vmatprep.subr.bf16.mxu0 0
        %473 = vmatpush1.bf16.msra.mxu0 %v414
        %474 = vmatprep.subr.bf16.mxu0 0
        %475 = vmatpush1.bf16.msra.mxu0 %v415
        %476 = vmatprep.subr.bf16.mxu0 0
        %477 = vmatpush1.bf16.msra.mxu0 %v470
        %478 = vmatprep.subr.bf16.mxu0 0
        %479 = vmatpush1.bf16.msra.mxu0 0
        %480 = vmatprep.subr.bf16.mxu0 0
        %481 = vmatpush1.bf16.msra.mxu0 0
        %482 = vmatprep.subr.bf16.mxu0 0
        %483 = vmatpush1.bf16.msra.mxu0 0
        %484 = vmatprep.subr.bf16.mxu0 0
        %485 = vmatpush1.bf16.msra.mxu0 0
        %486 = vmatprep.subr.bf16.mxu0 0
        %487 = vmatpush1.bf16.msra.mxu0 0
        %488 = vmatprep.subr.bf16.mxu0 0
        %489 = vmatpush1.bf16.msra.mxu0 0
        %490 = vmatprep.subr.bf16.mxu0 0
        %491 = vmatpush1.bf16.msra.mxu0 0
        %492 = vmatprep.subr.bf16.mxu0 0
        %493 = vmatpush1.bf16.msra.mxu0 0
        %494 = vmatprep.subr.bf16.mxu0 0
        %495 = vmatpush1.bf16.msra.mxu0 0
        %496 = vmatprep.subr.bf16.mxu0 0
        %497 = vmatpush1.bf16.msra.mxu0 0
        %498 = vmatprep.subr.bf16.mxu0 0
        %499 = vmatpush1.bf16.msra.mxu0 0
        %500 = vmatprep.subr.bf16.mxu0 0
        %501 = vmatpush1.bf16.msra.mxu0 0
        %502 = vmatprep.subr.bf16.mxu0 0
        %503 = vmatpush1.bf16.msra.mxu0 0
        %504 = vmatprep.mubr.bf16.mxu0 0
        %505 = vmatmul.mubr.bf16.gmra.mrb[0].mxu0 %v421
        %v506 = vpop.f32.mrb[0].mxu0
        %v507 = vadd.f32 0.0, %v506
        %v508 = vpop.f32.mrb[0].mxu0
        %v509 = vpop.f32.mrb[0].mxu0
        %v510 = vadd.f32 0.0, %v509
        %v511 = vpop.f32.mrb[0].mxu0
        %512 = vmatprep.mubr.bf16.mxu0 0
        %513 = vmatmul.mubr.bf16.gmra.mrb[0].mxu0 %v424
        %v514 = vpop.f32.mrb[0].mxu0
        %v515 = vadd.f32 0.0, %v514
        %v516 = vpop.f32.mrb[0].mxu0
        %v517 = vpop.f32.mrb[0].mxu0
        %v518 = vadd.f32 0.0, %v517
        %v519 = vpop.f32.mrb[0].mxu0
        %520 = vmatprep.mubr.bf16.mxu0 0
        %521 = vmatmul.mubr.bf16.gmra.mrb[0].mxu0 %v427
        %v522 = vpop.f32.mrb[0].mxu0
        %v523 = vadd.f32 0.0, %v522
        %v524 = vpop.f32.mrb[0].mxu0
        %v525 = vpop.f32.mrb[0].mxu0
        %v526 = vadd.f32 0.0, %v525
        %v527 = vpop.f32.mrb[0].mxu0
        %528 = vmatprep.mubr.bf16.mxu0 0
        %529 = vmatmul.mubr.bf16.gmra.mrb[0].mxu0 %v430
        %v530 = vpop.f32.mrb[0].mxu0
        %v531 = vadd.f32 0.0, %v530
        %v532 = vpop.f32.mrb[0].mxu0
        %v533 = vpop.f32.mrb[0].mxu0
        %v534 = vadd.f32 0.0, %v533
        %v535 = vpop.f32.mrb[0].mxu0
        %536 = vmatprep.mubr.bf16.mxu0 0
        %537 = vmatmul.mubr.bf16.gmra.mrb[0].mxu0 %v433
        %v538 = vpop.f32.mrb[0].mxu0
        %v539 = vadd.f32 0.0, %v538
        %v540 = vpop.f32.mrb[0].mxu0
        %v541 = vpop.f32.mrb[0].mxu0
        %v542 = vadd.f32 0.0, %v541
        %v543 = vpop.f32.mrb[0].mxu0
        %544 = vmatprep.mubr.bf16.mxu0 0
        %545 = vmatmul.mubr.bf16.gmra.mrb[0].mxu0 %v436
        %v546 = vpop.f32.mrb[0].mxu0
        %v547 = vadd.f32 0.0, %v546
        %v548 = vpop.f32.mrb[0].mxu0
        %v549 = vpop.f32.mrb[0].mxu0
        %v550 = vadd.f32 0.0, %v549
        %v551 = vpop.f32.mrb[0].mxu0
        %552 = vmatprep.mubr.bf16.mxu0 0
        %553 = vmatmul.mubr.bf16.gmra.mrb[0].mxu0 %v439
        %v554 = vpop.f32.mrb[0].mxu0
        %v555 = vadd.f32 0.0, %v554
        %v556 = vpop.f32.mrb[0].mxu0
        %v557 = vpop.f32.mrb[0].mxu0
        %v558 = vadd.f32 0.0, %v557
        %v559 = vpop.f32.mrb[0].mxu0
        %560 = vmatprep.mubr.bf16.mxu0 0
        %561 = vmatmul.mubr.bf16.gmra.mrb[0].mxu0 %v442
        %v562 = vpop.f32.mrb[0].mxu0
        %v563 = vadd.f32 0.0, %v562
        %v564 = vpop.f32.mrb[0].mxu0
        %v565 = vpop.f32.mrb[0].mxu0
        %v566 = vadd.f32 0.0, %v565
        %v567 = vpop.f32.mrb[0].mxu0
        %568 = vmatprep.mubr.bf16.mxu0 0
        %569 = vmatmul.mubr.bf16.gmra.mrb[0].mxu0 %v445
        %v570 = vpop.f32.mrb[0].mxu0
        %v571 = vadd.f32 0.0, %v570
        %v572 = vpop.f32.mrb[0].mxu0
        %v573 = vpop.f32.mrb[0].mxu0
        %v574 = vadd.f32 0.0, %v573
        %v575 = vpop.f32.mrb[0].mxu0
        %576 = vmatprep.mubr.bf16.mxu0 0
        %577 = vmatmul.mubr.bf16.gmra.mrb[0].mxu0 %v448
        %v578 = vpop.f32.mrb[0].mxu0
        %v579 = vadd.f32 0.0, %v578
        %v580 = vpop.f32.mrb[0].mxu0
        %v581 = vpop.f32.mrb[0].mxu0
        %v582 = vadd.f32 0.0, %v581
        %v583 = vpop.f32.mrb[0].mxu0
        %584 = vmatprep.mubr.bf16.mxu0 0
        %585 = vmatmul.mubr.bf16.gmra.mrb[0].mxu0 %v451
        %v586 = vpop.f32.mrb[0].mxu0
        %v587 = vadd.f32 0.0, %v586
        %v588 = vpop.f32.mrb[0].mxu0
        %v589 = vpop.f32.mrb[0].mxu0
        %v590 = vadd.f32 0.0, %v589
        %v591 = vpop.f32.mrb[0].mxu0
        %592 = vmatprep.mubr.bf16.mxu0 0
        %593 = vmatmul.mubr.bf16.gmra.mrb[0].mxu0 %v454
        %v594 = vpop.f32.mrb[0].mxu0
        %v595 = vadd.f32 0.0, %v594
        %v596 = vpop.f32.mrb[0].mxu0
        %v597 = vpop.f32.mrb[0].mxu0
        %v598 = vadd.f32 0.0, %v597
        %v599 = vpop.f32.mrb[0].mxu0
        %600 = vmatprep.mubr.bf16.mxu0 0
        %601 = vmatmul.mubr.bf16.gmra.mrb[0].mxu0 %v457
        %v602 = vpop.f32.mrb[0].mxu0
        %v603 = vadd.f32 0.0, %v602
        %v604 = vpop.f32.mrb[0].mxu0
        %v605 = vpop.f32.mrb[0].mxu0
        %v606 = vadd.f32 0.0, %v605
        %v607 = vpop.f32.mrb[0].mxu0
        %608 = vmatprep.mubr.bf16.mxu0 0
        %609 = vmatmul.mubr.bf16.gmra.mrb[0].mxu0 %v460
        %v610 = vpop.f32.mrb[0].mxu0
        %v611 = vadd.f32 0.0, %v610
        %v612 = vpop.f32.mrb[0].mxu0
        %v613 = vpop.f32.mrb[0].mxu0
        %v614 = vadd.f32 0.0, %v613
        %v615 = vpop.f32.mrb[0].mxu0
        %616 = vmatprep.mubr.bf16.mxu0 0
        %617 = vmatmul.mubr.bf16.gmra.mrb[0].mxu0 %v463
        %v618 = vpop.f32.mrb[0].mxu0
        %v619 = vadd.f32 0.0, %v618
        %v620 = vpop.f32.mrb[0].mxu0
        %v621 = vpop.f32.mrb[0].mxu0
        %v622 = vadd.f32 0.0, %v621
        %v623 = vpop.f32.mrb[0].mxu0
        %624 = vmatprep.mubr.bf16.mxu0 0
        %625 = vmatmul.mubr.bf16.gmra.mrb[0].mxu0 %v466
        %v626 = vpop.f32.mrb[0].mxu0
        %v627 = vadd.f32 0.0, %v626
        %v628 = vpop.f32.mrb[0].mxu0
        %v629 = vpop.f32.mrb[0].mxu0
        %v630 = vadd.f32 0.0, %v629
        %v631 = vpop.f32.mrb[0].mxu0
        %632 = vdwg.mxu0
        %vm633 = vcmask 523264
        %v634 = vsel %vm633, %v507, -inf
        %635 = vmax.xlane.f32.xlu0 %v634
        %v636 = vpop.xlane.xlu0 %635
        %v637 = vsel %vm633, %v510, -inf
        %638 = vmax.xlane.f32.xlu0 %v637
        %v639 = vpop.xlane.xlu0 %638
        %v640 = vsel %vm633, %v515, -inf
        %641 = vmax.xlane.f32.xlu0 %v640
        %v642 = vpop.xlane.xlu0 %641
        %v643 = vsel %vm633, %v518, -inf
        %644 = vmax.xlane.f32.xlu0 %v643
        %v645 = vpop.xlane.xlu0 %644
        %v646 = vsel %vm633, %v523, -inf
        %647 = vmax.xlane.f32.xlu0 %v646
        %v648 = vpop.xlane.xlu0 %647
        %v649 = vsel %vm633, %v526, -inf
        %650 = vmax.xlane.f32.xlu0 %v649
        %v651 = vpop.xlane.xlu0 %650
        %v652 = vsel %vm633, %v531, -inf
        %653 = vmax.xlane.f32.xlu0 %v652
        %v654 = vpop.xlane.xlu0 %653
        %v655 = vsel %vm633, %v534, -inf
        %656 = vmax.xlane.f32.xlu0 %v655
        %v657 = vpop.xlane.xlu0 %656
        %v658 = vsel %vm633, %v539, -inf
        %659 = vmax.xlane.f32.xlu0 %v658
        %v660 = vpop.xlane.xlu0 %659
        %v661 = vsel %vm633, %v542, -inf
        %662 = vmax.xlane.f32.xlu0 %v661
        %v663 = vpop.xlane.xlu0 %662
        %v664 = vsel %vm633, %v547, -inf
        %665 = vmax.xlane.f32.xlu0 %v664
        %v666 = vpop.xlane.xlu0 %665
        %v667 = vsel %vm633, %v550, -inf
        %668 = vmax.xlane.f32.xlu0 %v667
        %v669 = vpop.xlane.xlu0 %668
        %v670 = vsel %vm633, %v555, -inf
        %671 = vmax.xlane.f32.xlu0 %v670
        %v672 = vpop.xlane.xlu0 %671
        %v673 = vsel %vm633, %v558, -inf
        %674 = vmax.xlane.f32.xlu0 %v673
        %v675 = vpop.xlane.xlu0 %674
        %v676 = vsel %vm633, %v563, -inf
        %677 = vmax.xlane.f32.xlu0 %v676
        %v678 = vpop.xlane.xlu0 %677
        %v679 = vsel %vm633, %v566, -inf
        %680 = vmax.xlane.f32.xlu0 %v679
        %v681 = vpop.xlane.xlu0 %680
        %v682 = vsel %vm633, %v571, -inf
        %683 = vmax.xlane.f32.xlu0 %v682
        %v684 = vpop.xlane.xlu0 %683
        %v685 = vsel %vm633, %v574, -inf
        %686 = vmax.xlane.f32.xlu0 %v685
        %v687 = vpop.xlane.xlu0 %686
        %v688 = vsel %vm633, %v579, -inf
        %689 = vmax.xlane.f32.xlu0 %v688
        %v690 = vpop.xlane.xlu0 %689
        %v691 = vsel %vm633, %v582, -inf
        %692 = vmax.xlane.f32.xlu0 %v691
        %v693 = vpop.xlane.xlu0 %692
        %v694 = vsel %vm633, %v587, -inf
        %695 = vmax.xlane.f32.xlu0 %v694
        %v696 = vpop.xlane.xlu0 %695
        %v697 = vsel %vm633, %v590, -inf
        %698 = vmax.xlane.f32.xlu0 %v697
        %v699 = vpop.xlane.xlu0 %698
        %v700 = vsel %vm633, %v595, -inf
        %701 = vmax.xlane.f32.xlu0 %v700
        %v702 = vpop.xlane.xlu0 %701
        %v703 = vsel %vm633, %v598, -inf
        %704 = vmax.xlane.f32.xlu0 %v703
        %v705 = vpop.xlane.xlu0 %704
        %v706 = vsel %vm633, %v603, -inf
        %707 = vmax.xlane.f32.xlu0 %v706
        %v708 = vpop.xlane.xlu0 %707
        %v709 = vsel %vm633, %v606, -inf
        %710 = vmax.xlane.f32.xlu0 %v709
        %v711 = vpop.xlane.xlu0 %710
        %v712 = vsel %vm633, %v611, -inf
        %713 = vmax.xlane.f32.xlu0 %v712
        %v714 = vpop.xlane.xlu0 %713
        %v715 = vsel %vm633, %v614, -inf
        %716 = vmax.xlane.f32.xlu0 %v715
        %v717 = vpop.xlane.xlu0 %716
        %v718 = vsel %vm633, %v619, -inf
        %719 = vmax.xlane.f32.xlu0 %v718
        %v720 = vpop.xlane.xlu0 %719
        %v721 = vsel %vm633, %v622, -inf
        %722 = vmax.xlane.f32.xlu0 %v721
        %v723 = vpop.xlane.xlu0 %722
        %v724 = vsel %vm633, %v627, -inf
        %725 = vmax.xlane.f32.xlu0 %v724
        %v726 = vpop.xlane.xlu0 %725
        %v727 = vsel %vm633, %v630, -inf
        %728 = vmax.xlane.f32.xlu0 %v727
        %v729 = vpop.xlane.xlu0 %728
        %v730 = vsub.f32 %v507, %v636
        %v731 = vsub.f32 %v510, %v639
        %v732 = vsub.f32 %v515, %v642
        %v733 = vsub.f32 %v518, %v645
        %v734 = vsub.f32 %v523, %v648
        %v735 = vsub.f32 %v526, %v651
        %v736 = vsub.f32 %v531, %v654
        %v737 = vsub.f32 %v534, %v657
        %v738 = vsub.f32 %v539, %v660
        %v739 = vsub.f32 %v542, %v663
        %v740 = vsub.f32 %v547, %v666
        %v741 = vsub.f32 %v550, %v669
        %v742 = vsub.f32 %v555, %v672
        %v743 = vsub.f32 %v558, %v675
        %v744 = vsub.f32 %v563, %v678
        %v745 = vsub.f32 %v566, %v681
        %v746 = vsub.f32 %v571, %v684
        %v747 = vsub.f32 %v574, %v687
        %v748 = vsub.f32 %v579, %v690
        %v749 = vsub.f32 %v582, %v693
        %v750 = vsub.f32 %v587, %v696
        %v751 = vsub.f32 %v590, %v699
        %v752 = vsub.f32 %v595, %v702
        %v753 = vsub.f32 %v598, %v705
        %v754 = vsub.f32 %v603, %v708
        %v755 = vsub.f32 %v606, %v711
        %v756 = vsub.f32 %v611, %v714
        %v757 = vsub.f32 %v614, %v717
        %v758 = vsub.f32 %v619, %v720
        %v759 = vsub.f32 %v622, %v723
        %v760 = vsub.f32 %v627, %v726
        %v761 = vsub.f32 %v630, %v729
        %v762 = vmul.f32 %v730, 1.442695
        %v763 = vpow.pop %v762
        %v764 = vmul.f32 %v731, 1.442695
        %v765 = vpow.pop %v764
        %v766 = vmul.f32 %v732, 1.442695
        %v767 = vpow.pop %v766
        %v768 = vmul.f32 %v733, 1.442695
        %v769 = vpow.pop %v768
        %v770 = vmul.f32 %v734, 1.442695
        %v771 = vpow.pop %v770
        %v772 = vmul.f32 %v735, 1.442695
        %v773 = vpow.pop %v772
        %v774 = vmul.f32 %v736, 1.442695
        %v775 = vpow.pop %v774
        %v776 = vmul.f32 %v737, 1.442695
        %v777 = vpow.pop %v776
        %v778 = vmul.f32 %v738, 1.442695
        %v779 = vpow.pop %v778
        %v780 = vmul.f32 %v739, 1.442695
        %v781 = vpow.pop %v780
        %v782 = vmul.f32 %v740, 1.442695
        %v783 = vpow.pop %v782
        %v784 = vmul.f32 %v741, 1.442695
        %v785 = vpow.pop %v784
        %v786 = vmul.f32 %v742, 1.442695
        %v787 = vpow.pop %v786
        %v788 = vmul.f32 %v743, 1.442695
        %v789 = vpow.pop %v788
        %v790 = vmul.f32 %v744, 1.442695
        %v791 = vpow.pop %v790
        %v792 = vmul.f32 %v745, 1.442695
        %v793 = vpow.pop %v792
        %v794 = vmul.f32 %v746, 1.442695
        %v795 = vpow.pop %v794
        %v796 = vmul.f32 %v747, 1.442695
        %v797 = vpow.pop %v796
        %v798 = vmul.f32 %v748, 1.442695
        %v799 = vpow.pop %v798
        %v800 = vmul.f32 %v749, 1.442695
        %v801 = vpow.pop %v800
        %v802 = vmul.f32 %v750, 1.442695
        %v803 = vpow.pop %v802
        %v804 = vmul.f32 %v751, 1.442695
        %v805 = vpow.pop %v804
        %v806 = vmul.f32 %v752, 1.442695
        %v807 = vpow.pop %v806
        %v808 = vmul.f32 %v753, 1.442695
        %v809 = vpow.pop %v808
        %v810 = vmul.f32 %v754, 1.442695
        %v811 = vpow.pop %v810
        %v812 = vmul.f32 %v755, 1.442695
        %v813 = vpow.pop %v812
        %v814 = vmul.f32 %v756, 1.442695
        %v815 = vpow.pop %v814
        %v816 = vmul.f32 %v757, 1.442695
        %v817 = vpow.pop %v816
        %v818 = vmul.f32 %v758, 1.442695
        %v819 = vpow.pop %v818
        %v820 = vmul.f32 %v759, 1.442695
        %v821 = vpow.pop %v820
        %v822 = vmul.f32 %v760, 1.442695
        %v823 = vpow.pop %v822
        %v824 = vmul.f32 %v761, 1.442695
        %v825 = vpow.pop %v824
        %v826 = vsel %vm633, %v763, 0.0
        %827 = vadd.xlane.f32.xlu0 %v826
        %v828 = vpop.xlane.xlu0 %827
        %v829 = vsel %vm633, %v765, 0.0
        %830 = vadd.xlane.f32.xlu0 %v829
        %v831 = vpop.xlane.xlu0 %830
        %v832 = vsel %vm633, %v767, 0.0
        %833 = vadd.xlane.f32.xlu0 %v832
        %v834 = vpop.xlane.xlu0 %833
        %v835 = vsel %vm633, %v769, 0.0
        %836 = vadd.xlane.f32.xlu0 %v835
        %v837 = vpop.xlane.xlu0 %836
        %v838 = vsel %vm633, %v771, 0.0
        %839 = vadd.xlane.f32.xlu0 %v838
        %v840 = vpop.xlane.xlu0 %839
        %v841 = vsel %vm633, %v773, 0.0
        %842 = vadd.xlane.f32.xlu0 %v841
        %v843 = vpop.xlane.xlu0 %842
        %v844 = vsel %vm633, %v775, 0.0
        %845 = vadd.xlane.f32.xlu0 %v844
        %v846 = vpop.xlane.xlu0 %845
        %v847 = vsel %vm633, %v777, 0.0
        %848 = vadd.xlane.f32.xlu0 %v847
        %v849 = vpop.xlane.xlu0 %848
        %v850 = vsel %vm633, %v779, 0.0
        %851 = vadd.xlane.f32.xlu0 %v850
        %v852 = vpop.xlane.xlu0 %851
        %v853 = vsel %vm633, %v781, 0.0
        %854 = vadd.xlane.f32.xlu0 %v853
        %v855 = vpop.xlane.xlu0 %854
        %v856 = vsel %vm633, %v783, 0.0
        %857 = vadd.xlane.f32.xlu0 %v856
        %v858 = vpop.xlane.xlu0 %857
        %v859 = vsel %vm633, %v785, 0.0
        %860 = vadd.xlane.f32.xlu0 %v859
        %v861 = vpop.xlane.xlu0 %860
        %v862 = vsel %vm633, %v787, 0.0
        %863 = vadd.xlane.f32.xlu0 %v862
        %v864 = vpop.xlane.xlu0 %863
        %v865 = vsel %vm633, %v789, 0.0
        %866 = vadd.xlane.f32.xlu0 %v865
        %v867 = vpop.xlane.xlu0 %866
        %v868 = vsel %vm633, %v791, 0.0
        %869 = vadd.xlane.f32.xlu0 %v868
        %v870 = vpop.xlane.xlu0 %869
        %v871 = vsel %vm633, %v793, 0.0
        %872 = vadd.xlane.f32.xlu0 %v871
        %v873 = vpop.xlane.xlu0 %872
        %v874 = vsel %vm633, %v795, 0.0
        %875 = vadd.xlane.f32.xlu0 %v874
        %v876 = vpop.xlane.xlu0 %875
        %v877 = vsel %vm633, %v797, 0.0
        %878 = vadd.xlane.f32.xlu0 %v877
        %v879 = vpop.xlane.xlu0 %878
        %v880 = vsel %vm633, %v799, 0.0
        %881 = vadd.xlane.f32.xlu0 %v880
        %v882 = vpop.xlane.xlu0 %881
        %v883 = vsel %vm633, %v801, 0.0
        %884 = vadd.xlane.f32.xlu0 %v883
        %v885 = vpop.xlane.xlu0 %884
        %v886 = vsel %vm633, %v803, 0.0
        %887 = vadd.xlane.f32.xlu0 %v886
        %v888 = vpop.xlane.xlu0 %887
        %v889 = vsel %vm633, %v805, 0.0
        %890 = vadd.xlane.f32.xlu0 %v889
        %v891 = vpop.xlane.xlu0 %890
        %v892 = vsel %vm633, %v807, 0.0
        %893 = vadd.xlane.f32.xlu0 %v892
        %v894 = vpop.xlane.xlu0 %893
        %v895 = vsel %vm633, %v809, 0.0
        %896 = vadd.xlane.f32.xlu0 %v895
        %v897 = vpop.xlane.xlu0 %896
        %v898 = vsel %vm633, %v811, 0.0
        %899 = vadd.xlane.f32.xlu0 %v898
        %v900 = vpop.xlane.xlu0 %899
        %v901 = vsel %vm633, %v813, 0.0
        %902 = vadd.xlane.f32.xlu0 %v901
        %v903 = vpop.xlane.xlu0 %902
        %v904 = vsel %vm633, %v815, 0.0
        %905 = vadd.xlane.f32.xlu0 %v904
        %v906 = vpop.xlane.xlu0 %905
        %v907 = vsel %vm633, %v817, 0.0
        %908 = vadd.xlane.f32.xlu0 %v907
        %v909 = vpop.xlane.xlu0 %908
        %v910 = vsel %vm633, %v819, 0.0
        %911 = vadd.xlane.f32.xlu0 %v910
        %v912 = vpop.xlane.xlu0 %911
        %v913 = vsel %vm633, %v821, 0.0
        %914 = vadd.xlane.f32.xlu0 %v913
        %v915 = vpop.xlane.xlu0 %914
        %v916 = vsel %vm633, %v823, 0.0
        %917 = vadd.xlane.f32.xlu0 %v916
        %v918 = vpop.xlane.xlu0 %917
        %v919 = vsel %vm633, %v825, 0.0
        %920 = vadd.xlane.f32.xlu0 %v919
        %v921 = vpop.xlane.xlu0 %920
        %v922 = vrcp.pop %v828
        %v923 = vrcp.pop %v831
        %v924 = vrcp.pop %v834
        %v925 = vrcp.pop %v837
        %v926 = vrcp.pop %v840
        %v927 = vrcp.pop %v843
        %v928 = vrcp.pop %v846
        %v929 = vrcp.pop %v849
        %v930 = vrcp.pop %v852
        %v931 = vrcp.pop %v855
        %v932 = vrcp.pop %v858
        %v933 = vrcp.pop %v861
        %v934 = vrcp.pop %v864
        %v935 = vrcp.pop %v867
        %v936 = vrcp.pop %v870
        %v937 = vrcp.pop %v873
        %v938 = vrcp.pop %v876
        %v939 = vrcp.pop %v879
        %v940 = vrcp.pop %v882
        %v941 = vrcp.pop %v885
        %v942 = vrcp.pop %v888
        %v943 = vrcp.pop %v891
        %v944 = vrcp.pop %v894
        %v945 = vrcp.pop %v897
        %v946 = vrcp.pop %v900
        %v947 = vrcp.pop %v903
        %v948 = vrcp.pop %v906
        %v949 = vrcp.pop %v909
        %v950 = vrcp.pop %v912
        %v951 = vrcp.pop %v915
        %v952 = vrcp.pop %v918
        %v953 = vrcp.pop %v921
        %v954 = vmul.f32 %v763, %v922
        %v955 = vmul.f32 %v765, %v923
        %v956 = vmul.f32 %v767, %v924
        %v957 = vmul.f32 %v769, %v925
        %v958 = vmul.f32 %v771, %v926
        %v959 = vmul.f32 %v773, %v927
        %v960 = vmul.f32 %v775, %v928
        %v961 = vmul.f32 %v777, %v929
        %v962 = vmul.f32 %v779, %v930
        %v963 = vmul.f32 %v781, %v931
        %v964 = vmul.f32 %v783, %v932
        %v965 = vmul.f32 %v785, %v933
        %v966 = vmul.f32 %v787, %v934
        %v967 = vmul.f32 %v789, %v935
        %v968 = vmul.f32 %v791, %v936
        %v969 = vmul.f32 %v793, %v937
        %v970 = vmul.f32 %v795, %v938
        %v971 = vmul.f32 %v797, %v939
        %v972 = vmul.f32 %v799, %v940
        %v973 = vmul.f32 %v801, %v941
        %v974 = vmul.f32 %v803, %v942
        %v975 = vmul.f32 %v805, %v943
        %v976 = vmul.f32 %v807, %v944
        %v977 = vmul.f32 %v809, %v945
        %v978 = vmul.f32 %v811, %v946
        %v979 = vmul.f32 %v813, %v947
        %v980 = vmul.f32 %v815, %v948
        %v981 = vmul.f32 %v817, %v949
        %v982 = vmul.f32 %v819, %v950
        %v983 = vmul.f32 %v821, %v951
        %v984 = vmul.f32 %v823, %v952
        %v985 = vmul.f32 %v825, %v953
        %v986 = vpack.c.bf16 %v955, %v954
        %v987 = vpack.c.bf16 %v957, %v956
        %v988 = vpack.c.bf16 %v959, %v958
        %v989 = vpack.c.bf16 %v961, %v960
        %v990 = vpack.c.bf16 %v963, %v962
        %v991 = vpack.c.bf16 %v965, %v964
        %v992 = vpack.c.bf16 %v967, %v966
        %v993 = vpack.c.bf16 %v969, %v968
        %v994 = vpack.c.bf16 %v971, %v970
        %v995 = vpack.c.bf16 %v973, %v972
        %v996 = vpack.c.bf16 %v975, %v974
        %v997 = vpack.c.bf16 %v977, %v976
        %v998 = vpack.c.bf16 %v979, %v978
        %v999 = vpack.c.bf16 %v981, %v980
        %v1000 = vpack.c.bf16 %v983, %v982
        %v1001 = vpack.c.bf16 %v985, %v984
        %v1002 = vld [vmem:[%s251] sm:$0xff]
        %v1003 = vld [vmem:[%s251 + $0x8] sm:$0xf]
        %v1004 = vld [vmem:[%s251 + $0xc] sm:$0xff]
        %v1005 = vld [vmem:[%s251 + $0x14] sm:$0xf]
        %v1006 = vld [vmem:[%s251 + $0x18] sm:$0xff]
        %v1007 = vld [vmem:[%s251 + $0x20] sm:$0xf]
        %v1008 = vld [vmem:[%s251 + $0x24] sm:$0xff]
        %v1009 = vld [vmem:[%s251 + $0x2c] sm:$0xf]
        %v1010 = vld [vmem:[%s251 + $0x30] sm:$0xff]
        %v1011 = vld [vmem:[%s251 + $0x38] sm:$0xf]
        %v1012 = vld [vmem:[%s251 + $0x3c] sm:$0xff]
        %v1013 = vld [vmem:[%s251 + $0x44] sm:$0xf]
        %v1014 = vld [vmem:[%s251 + $0x48] sm:$0xff]
        %v1015 = vld [vmem:[%s251 + $0x50] sm:$0xf]
        %v1016 = vld [vmem:[%s251 + $0x54] sm:$0xff]
        %v1017 = vld [vmem:[%s251 + $0x5c] sm:$0xf]
        %v1034 = vunpack.c.l.b16 %v1002
        %v1035 = vunpack.c.h.b16 %v1002
        %v1036 = vunpack.c.l.b16 %v1003
        %v1037 = vunpack.c.l.b16 %v1004
        %v1038 = vunpack.c.h.b16 %v1004
        %v1039 = vunpack.c.l.b16 %v1005
        %v1040 = vunpack.c.l.b16 %v1006
        %v1041 = vunpack.c.h.b16 %v1006
        %v1042 = vunpack.c.l.b16 %v1007
        %v1043 = vunpack.c.l.b16 %v1008
        %v1044 = vunpack.c.h.b16 %v1008
        %v1045 = vunpack.c.l.b16 %v1009
        %v1046 = vunpack.c.l.b16 %v1010
        %v1047 = vunpack.c.h.b16 %v1010
        %v1048 = vunpack.c.l.b16 %v1011
        %v1049 = vunpack.c.l.b16 %v1012
        %v1050 = vunpack.c.h.b16 %v1012
        %v1051 = vunpack.c.l.b16 %v1013
        %v1052 = vunpack.c.l.b16 %v1014
        %v1053 = vunpack.c.h.b16 %v1014
        %v1054 = vunpack.c.l.b16 %v1015
        %v1055 = vunpack.c.l.b16 %v1016
        %v1056 = vunpack.c.h.b16 %v1016
        %v1057 = vunpack.c.l.b16 %v1017
        %v1058 = vpack.c.b16 %v1037, %v1034
        %v1059 = vpack.c.b16 %v1038, %v1035
        %v1060 = vpack.c.b16 %v1039, %v1036
        %v1061 = vpack.c.b16 %v1043, %v1040
        %v1062 = vpack.c.b16 %v1044, %v1041
        %v1063 = vpack.c.b16 %v1045, %v1042
        %v1064 = vpack.c.b16 %v1049, %v1046
        %v1065 = vpack.c.b16 %v1050, %v1047
        %v1066 = vpack.c.b16 %v1051, %v1048
        %v1067 = vpack.c.b16 %v1055, %v1052
        %v1068 = vpack.c.b16 %v1056, %v1053
        %v1069 = vpack.c.b16 %v1057, %v1054
        %v1083 = vsel %vm633, %v986, 0
        %v1086 = vsel %vm633, %v987, 0
        %v1089 = vsel %vm633, %v988, 0
        %v1092 = vsel %vm633, %v989, 0
        %v1095 = vsel %vm633, %v990, 0
        %v1098 = vsel %vm633, %v991, 0
        %v1101 = vsel %vm633, %v992, 0
        %v1104 = vsel %vm633, %v993, 0
        %v1107 = vsel %vm633, %v994, 0
        %v1110 = vsel %vm633, %v995, 0
        %v1113 = vsel %vm633, %v996, 0
        %v1116 = vsel %vm633, %v997, 0
        %v1119 = vsel %vm633, %v998, 0
        %v1122 = vsel %vm633, %v999, 0
        %v1125 = vsel %vm633, %v1000, 0
        %v1128 = vsel %vm633, %v1001, 0
        %1130 = vmatprep.subr.bf16.mxu0 %v1059
        %1131 = vmatpush1.bf16.msra.mxu0 %v1058
        %1132 = vmatprep.subr.bf16.mxu0 %v1062
        %1133 = vmatpush1.bf16.msra.mxu0 %v1061
        %1134 = vmatprep.subr.bf16.mxu0 %v1065
        %1135 = vmatpush1.bf16.msra.mxu0 %v1064
        %1136 = vmatprep.subr.bf16.mxu0 %v1068
        %1137 = vmatpush1.bf16.msra.mxu0 %v1067
        %1138 = vmatprep.subr.bf16.mxu0 0
        %1139 = vmatpush1.bf16.msra.mxu0 0
        %1140 = vmatprep.subr.bf16.mxu0 0
        %1141 = vmatpush1.bf16.msra.mxu0 0
        %1142 = vmatprep.subr.bf16.mxu0 0
        %1143 = vmatpush1.bf16.msra.mxu0 0
        %1144 = vmatprep.subr.bf16.mxu0 0
        %1145 = vmatpush1.bf16.msra.mxu0 0
        %1146 = vmatprep.subr.bf16.mxu0 0
        %1147 = vmatpush1.bf16.msra.mxu0 0
        %1148 = vmatprep.subr.bf16.mxu0 0
        %1149 = vmatpush1.bf16.msra.mxu0 0
        %1150 = vmatprep.subr.bf16.mxu0 0
        %1151 = vmatpush1.bf16.msra.mxu0 0
        %1152 = vmatprep.subr.bf16.mxu0 0
        %1153 = vmatpush1.bf16.msra.mxu0 0
        %1154 = vmatprep.subr.bf16.mxu0 0
        %1155 = vmatpush1.bf16.msra.mxu0 0
        %1156 = vmatprep.subr.bf16.mxu0 0
        %1157 = vmatpush1.bf16.msra.mxu0 0
        %1158 = vmatprep.subr.bf16.mxu0 0
        %1159 = vmatpush1.bf16.msra.mxu0 0
        %1160 = vmatprep.subr.bf16.mxu0 0
        %1161 = vmatpush1.bf16.msra.mxu0 0
        %1162 = vmatprep.mubr.bf16.mxu0 0
        %1163 = vmatmul.mubr.bf16.gmra.mrb[0].mxu0 %v1083
        %v1164 = vpop.f32.mrb[0].mxu0
        %v1165 = vadd.f32 0.0, %v1164
        %v1166 = vpop.f32.mrb[0].mxu0
        %v1167 = vadd.f32 0.0, %v1166
        %v1168 = vpop.f32.mrb[0].mxu0
        %v1169 = vadd.f32 0.0, %v1168
        %v1170 = vpop.f32.mrb[0].mxu0
        %v1171 = vadd.f32 0.0, %v1170
        %1172 = vmatprep.mubr.bf16.mxu0 0
        %1173 = vmatmul.mubr.bf16.gmra.mrb[0].mxu0 %v1086
        %v1174 = vpop.f32.mrb[0].mxu0
        %v1175 = vadd.f32 0.0, %v1174
        %v1176 = vpop.f32.mrb[0].mxu0
        %v1177 = vadd.f32 0.0, %v1176
        %v1178 = vpop.f32.mrb[0].mxu0
        %v1179 = vadd.f32 0.0, %v1178
        %v1180 = vpop.f32.mrb[0].mxu0
        %v1181 = vadd.f32 0.0, %v1180
        %1182 = vmatprep.mubr.bf16.mxu0 0
        %1183 = vmatmul.mubr.bf16.gmra.mrb[0].mxu0 %v1089
        %v1184 = vpop.f32.mrb[0].mxu0
        %v1185 = vadd.f32 0.0, %v1184
        %v1186 = vpop.f32.mrb[0].mxu0
        %v1187 = vadd.f32 0.0, %v1186
        %v1188 = vpop.f32.mrb[0].mxu0
        %v1189 = vadd.f32 0.0, %v1188
        %v1190 = vpop.f32.mrb[0].mxu0
        %v1191 = vadd.f32 0.0, %v1190
        %1192 = vmatprep.mubr.bf16.mxu0 0
        %1193 = vmatmul.mubr.bf16.gmra.mrb[0].mxu0 %v1092
        %v1194 = vpop.f32.mrb[0].mxu0
        %v1195 = vadd.f32 0.0, %v1194
        %v1196 = vpop.f32.mrb[0].mxu0
        %v1197 = vadd.f32 0.0, %v1196
        %v1198 = vpop.f32.mrb[0].mxu0
        %v1199 = vadd.f32 0.0, %v1198
        %v1200 = vpop.f32.mrb[0].mxu0
        %v1201 = vadd.f32 0.0, %v1200
        %1202 = vmatprep.mubr.bf16.mxu0 0
        %1203 = vmatmul.mubr.bf16.gmra.mrb[0].mxu0 %v1095
        %v1204 = vpop.f32.mrb[0].mxu0
        %v1205 = vadd.f32 0.0, %v1204
        %v1206 = vpop.f32.mrb[0].mxu0
        %v1207 = vadd.f32 0.0, %v1206
        %v1208 = vpop.f32.mrb[0].mxu0
        %v1209 = vadd.f32 0.0, %v1208
        %v1210 = vpop.f32.mrb[0].mxu0
        %v1211 = vadd.f32 0.0, %v1210
        %1212 = vmatprep.mubr.bf16.mxu0 0
        %1213 = vmatmul.mubr.bf16.gmra.mrb[0].mxu0 %v1098
        %v1214 = vpop.f32.mrb[0].mxu0
        %v1215 = vadd.f32 0.0, %v1214
        %v1216 = vpop.f32.mrb[0].mxu0
        %v1217 = vadd.f32 0.0, %v1216
        %v1218 = vpop.f32.mrb[0].mxu0
        %v1219 = vadd.f32 0.0, %v1218
        %v1220 = vpop.f32.mrb[0].mxu0
        %v1221 = vadd.f32 0.0, %v1220
        %1222 = vmatprep.mubr.bf16.mxu0 0
        %1223 = vmatmul.mubr.bf16.gmra.mrb[0].mxu0 %v1101
        %v1224 = vpop.f32.mrb[0].mxu0
        %v1225 = vadd.f32 0.0, %v1224
        %v1226 = vpop.f32.mrb[0].mxu0
        %v1227 = vadd.f32 0.0, %v1226
        %v1228 = vpop.f32.mrb[0].mxu0
        %v1229 = vadd.f32 0.0, %v1228
        %v1230 = vpop.f32.mrb[0].mxu0
        %v1231 = vadd.f32 0.0, %v1230
        %1232 = vmatprep.mubr.bf16.mxu0 0
        %1233 = vmatmul.mubr.bf16.gmra.mrb[0].mxu0 %v1104
        %v1234 = vpop.f32.mrb[0].mxu0
        %v1235 = vadd.f32 0.0, %v1234
        %v1236 = vpop.f32.mrb[0].mxu0
        %v1237 = vadd.f32 0.0, %v1236
        %v1238 = vpop.f32.mrb[0].mxu0
        %v1239 = vadd.f32 0.0, %v1238
        %v1240 = vpop.f32.mrb[0].mxu0
        %v1241 = vadd.f32 0.0, %v1240
        %1242 = vmatprep.mubr.bf16.mxu0 0
        %1243 = vmatmul.mubr.bf16.gmra.mrb[0].mxu0 %v1107
        %v1244 = vpop.f32.mrb[0].mxu0
        %v1245 = vadd.f32 0.0, %v1244
        %v1246 = vpop.f32.mrb[0].mxu0
        %v1247 = vadd.f32 0.0, %v1246
        %v1248 = vpop.f32.mrb[0].mxu0
        %v1249 = vadd.f32 0.0, %v1248
        %v1250 = vpop.f32.mrb[0].mxu0
        %v1251 = vadd.f32 0.0, %v1250
        %1252 = vmatprep.mubr.bf16.mxu0 0
        %1253 = vmatmul.mubr.bf16.gmra.mrb[0].mxu0 %v1110
        %v1254 = vpop.f32.mrb[0].mxu0
        %v1255 = vadd.f32 0.0, %v1254
        %v1256 = vpop.f32.mrb[0].mxu0
        %v1257 = vadd.f32 0.0, %v1256
        %v1258 = vpop.f32.mrb[0].mxu0
        %v1259 = vadd.f32 0.0, %v1258
        %v1260 = vpop.f32.mrb[0].mxu0
        %v1261 = vadd.f32 0.0, %v1260
        %1262 = vmatprep.mubr.bf16.mxu0 0
        %1263 = vmatmul.mubr.bf16.gmra.mrb[0].mxu0 %v1113
        %v1264 = vpop.f32.mrb[0].mxu0
        %v1265 = vadd.f32 0.0, %v1264
        %v1266 = vpop.f32.mrb[0].mxu0
        %v1267 = vadd.f32 0.0, %v1266
        %v1268 = vpop.f32.mrb[0].mxu0
        %v1269 = vadd.f32 0.0, %v1268
        %v1270 = vpop.f32.mrb[0].mxu0
        %v1271 = vadd.f32 0.0, %v1270
        %1272 = vmatprep.mubr.bf16.mxu0 0
        %1273 = vmatmul.mubr.bf16.gmra.mrb[0].mxu0 %v1116
        %v1274 = vpop.f32.mrb[0].mxu0
        %v1275 = vadd.f32 0.0, %v1274
        %v1276 = vpop.f32.mrb[0].mxu0
        %v1277 = vadd.f32 0.0, %v1276
        %v1278 = vpop.f32.mrb[0].mxu0
        %v1279 = vadd.f32 0.0, %v1278
        %v1280 = vpop.f32.mrb[0].mxu0
        %v1281 = vadd.f32 0.0, %v1280
        %1282 = vmatprep.mubr.bf16.mxu0 0
        %1283 = vmatmul.mubr.bf16.gmra.mrb[0].mxu0 %v1119
        %v1284 = vpop.f32.mrb[0].mxu0
        %v1285 = vadd.f32 0.0, %v1284
        %v1286 = vpop.f32.mrb[0].mxu0
        %v1287 = vadd.f32 0.0, %v1286
        %v1288 = vpop.f32.mrb[0].mxu0
        %v1289 = vadd.f32 0.0, %v1288
        %v1290 = vpop.f32.mrb[0].mxu0
        %v1291 = vadd.f32 0.0, %v1290
        %1292 = vmatprep.mubr.bf16.mxu0 0
        %1293 = vmatmul.mubr.bf16.gmra.mrb[0].mxu0 %v1122
        %v1294 = vpop.f32.mrb[0].mxu0
        %v1295 = vadd.f32 0.0, %v1294
        %v1296 = vpop.f32.mrb[0].mxu0
        %v1297 = vadd.f32 0.0, %v1296
        %v1298 = vpop.f32.mrb[0].mxu0
        %v1299 = vadd.f32 0.0, %v1298
        %v1300 = vpop.f32.mrb[0].mxu0
        %v1301 = vadd.f32 0.0, %v1300
        %1302 = vmatprep.mubr.bf16.mxu0 0
        %1303 = vmatmul.mubr.bf16.gmra.mrb[0].mxu0 %v1125
        %v1304 = vpop.f32.mrb[0].mxu0
        %v1305 = vadd.f32 0.0, %v1304
        %v1306 = vpop.f32.mrb[0].mxu0
        %v1307 = vadd.f32 0.0, %v1306
        %v1308 = vpop.f32.mrb[0].mxu0
        %v1309 = vadd.f32 0.0, %v1308
        %v1310 = vpop.f32.mrb[0].mxu0
        %v1311 = vadd.f32 0.0, %v1310
        %1312 = vmatprep.mubr.bf16.mxu0 0
        %1313 = vmatmul.mubr.bf16.gmra.mrb[0].mxu0 %v1128
        %v1314 = vpop.f32.mrb[0].mxu0
        %v1315 = vadd.f32 0.0, %v1314
        %v1316 = vpop.f32.mrb[0].mxu0
        %v1317 = vadd.f32 0.0, %v1316
        %v1318 = vpop.f32.mrb[0].mxu0
        %v1319 = vadd.f32 0.0, %v1318
        %v1320 = vpop.f32.mrb[0].mxu0
        %v1321 = vadd.f32 0.0, %v1320
        %1322 = vdwg.mxu0
        %1323 = vmatprep.subr.bf16.mxu0 0
        %1324 = vmatpush1.bf16.msra.mxu0 %v1060
        %1325 = vmatprep.subr.bf16.mxu0 0
        %1326 = vmatpush1.bf16.msra.mxu0 %v1063
        %1327 = vmatprep.subr.bf16.mxu0 0
        %1328 = vmatpush1.bf16.msra.mxu0 %v1066
        %1329 = vmatprep.subr.bf16.mxu0 0
        %1330 = vmatpush1.bf16.msra.mxu0 %v1069
        %1331 = vmatprep.subr.bf16.mxu0 0
        %1332 = vmatpush1.bf16.msra.mxu0 0
        %1333 = vmatprep.subr.bf16.mxu0 0
        %1334 = vmatpush1.bf16.msra.mxu0 0
        %1335 = vmatprep.subr.bf16.mxu0 0
        %1336 = vmatpush1.bf16.msra.mxu0 0
        %1337 = vmatprep.subr.bf16.mxu0 0
        %1338 = vmatpush1.bf16.msra.mxu0 0
        %1339 = vmatprep.subr.bf16.mxu0 0
        %1340 = vmatpush1.bf16.msra.mxu0 0
        %1341 = vmatprep.subr.bf16.mxu0 0
        %1342 = vmatpush1.bf16.msra.mxu0 0
        %1343 = vmatprep.subr.bf16.mxu0 0
        %1344 = vmatpush1.bf16.msra.mxu0 0
        %1345 = vmatprep.subr.bf16.mxu0 0
        %1346 = vmatpush1.bf16.msra.mxu0 0
        %1347 = vmatprep.subr.bf16.mxu0 0
        %1348 = vmatpush1.bf16.msra.mxu0 0
        %1349 = vmatprep.subr.bf16.mxu0 0
        %1350 = vmatpush1.bf16.msra.mxu0 0
        %1351 = vmatprep.subr.bf16.mxu0 0
        %1352 = vmatpush1.bf16.msra.mxu0 0
        %1353 = vmatprep.subr.bf16.mxu0 0
        %1354 = vmatpush1.bf16.msra.mxu0 0
        %1355 = vmatprep.mubr.bf16.mxu0 0
        %1356 = vmatmul.mubr.bf16.gmra.mrb[0].mxu0 %v1083
        %v1357 = vpop.f32.mrb[0].mxu0
        %v1358 = vadd.f32 0.0, %v1357
        %v1359 = vpop.f32.mrb[0].mxu0
        %v1360 = vpop.f32.mrb[0].mxu0
        %v1361 = vadd.f32 0.0, %v1360
        %v1362 = vpop.f32.mrb[0].mxu0
        %1363 = vmatprep.mubr.bf16.mxu0 0
        %1364 = vmatmul.mubr.bf16.gmra.mrb[0].mxu0 %v1086
        %v1365 = vpop.f32.mrb[0].mxu0
        %v1366 = vadd.f32 0.0, %v1365
        %v1367 = vpop.f32.mrb[0].mxu0
        %v1368 = vpop.f32.mrb[0].mxu0
        %v1369 = vadd.f32 0.0, %v1368
        %v1370 = vpop.f32.mrb[0].mxu0
        %1371 = vmatprep.mubr.bf16.mxu0 0
        %1372 = vmatmul.mubr.bf16.gmra.mrb[0].mxu0 %v1089
        %v1373 = vpop.f32.mrb[0].mxu0
        %v1374 = vadd.f32 0.0, %v1373
        %v1375 = vpop.f32.mrb[0].mxu0
        %v1376 = vpop.f32.mrb[0].mxu0
        %v1377 = vadd.f32 0.0, %v1376
        %v1378 = vpop.f32.mrb[0].mxu0
        %1379 = vmatprep.mubr.bf16.mxu0 0
        %1380 = vmatmul.mubr.bf16.gmra.mrb[0].mxu0 %v1092
        %v1381 = vpop.f32.mrb[0].mxu0
        %v1382 = vadd.f32 0.0, %v1381
        %v1383 = vpop.f32.mrb[0].mxu0
        %v1384 = vpop.f32.mrb[0].mxu0
        %v1385 = vadd.f32 0.0, %v1384
        %v1386 = vpop.f32.mrb[0].mxu0
        %1387 = vmatprep.mubr.bf16.mxu0 0
        %1388 = vmatmul.mubr.bf16.gmra.mrb[0].mxu0 %v1095
        %v1389 = vpop.f32.mrb[0].mxu0
        %v1390 = vadd.f32 0.0, %v1389
        %v1391 = vpop.f32.mrb[0].mxu0
        %v1392 = vpop.f32.mrb[0].mxu0
        %v1393 = vadd.f32 0.0, %v1392
        %v1394 = vpop.f32.mrb[0].mxu0
        %1395 = vmatprep.mubr.bf16.mxu0 0
        %1396 = vmatmul.mubr.bf16.gmra.mrb[0].mxu0 %v1098
        %v1397 = vpop.f32.mrb[0].mxu0
        %v1398 = vadd.f32 0.0, %v1397
        %v1399 = vpop.f32.mrb[0].mxu0
        %v1400 = vpop.f32.mrb[0].mxu0
        %v1401 = vadd.f32 0.0, %v1400
        %v1402 = vpop.f32.mrb[0].mxu0
        %1403 = vmatprep.mubr.bf16.mxu0 0
        %1404 = vmatmul.mubr.bf16.gmra.mrb[0].mxu0 %v1101
        %v1405 = vpop.f32.mrb[0].mxu0
        %v1406 = vadd.f32 0.0, %v1405
        %v1407 = vpop.f32.mrb[0].mxu0
        %v1408 = vpop.f32.mrb[0].mxu0
        %v1409 = vadd.f32 0.0, %v1408
        %v1410 = vpop.f32.mrb[0].mxu0
        %1411 = vmatprep.mubr.bf16.mxu0 0
        %1412 = vmatmul.mubr.bf16.gmra.mrb[0].mxu0 %v1104
        %v1413 = vpop.f32.mrb[0].mxu0
        %v1414 = vadd.f32 0.0, %v1413
        %v1415 = vpop.f32.mrb[0].mxu0
        %v1416 = vpop.f32.mrb[0].mxu0
        %v1417 = vadd.f32 0.0, %v1416
        %v1418 = vpop.f32.mrb[0].mxu0
        %1419 = vmatprep.mubr.bf16.mxu0 0
        %1420 = vmatmul.mubr.bf16.gmra.mrb[0].mxu0 %v1107
        %v1421 = vpop.f32.mrb[0].mxu0
        %v1422 = vadd.f32 0.0, %v1421
        %v1423 = vpop.f32.mrb[0].mxu0
        %v1424 = vpop.f32.mrb[0].mxu0
        %v1425 = vadd.f32 0.0, %v1424
        %v1426 = vpop.f32.mrb[0].mxu0
        %1427 = vmatprep.mubr.bf16.mxu0 0
        %1428 = vmatmul.mubr.bf16.gmra.mrb[0].mxu0 %v1110
        %v1429 = vpop.f32.mrb[0].mxu0
        %v1430 = vadd.f32 0.0, %v1429
        %v1431 = vpop.f32.mrb[0].mxu0
        %v1432 = vpop.f32.mrb[0].mxu0
        %v1433 = vadd.f32 0.0, %v1432
        %v1434 = vpop.f32.mrb[0].mxu0
        %1435 = vmatprep.mubr.bf16.mxu0 0
        %1436 = vmatmul.mubr.bf16.gmra.mrb[0].mxu0 %v1113
        %v1437 = vpop.f32.mrb[0].mxu0
        %v1438 = vadd.f32 0.0, %v1437
        %v1439 = vpop.f32.mrb[0].mxu0
        %v1440 = vpop.f32.mrb[0].mxu0
        %v1441 = vadd.f32 0.0, %v1440
        %v1442 = vpop.f32.mrb[0].mxu0
        %1443 = vmatprep.mubr.bf16.mxu0 0
        %1444 = vmatmul.mubr.bf16.gmra.mrb[0].mxu0 %v1116
        %v1445 = vpop.f32.mrb[0].mxu0
        %v1446 = vadd.f32 0.0, %v1445
        %v1447 = vpop.f32.mrb[0].mxu0
        %v1448 = vpop.f32.mrb[0].mxu0
        %v1449 = vadd.f32 0.0, %v1448
        %v1450 = vpop.f32.mrb[0].mxu0
        %1451 = vmatprep.mubr.bf16.mxu0 0
        %1452 = vmatmul.mubr.bf16.gmra.mrb[0].mxu0 %v1119
        %v1453 = vpop.f32.mrb[0].mxu0
        %v1454 = vadd.f32 0.0, %v1453
        %v1455 = vpop.f32.mrb[0].mxu0
        %v1456 = vpop.f32.mrb[0].mxu0
        %v1457 = vadd.f32 0.0, %v1456
        %v1458 = vpop.f32.mrb[0].mxu0
        %1459 = vmatprep.mubr.bf16.mxu0 0
        %1460 = vmatmul.mubr.bf16.gmra.mrb[0].mxu0 %v1122
        %v1461 = vpop.f32.mrb[0].mxu0
        %v1462 = vadd.f32 0.0, %v1461
        %v1463 = vpop.f32.mrb[0].mxu0
        %v1464 = vpop.f32.mrb[0].mxu0
        %v1465 = vadd.f32 0.0, %v1464
        %v1466 = vpop.f32.mrb[0].mxu0
        %1467 = vmatprep.mubr.bf16.mxu0 0
        %1468 = vmatmul.mubr.bf16.gmra.mrb[0].mxu0 %v1125
        %v1469 = vpop.f32.mrb[0].mxu0
        %v1470 = vadd.f32 0.0, %v1469
        %v1471 = vpop.f32.mrb[0].mxu0
        %v1472 = vpop.f32.mrb[0].mxu0
        %v1473 = vadd.f32 0.0, %v1472
        %v1474 = vpop.f32.mrb[0].mxu0
        %1475 = vmatprep.mubr.bf16.mxu0 0
        %1476 = vmatmul.mubr.bf16.gmra.mrb[0].mxu0 %v1128
        %v1477 = vpop.f32.mrb[0].mxu0
        %v1478 = vadd.f32 0.0, %v1477
        %v1479 = vpop.f32.mrb[0].mxu0
        %v1480 = vpop.f32.mrb[0].mxu0
        %v1481 = vadd.f32 0.0, %v1480
        %v1482 = vpop.f32.mrb[0].mxu0
        %1483 = vdwg.mxu0
        %1484 = vst [vmem:[%s283] sm:$0xff] %v1165
        %1485 = vst [vmem:[%s283 + $0x8] sm:$0xff] %v1167
        %vm1486 = vcmask 261120
        %1487 = vst.msk [vmem:[%s283 + $0x10] sm:$0xff] %vm1486, %v1358
        %1488 = vst [vmem:[%s283 + $0x18] sm:$0xff] %v1169
        %1489 = vst [vmem:[%s283 + $0x20] sm:$0xff] %v1171
        %1490 = vst.msk [vmem:[%s283 + $0x28] sm:$0xff] %vm1486, %v1361
        %1491 = vst [vmem:[%s283 + $0x30] sm:$0xff] %v1175
        %1492 = vst [vmem:[%s283 + $0x38] sm:$0xff] %v1177
        %1493 = vst.msk [vmem:[%s283 + $0x40] sm:$0xff] %vm1486, %v1366
        %1494 = vst [vmem:[%s283 + $0x48] sm:$0xff] %v1179
        %1495 = vst [vmem:[%s283 + $0x50] sm:$0xff] %v1181
        %1496 = vst.msk [vmem:[%s283 + $0x58] sm:$0xff] %vm1486, %v1369
        %1497 = vst [vmem:[%s283 + $0x60] sm:$0xff] %v1185
        %1498 = vst [vmem:[%s283 + $0x68] sm:$0xff] %v1187
        %1499 = vst.msk [vmem:[%s283 + $0x70] sm:$0xff] %vm1486, %v1374
        %1500 = vst [vmem:[%s283 + $0x78] sm:$0xff] %v1189
        %1501 = vst [vmem:[%s283 + $0x80] sm:$0xff] %v1191
        %1502 = vst.msk [vmem:[%s283 + $0x88] sm:$0xff] %vm1486, %v1377
        %1503 = vst [vmem:[%s283 + $0x90] sm:$0xff] %v1195
        %1504 = vst [vmem:[%s283 + $0x98] sm:$0xff] %v1197
        %1505 = vst.msk [vmem:[%s283 + $0xa0] sm:$0xff] %vm1486, %v1382
        %1506 = vst [vmem:[%s283 + $0xa8] sm:$0xff] %v1199
        %1507 = vst [vmem:[%s283 + $0xb0] sm:$0xff] %v1201
        %1508 = vst.msk [vmem:[%s283 + $0xb8] sm:$0xff] %vm1486, %v1385
        %1509 = vst [vmem:[%s283 + $0xc0] sm:$0xff] %v1205
        %1510 = vst [vmem:[%s283 + $0xc8] sm:$0xff] %v1207
        %1511 = vst.msk [vmem:[%s283 + $0xd0] sm:$0xff] %vm1486, %v1390
        %1512 = vst [vmem:[%s283 + $0xd8] sm:$0xff] %v1209
        %1513 = vst [vmem:[%s283 + $0xe0] sm:$0xff] %v1211
        %1514 = vst.msk [vmem:[%s283 + $0xe8] sm:$0xff] %vm1486, %v1393
        %1515 = vst [vmem:[%s283 + $0xf0] sm:$0xff] %v1215
        %1516 = vst [vmem:[%s283 + $0xf8] sm:$0xff] %v1217
        %1517 = vst.msk [vmem:[%s283 + $0x100] sm:$0xff] %vm1486, %v1398
        %1518 = vst [vmem:[%s283 + $0x108] sm:$0xff] %v1219
        %1519 = vst [vmem:[%s283 + $0x110] sm:$0xff] %v1221
        %1520 = vst.msk [vmem:[%s283 + $0x118] sm:$0xff] %vm1486, %v1401
        %1521 = vst [vmem:[%s283 + $0x120] sm:$0xff] %v1225
        %1522 = vst [vmem:[%s283 + $0x128] sm:$0xff] %v1227
        %1523 = vst.msk [vmem:[%s283 + $0x130] sm:$0xff] %vm1486, %v1406
        %1524 = vst [vmem:[%s283 + $0x138] sm:$0xff] %v1229
        %1525 = vst [vmem:[%s283 + $0x140] sm:$0xff] %v1231
        %1526 = vst.msk [vmem:[%s283 + $0x148] sm:$0xff] %vm1486, %v1409
        %1527 = vst [vmem:[%s283 + $0x150] sm:$0xff] %v1235
        %1528 = vst [vmem:[%s283 + $0x158] sm:$0xff] %v1237
        %1529 = vst.msk [vmem:[%s283 + $0x160] sm:$0xff] %vm1486, %v1414
        %1530 = vst [vmem:[%s283 + $0x168] sm:$0xff] %v1239
        %1531 = vst [vmem:[%s283 + $0x170] sm:$0xff] %v1241
        %1532 = vst.msk [vmem:[%s283 + $0x178] sm:$0xff] %vm1486, %v1417
        %1533 = vst [vmem:[%s283 + $0x180] sm:$0xff] %v1245
        %1534 = vst [vmem:[%s283 + $0x188] sm:$0xff] %v1247
        %1535 = vst.msk [vmem:[%s283 + $0x190] sm:$0xff] %vm1486, %v1422
        %1536 = vst [vmem:[%s283 + $0x198] sm:$0xff] %v1249
        %1537 = vst [vmem:[%s283 + $0x1a0] sm:$0xff] %v1251
        %1538 = vst.msk [vmem:[%s283 + $0x1a8] sm:$0xff] %vm1486, %v1425
        %1539 = vst [vmem:[%s283 + $0x1b0] sm:$0xff] %v1255
        %1540 = vst [vmem:[%s283 + $0x1b8] sm:$0xff] %v1257
        %1541 = vst.msk [vmem:[%s283 + $0x1c0] sm:$0xff] %vm1486, %v1430
        %1542 = vst [vmem:[%s283 + $0x1c8] sm:$0xff] %v1259
        %1543 = vst [vmem:[%s283 + $0x1d0] sm:$0xff] %v1261
        %1544 = vst.msk [vmem:[%s283 + $0x1d8] sm:$0xff] %vm1486, %v1433
        %1545 = vst [vmem:[%s283 + $0x1e0] sm:$0xff] %v1265
        %1546 = vst [vmem:[%s283 + $0x1e8] sm:$0xff] %v1267
        %1547 = vst.msk [vmem:[%s283 + $0x1f0] sm:$0xff] %vm1486, %v1438
        %1548 = vst [vmem:[%s283 + $0x1f8] sm:$0xff] %v1269
        %1549 = vst [vmem:[%s283 + $0x200] sm:$0xff] %v1271
        %1550 = vst.msk [vmem:[%s283 + $0x208] sm:$0xff] %vm1486, %v1441
        %1551 = vst [vmem:[%s283 + $0x210] sm:$0xff] %v1275
        %1552 = vst [vmem:[%s283 + $0x218] sm:$0xff] %v1277
        %1553 = vst.msk [vmem:[%s283 + $0x220] sm:$0xff] %vm1486, %v1446
        %1554 = vst [vmem:[%s283 + $0x228] sm:$0xff] %v1279
        %1555 = vst [vmem:[%s283 + $0x230] sm:$0xff] %v1281
        %1556 = vst.msk [vmem:[%s283 + $0x238] sm:$0xff] %vm1486, %v1449
        %1557 = vst [vmem:[%s283 + $0x240] sm:$0xff] %v1285
        %1558 = vst [vmem:[%s283 + $0x248] sm:$0xff] %v1287
        %1559 = vst.msk [vmem:[%s283 + $0x250] sm:$0xff] %vm1486, %v1454
        %1560 = vst [vmem:[%s283 + $0x258] sm:$0xff] %v1289
        %1561 = vst [vmem:[%s283 + $0x260] sm:$0xff] %v1291
        %1562 = vst.msk [vmem:[%s283 + $0x268] sm:$0xff] %vm1486, %v1457
        %1563 = vst [vmem:[%s283 + $0x270] sm:$0xff] %v1295
        %1564 = vst [vmem:[%s283 + $0x278] sm:$0xff] %v1297
        %1565 = vst.msk [vmem:[%s283 + $0x280] sm:$0xff] %vm1486, %v1462
        %1566 = vst [vmem:[%s283 + $0x288] sm:$0xff] %v1299
        %1567 = vst [vmem:[%s283 + $0x290] sm:$0xff] %v1301
        %1568 = vst.msk [vmem:[%s283 + $0x298] sm:$0xff] %vm1486, %v1465
        %1569 = vst [vmem:[%s283 + $0x2a0] sm:$0xff] %v1305
        %1570 = vst [vmem:[%s283 + $0x2a8] sm:$0xff] %v1307
        %1571 = vst.msk [vmem:[%s283 + $0x2b0] sm:$0xff] %vm1486, %v1470
        %1572 = vst [vmem:[%s283 + $0x2b8] sm:$0xff] %v1309
        %1573 = vst [vmem:[%s283 + $0x2c0] sm:$0xff] %v1311
        %1574 = vst.msk [vmem:[%s283 + $0x2c8] sm:$0xff] %vm1486, %v1473
        %1575 = vst [vmem:[%s283 + $0x2d0] sm:$0xff] %v1315
        %1576 = vst [vmem:[%s283 + $0x2d8] sm:$0xff] %v1317
        %1577 = vst.msk [vmem:[%s283 + $0x2e0] sm:$0xff] %vm1486, %v1478
        %1578 = vst [vmem:[%s283 + $0x2e8] sm:$0xff] %v1319
        %1579 = vst [vmem:[%s283 + $0x2f0] sm:$0xff] %v1321
        %1580 = vst.msk [vmem:[%s283 + $0x2f8] sm:$0xff] %vm1486, %v1481
        %s1581 = sand.u32 %s125, 1
        %s1582 = scalar_lea.sflag [#allocation4], %s1581
        %s1583 = sand.u32 %s125, 1
        %s1584 = smul.addr %s1583, 768
        %s1585 = scalar_lea.vmem [#allocation8], %s1584
        // Predicated region
        $region45: #{cross_scale_attention_forward.5} parent=31 // pred_check
          %p1586 = pneg %p135
        $region46: #{cross_scale_attention_forward.5} parent=31 // pred_check_branch
          %1588 = sbr.rel (%p1586) target = $region48
        $region47: #{cross_scale_attention_forward.5} parent=31 // pred_region
          %s1589 = smul.u32 32, %s28
          %s1591 = ssub.s32 12288, 12288
          %1592 = vsyncadd %s1582, %s1591
          %s1593 = smul.addr %s1589, 3
          %s1594 = smul.addr %s27, 96
          %s1595 = sadd.s32 %s1593, %s1594
          %s1596 = smul.addr %s1595, 128
          %s1597 = scalar_lea.hbm %s3, %s1596
          %s1598 = sshll.u32 %s1585, 4
          %s1599 = int_to_ptr.vmem [resolvable:$true] %s1598
          %1604 = dma.vmem_to_hbm [thread:$0]  %s1599, 12288, %s1597, %s1582, 384, 384, 24
        $region48: #{cross_scale_attention_forward.5} parent=31 // pred_fallthru
          _
      $region32: #{cross_scale_attention_forward.5} parent=5 // pred_fallthru
        _
      %p1605 = scmp.le.s32.totalorder 2, %s18
      // Predicated region
      $region49: #{cross_scale_attention_forward.5} parent=5 // pred_check
        %p1606 = pneg %p1605
      $region50: #{cross_scale_attention_forward.5} parent=5 // pred_check_branch
        %1608 = sbr.rel (%p1606) target = $region52
      $region51: #{cross_scale_attention_forward.5} parent=5 // pred_region
        %s1609 = ssub.s32 %s18, 2
        // Predicated region
        $region53: #{cross_scale_attention_forward.5} parent=51 // pred_check
          %p1610 = pneg %p141
        $region54: #{cross_scale_attention_forward.5} parent=51 // pred_check_branch
          %1612 = sbr.rel (%p1610) target = $region56
        $region55: #{cross_scale_attention_forward.5} parent=51 // pred_region
          %s1613 = sand.u32 %s126, 1
          %s1614 = scalar_lea.sflag [#allocation4], %s1613
          %s1615 = sand.u32 %s126, 1
          %s1616 = smul.addr %s1615, 768
          %s1617 = scalar_lea.vmem [#allocation8], %s1616
          %1618 = dma.done %s1614, 12288
        $region56: #{cross_scale_attention_forward.5} parent=51 // pred_fallthru
          _
      $region52: #{cross_scale_attention_forward.5} parent=5 // pred_fallthru
        _
    $region6: #{cross_scale_attention_forward.5} parent=1 // loop_footer
      %s22 = sadd.s32 1, %s18
    $region7: #{cross_scale_attention_forward.5} parent=1 // loop_footer_branch
      %17 = sbr.rel target = $region3
    $region8: #{cross_scale_attention_forward.5} parent=1 // loop_exit
      _
    %1619 = vsyncpa [#allocation3], 1
    %s1620 = scalar_lea.sflag [#allocation3], 1
    %1621 = vsyncpa %s1620, 1
    %1622 = vsyncpa [#allocation6], 1
    %s1623 = scalar_lea.sflag [#allocation6], 1
    %1624 = vsyncpa %s1623, 1
    %1625 = vsyncpa [#allocation4], 1
    %s1626 = scalar_lea.sflag [#allocation4], 1
    %1627 = vsyncpa %s1626, 1

</llo_original>
